<compile_context>
chip_gen: v6e
topology: v6e:2x2x1
jax: 0.10.0
libtpu: 0.0.40
codegen_flags: <defaults>
</compile_context>

<pallas_src>
import functools

import jax
import jax.numpy as jnp
from jax.experimental import pallas as pl
from jax.experimental.pallas import tpu as pltpu

_LANE = 128
_SUBLANE = 8


def _round_up(x, m):
    return (x + m - 1) // m * m


def _vmem_limit_bytes():
    """Generation-aware VMEM budget (leave headroom below physical capacity)."""
    cap = 64 * 1024 * 1024
    try:
        cap = int(pltpu.get_tpu_info().vmem_capacity_bytes)
    except Exception:
        pass
    return max(32 * 1024 * 1024, min(3 * cap // 4, 96 * 1024 * 1024))


# ----------------------------- in-kernel conv -------------------------------- #

def _conv3x3_deep(win, w_flat, *, rows, cols, cpad):
    """3x3 'valid' conv as one deep-K matmul.

    win:    (>= rows+2, >= cols+2, cpad) bf16 input window.
    w_flat: (9*cpad, cpad) bf16 weights, tap-major (dy*3+dx) along K.
    Returns (rows*cols, cpad) f32.
    """
    # Hoist the dx (sublane) shift out of the tap loop: 3 shifted copies, each
    # reused by the 3 dy slices (plain leading-dim slices, no relayout).
    shifted = [win[:, dx:dx + cols, :] for dx in range(3)]
    taps = [shifted[dx][dy:dy + rows].reshape(rows * cols, cpad)
            for dy in range(3) for dx in range(3)]
    k = jnp.concatenate(taps, axis=-1)                       # (M, 9*cpad)
    return jnp.dot(k, w_flat, preferred_element_type=jnp.float32)


def _block_kernel(xp_ref, w1_ref, b1_ref, w2_ref, b2_ref, out_ref,
                  *, th, H, W, W1, Cpad):
    """Fused conv1+bn1+relu -> conv2+bn2+residual+relu on one output row tile."""
    r0 = pl.multiple_of(pl.program_id(1) * th, th)           # first output row
    # Padded-input window for this tile: x rows [r0-2, r0+th+2), all cols.
    win = xp_ref[0, pl.ds(r0, th + 4), :, :]                 # (th+4, W1+2, Cpad)

    # ---- conv1 + bn1 + relu over the tile plus its 1-row / 1-col halo -------
    R1 = th + 2
    acc1 = _conv3x3_deep(win, w1_ref[...], rows=R1, cols=W1, cpad=Cpad)
    y1 = jnp.maximum(acc1 + b1_ref[...], 0.0).reshape(R1, W1, Cpad)

    # Zero the halo positions of y1 that fall outside the real image (this is
    # the spatial zero-padding of y1 that conv2 expects).
    jcol = jax.lax.broadcasted_iota(jnp.int32, (W1, Cpad), 0)
    col_ok = (jcol >= 1) & (jcol <= W)                       # interior columns
    y1 = jnp.where(col_ok[None, :, :], y1, 0.0)
    top = jnp.where(r0 >= 1, y1[0:1], 0.0)                   # row above the tile
    bot = jnp.where(r0 + th < H, y1[R1 - 1:R1], 0.0)         # row below the tile
    y1 = jnp.concatenate([top, y1[1:R1 - 1], bot], axis=0).astype(jnp.bfloat16)

    # ---- conv2 + bn2 + residual add + relu ----------------------------------
    acc2 = _conv3x3_deep(y1, w2_ref[...], rows=th, cols=W, cpad=Cpad)
    res = win[2:2 + th, 2:2 + W, :].reshape(th * W, Cpad).astype(jnp.float32)
    out = jnp.maximum(acc2 + b2_ref[...] + res, 0.0)
    out_ref[0] = out.astype(out_ref.dtype)


# ------------------------------ pallas_call glue ------------------------------ #

def _block_call(xp2, w1, b1, w2, b2, *, row_tile, H, W, W1, Cpad, out_dtype):
    N, Hp, Wp, _ = xp2.shape
    n_tiles = H // row_tile
    M = row_tile * W

    kern = functools.partial(_block_kernel, th=row_tile, H=H, W=W, W1=W1, Cpad=Cpad)

    m1 = (row_tile + 2) * W1
    in_bytes = sum(int(a.size) * a.dtype.itemsize for a in (xp2, w1, b1, w2, b2))
    out_bytes = N * H * W * Cpad * jnp.dtype(out_dtype).itemsize
    cost = pl.CostEstimate(
        flops=2 * N * n_tiles * (m1 + M) * 9 * Cpad * Cpad,
        transcendentals=0,
        bytes_accessed=int(in_bytes + out_bytes),
    )

    return pl.pallas_call(
        kern,
        out_shape=jax.ShapeDtypeStruct((N, H * W, Cpad), out_dtype),
        grid=(N, n_tiles),
        in_specs=[
            # Full padded image, resident per batch element (the index_map does
            # not depend on the row-tile axis, so it is DMA'd once per n).
            pl.BlockSpec((1, Hp, Wp, Cpad), lambda n, i: (n, 0, 0, 0)),
            pl.BlockSpec((9 * Cpad, Cpad), lambda n, i: (0, 0)),    # invariant
            pl.BlockSpec((1, Cpad), lambda n, i: (0, 0)),           # invariant
            pl.BlockSpec((9 * Cpad, Cpad), lambda n, i: (0, 0)),    # invariant
            pl.BlockSpec((1, Cpad), lambda n, i: (0, 0)),           # invariant
        ],
        out_specs=pl.BlockSpec((1, M, Cpad), lambda n, i: (n, i, 0)),
        compiler_params=pltpu.CompilerParams(
            dimension_semantics=("parallel", "parallel"),
            vmem_limit_bytes=_vmem_limit_bytes(),
        ),
        cost_estimate=cost,
    )(xp2, w1, b1, w2, b2)


# ------------------------------ weight / BN prep ------------------------------ #

def _prep_conv_bn(w_oihw, bn, cpad):
    """OIHW conv weight + eval-mode BN -> (9*cpad, cpad) bf16, (1, cpad) f32 bias."""
    cout, cin = int(w_oihw.shape[0]), int(w_oihw.shape[1])
    inv = bn["gamma"] / jnp.sqrt(bn["var"] + bn["eps"])                # (cout,)
    w = jnp.transpose(w_oihw, (2, 3, 1, 0)).reshape(9, cin, cout)      # tap-major
    w = w * inv[None, None, :]                                         # fold BN scale
    w = jnp.pad(w, ((0, 0), (0, cpad - cin), (0, cpad - cout)))
    w = w.reshape(9 * cpad, cpad).astype(jnp.bfloat16)
    bias = bn["beta"] - bn["mean"] * inv
    bias = jnp.pad(bias, (0, cpad - cout)).reshape(1, cpad).astype(jnp.float32)
    return w, bias


# --------------------------------- forward ------------------------------------ #

def block_forward(x_nchw, params, *, row_tile=None):
    """Pallas implementation of Block.forward (i_downsample=None, stride=1)."""
    N, Cin, H, W = x_nchw.shape
    Cout = int(params["w1"].shape[0])
    assert Cin == Cout, "residual add requires Cin == Cout (no downsample path)"
    Cpad = _round_up(max(Cin, Cout), _LANE)
    W1 = _round_up(W + 2, _SUBLANE)      # sublane-aligned width of the y1 halo tile

    if row_tile is None:
        cands = [d for d in range(1, H + 1) if H % d == 0 and d * W <= 2048]
        aligned = [d for d in cands if (d * W) % _SUBLANE == 0]
        row_tile = max(aligned) if aligned else (max(cands) if cands else H)
        if (row_tile * W) % _SUBLANE != 0:
            row_tile = H                 # single full tile keeps the out block legal
    assert H % row_tile == 0
    assert (row_tile * W) % _SUBLANE == 0 or row_tile == H, \
        "row_tile * W must be a multiple of 8 unless the tile covers all rows"

    # NCHW -> NHWC, channel-pad to lane width, bf16 MXU operands; spatial pad of
    # 2 rows top/bottom and (2, W1 - W) cols so each tile's halo slice is in range.
    x = jnp.transpose(x_nchw, (0, 2, 3, 1))
    x_c = jnp.pad(x, ((0, 0), (0, 0), (0, 0), (0, Cpad - Cin))).astype(jnp.bfloat16)
    xp2 = jnp.pad(x_c, ((0, 0), (2, 2), (2, W1 - W), (0, 0)))

    w1, b1 = _prep_conv_bn(params["w1"], params["bn1"], Cpad)
    w2, b2 = _prep_conv_bn(params["w2"], params["bn2"], Cpad)

    out = _block_call(xp2, w1, b1, w2, b2, row_tile=row_tile,
                      H=H, W=W, W1=W1, Cpad=Cpad, out_dtype=jnp.bfloat16)

    # TODO(synk): if this Block feeds another Block, keep the padded NHWC bf16
    # layout instead of paying this un-pad + transpose + f32 cast.
    out = out[:, :, :Cout].reshape(N, H, W, Cout)
    return jnp.transpose(out, (0, 3, 1, 2)).astype(jnp.float32)


# -------------------------------- reference ----------------------------------- #

def block_reference(x_nchw, params):
    x = jnp.transpose(x_nchw, (0, 2, 3, 1))

    def conv(z, w_oihw):
        w = jnp.transpose(w_oihw, (2, 3, 1, 0))                        # OIHW -> HWIO
        return jax.lax.conv_general_dilated(
            z, w, window_strides=(1, 1), padding="SAME",
            dimension_numbers=("NHWC", "HWIO", "NHWC"))

    def bn_affine(bn):
        inv = bn["gamma"] / jnp.sqrt(bn["var"] + bn["eps"])
        return inv, bn["beta"] - bn["mean"] * inv

    s1, b1 = bn_affine(params["bn1"])
    s2, b2 = bn_affine(params["bn2"])
    y = conv(x, params["w1"]) * s1.reshape(1, 1, 1, -1) + b1.reshape(1, 1, 1, -1)
    y = jnp.maximum(y, 0.0)
    y = conv(y, params["w2"]) * s2.reshape(1, 1, 1, -1) + b2.reshape(1, 1, 1, -1)
    y = jnp.maximum(y + x, 0.0)
    return jnp.transpose(y, (0, 3, 1, 2))


# --------------------------------- params -------------------------------------- #

def init_params(key, in_channels, out_channels):
    k1, k2, k3, k4 = jax.random.split(key, 4)

    def bn(kg, c):
        ka, kb = jax.random.split(kg)
        return dict(
            gamma=1.0 + 0.1 * jax.random.normal(ka, (c,), jnp.float32),
            beta=0.05 * jax.random.normal(kb, (c,), jnp.float32),
            mean=jnp.zeros((c,), jnp.float32),
            var=jnp.ones((c,), jnp.float32),
            eps=1e-5,
        )

    return dict(
        w1=0.1 * jax.random.normal(k1, (out_channels, in_channels, 3, 3), jnp.float32),
        w2=0.1 * jax.random.normal(k2, (out_channels, out_channels, 3, 3), jnp.float32),
        bn1=bn(k3, out_channels),
        bn2=bn(k4, out_channels),
    )


# ---------------------------------- main ---------------------------------------- #

if __name__ == "__main__":
    key = jax.random.PRNGKey(0)
    kx, kp = jax.random.split(key)

    N, C, H, W = 2, 4, 16, 16                                          # NCHW, like PyTorch
    x = jax.random.normal(kx, (N, C, H, W), jnp.float32)
    params = init_params(kp, in_channels=C, out_channels=C)

    ref = jax.block_until_ready(block_reference(x, params))

    # row_tile=8 -> grid (N, 2): exercises the inter-tile halo recompute + masks.
    out_tiled = jax.block_until_ready(block_forward(x, params, row_tile=8))
    # Auto tile (single full tile at this size).
    out_auto = jax.block_until_ready(block_forward(x, params))

    assert out_tiled.shape == (N, C, H, W)
    for out in (out_tiled, out_auto):
        max_err = float(jnp.max(jnp.abs(out - ref)))
        # bf16 MXU operands / bf16 output store (f32 accumulation) -> loose tol.
        assert jnp.allclose(out, ref, atol=5e-2, rtol=5e-2), f"max err {max_err}"
    print("KERNEL_OK")
</pallas_src>

<mosaic_0001>
module attributes {stable_mosaic.version = 11 : i64} {
  func.func @_block_kernel(%arg0: i32, %arg1: i32, %arg2: memref<1x20x26x128xbf16, #tpu.memory_space<vmem>>, %arg3: memref<1152x128xbf16, #tpu.memory_space<vmem>>, %arg4: memref<1x128xf32, #tpu.memory_space<vmem>>, %arg5: memref<1152x128xbf16, #tpu.memory_space<vmem>>, %arg6: memref<1x128xf32, #tpu.memory_space<vmem>>, %arg7: memref<1x128x128xbf16, #tpu.memory_space<vmem>>) attributes {dimension_semantics = [#tpu.dimension_semantics<parallel>, #tpu.dimension_semantics<parallel>], iteration_bounds = array<i64: 2, 2>, scalar_prefetch = 0 : i64, scratch_operands = 0 : i64, tpu.core_type = #tpu.core_type<tc>, window_params = [{transform_indices = @transform_0, window_bounds = array<i64: 1, 20, 26, 128>}, {pipeline_mode = #tpu.pipeline_mode<synchronous>, transform_indices = @transform_1, window_bounds = array<i64: 1152, 128>}, {pipeline_mode = #tpu.pipeline_mode<synchronous>, transform_indices = @transform_2, window_bounds = array<i64: 1, 128>}, {pipeline_mode = #tpu.pipeline_mode<synchronous>, transform_indices = @transform_3, window_bounds = array<i64: 1152, 128>}, {pipeline_mode = #tpu.pipeline_mode<synchronous>, transform_indices = @transform_4, window_bounds = array<i64: 1, 128>}, {transform_indices = @transform_5, window_bounds = array<i64: 1, 128, 128>}]} {
    %c8_i32 = arith.constant 8 : i32
    %0 = arith.muli %arg1, %c8_i32 : i32
    %1 = tpu.assume_multiple %0, 8 : i32
    %c0 = arith.constant 0 : index
    %2 = arith.index_cast %1 : i32 to index
    %c0_0 = arith.constant 0 : index
    %c0_1 = arith.constant 0 : index
    %3 = vector.load %arg2[%c0, %2, %c0_0, %c0_1] : memref<1x20x26x128xbf16, #tpu.memory_space<vmem>>, vector<1x12x26x128xbf16>
    %4 = vector.shape_cast %3 : vector<1x12x26x128xbf16> to vector<12x26x128xbf16>
    %c0_2 = arith.constant 0 : index
    %c0_3 = arith.constant 0 : index
    %5 = vector.load %arg3[%c0_2, %c0_3] : memref<1152x128xbf16, #tpu.memory_space<vmem>>, vector<1152x128xbf16>
    %6 = vector.extract_strided_slice %4 {offsets = [0, 0, 0], sizes = [12, 24, 128], strides = [1, 1, 1]} : vector<12x26x128xbf16> to vector<12x24x128xbf16>
    %7 = vector.extract_strided_slice %4 {offsets = [0, 1, 0], sizes = [12, 24, 128], strides = [1, 1, 1]} : vector<12x26x128xbf16> to vector<12x24x128xbf16>
    %8 = vector.extract_strided_slice %4 {offsets = [0, 2, 0], sizes = [12, 24, 128], strides = [1, 1, 1]} : vector<12x26x128xbf16> to vector<12x24x128xbf16>
    %9 = vector.extract_strided_slice %6 {offsets = [0, 0, 0], sizes = [10, 24, 128], strides = [1, 1, 1]} : vector<12x24x128xbf16> to vector<10x24x128xbf16>
    %10 = vector.shape_cast %9 : vector<10x24x128xbf16> to vector<240x128xbf16>
    %11 = vector.extract_strided_slice %7 {offsets = [0, 0, 0], sizes = [10, 24, 128], strides = [1, 1, 1]} : vector<12x24x128xbf16> to vector<10x24x128xbf16>
    %12 = vector.shape_cast %11 : vector<10x24x128xbf16> to vector<240x128xbf16>
    %13 = vector.extract_strided_slice %8 {offsets = [0, 0, 0], sizes = [10, 24, 128], strides = [1, 1, 1]} : vector<12x24x128xbf16> to vector<10x24x128xbf16>
    %14 = vector.shape_cast %13 : vector<10x24x128xbf16> to vector<240x128xbf16>
    %15 = vector.extract_strided_slice %6 {offsets = [1, 0, 0], sizes = [10, 24, 128], strides = [1, 1, 1]} : vector<12x24x128xbf16> to vector<10x24x128xbf16>
    %16 = vector.shape_cast %15 : vector<10x24x128xbf16> to vector<240x128xbf16>
    %17 = vector.extract_strided_slice %7 {offsets = [1, 0, 0], sizes = [10, 24, 128], strides = [1, 1, 1]} : vector<12x24x128xbf16> to vector<10x24x128xbf16>
    %18 = vector.shape_cast %17 : vector<10x24x128xbf16> to vector<240x128xbf16>
    %19 = vector.extract_strided_slice %8 {offsets = [1, 0, 0], sizes = [10, 24, 128], strides = [1, 1, 1]} : vector<12x24x128xbf16> to vector<10x24x128xbf16>
    %20 = vector.shape_cast %19 : vector<10x24x128xbf16> to vector<240x128xbf16>
    %21 = vector.extract_strided_slice %6 {offsets = [2, 0, 0], sizes = [10, 24, 128], strides = [1, 1, 1]} : vector<12x24x128xbf16> to vector<10x24x128xbf16>
    %22 = vector.shape_cast %21 : vector<10x24x128xbf16> to vector<240x128xbf16>
    %23 = vector.extract_strided_slice %7 {offsets = [2, 0, 0], sizes = [10, 24, 128], strides = [1, 1, 1]} : vector<12x24x128xbf16> to vector<10x24x128xbf16>
    %24 = vector.shape_cast %23 : vector<10x24x128xbf16> to vector<240x128xbf16>
    %25 = vector.extract_strided_slice %8 {offsets = [2, 0, 0], sizes = [10, 24, 128], strides = [1, 1, 1]} : vector<12x24x128xbf16> to vector<10x24x128xbf16>
    %26 = vector.shape_cast %25 : vector<10x24x128xbf16> to vector<240x128xbf16>
    %27 = tpu.concatenate %10, %12, %14, %16, %18, %20, %22, %24, %26 in 1 : vector<240x128xbf16>, vector<240x128xbf16>, vector<240x128xbf16>, vector<240x128xbf16>, vector<240x128xbf16>, vector<240x128xbf16>, vector<240x128xbf16>, vector<240x128xbf16>, vector<240x128xbf16> -> vector<240x1152xbf16>
    %cst = arith.constant dense<0.000000e+00> : vector<240x128xf32>
    %28 = tpu.matmul %27, %5, %cst {dimension_numbers = #tpu.dot_dimension_numbers<[1], [0], [0], [1], [0, 0, 1, 1], [], []>} : vector<240x1152xbf16>, vector<1152x128xbf16>, vector<240x128xf32> -> vector<240x128xf32>
    %c0_4 = arith.constant 0 : index
    %c0_5 = arith.constant 0 : index
    %29 = vector.load %arg4[%c0_4, %c0_5] : memref<1x128xf32, #tpu.memory_space<vmem>>, vector<1x128xf32>
    %30 = vector.broadcast %29 : vector<1x128xf32> to vector<240x128xf32>
    %31 = arith.addf %28, %30 : vector<240x128xf32>
    %cst_6 = arith.constant 0.000000e+00 : f32
    %32 = vector.broadcast %cst_6 : f32 to vector<240x128xf32>
    %33 = arith.maximumf %31, %32 : vector<240x128xf32>
    %34 = vector.shape_cast %33 : vector<240x128xf32> to vector<10x24x128xf32>
    %35 = tpu.iota {dimensions = array<i32: 0>} : vector<24x128xi32>
    %c1_i32 = arith.constant 1 : i32
    %36 = vector.broadcast %c1_i32 : i32 to vector<24x128xi32>
    %37 = arith.cmpi sge, %35, %36 : vector<24x128xi32>
    %c16_i32 = arith.constant 16 : i32
    %38 = vector.broadcast %c16_i32 : i32 to vector<24x128xi32>
    %39 = arith.cmpi sle, %35, %38 : vector<24x128xi32>
    %40 = arith.andi %37, %39 : vector<24x128xi1>
    %41 = vector.shape_cast %40 : vector<24x128xi1> to vector<1x24x128xi1>
    %cst_7 = arith.constant 0.000000e+00 : f32
    %42 = vector.shape_cast %41 : vector<1x24x128xi1> to vector<1x24x128xi1>
    %43 = vector.broadcast %42 : vector<1x24x128xi1> to vector<10x24x128xi1>
    %44 = vector.broadcast %cst_7 : f32 to vector<10x24x128xf32>
    %45 = arith.select %43, %34, %44 : vector<10x24x128xi1>, vector<10x24x128xf32>
    %c1_i32_8 = arith.constant 1 : i32
    %46 = arith.cmpi sge, %1, %c1_i32_8 : i32
    %47 = vector.extract_strided_slice %45 {offsets = [0, 0, 0], sizes = [1, 24, 128], strides = [1, 1, 1]} : vector<10x24x128xf32> to vector<1x24x128xf32>
    %cst_9 = arith.constant 0.000000e+00 : f32
    %48 = vector.broadcast %cst_9 : f32 to vector<1x24x128xf32>
    %49 = arith.select %46, %47, %48 : vector<1x24x128xf32>
    %c8_i32_10 = arith.constant 8 : i32
    %50 = arith.addi %1, %c8_i32_10 : i32
    %c16_i32_11 = arith.constant 16 : i32
    %51 = arith.cmpi slt, %50, %c16_i32_11 : i32
    %52 = vector.extract_strided_slice %45 {offsets = [9, 0, 0], sizes = [1, 24, 128], strides = [1, 1, 1]} : vector<10x24x128xf32> to vector<1x24x128xf32>
    %cst_12 = arith.constant 0.000000e+00 : f32
    %53 = vector.broadcast %cst_12 : f32 to vector<1x24x128xf32>
    %54 = arith.select %51, %52, %53 : vector<1x24x128xf32>
    %55 = vector.extract_strided_slice %45 {offsets = [1, 0, 0], sizes = [8, 24, 128], strides = [1, 1, 1]} : vector<10x24x128xf32> to vector<8x24x128xf32>
    %56 = tpu.concatenate %49, %55, %54 in 0 : vector<1x24x128xf32>, vector<8x24x128xf32>, vector<1x24x128xf32> -> vector<10x24x128xf32>
    %57 = arith.truncf %56 : vector<10x24x128xf32> to vector<10x24x128xbf16>
    %c0_13 = arith.constant 0 : index
    %c0_14 = arith.constant 0 : index
    %58 = vector.load %arg5[%c0_13, %c0_14] : memref<1152x128xbf16, #tpu.memory_space<vmem>>, vector<1152x128xbf16>
    %59 = vector.extract_strided_slice %57 {offsets = [0, 0, 0], sizes = [10, 16, 128], strides = [1, 1, 1]} : vector<10x24x128xbf16> to vector<10x16x128xbf16>
    %60 = vector.extract_strided_slice %57 {offsets = [0, 1, 0], sizes = [10, 16, 128], strides = [1, 1, 1]} : vector<10x24x128xbf16> to vector<10x16x128xbf16>
    %61 = vector.extract_strided_slice %57 {offsets = [0, 2, 0], sizes = [10, 16, 128], strides = [1, 1, 1]} : vector<10x24x128xbf16> to vector<10x16x128xbf16>
    %62 = vector.extract_strided_slice %59 {offsets = [0, 0, 0], sizes = [8, 16, 128], strides = [1, 1, 1]} : vector<10x16x128xbf16> to vector<8x16x128xbf16>
    %63 = vector.shape_cast %62 : vector<8x16x128xbf16> to vector<128x128xbf16>
    %64 = vector.extract_strided_slice %60 {offsets = [0, 0, 0], sizes = [8, 16, 128], strides = [1, 1, 1]} : vector<10x16x128xbf16> to vector<8x16x128xbf16>
    %65 = vector.shape_cast %64 : vector<8x16x128xbf16> to vector<128x128xbf16>
    %66 = vector.extract_strided_slice %61 {offsets = [0, 0, 0], sizes = [8, 16, 128], strides = [1, 1, 1]} : vector<10x16x128xbf16> to vector<8x16x128xbf16>
    %67 = vector.shape_cast %66 : vector<8x16x128xbf16> to vector<128x128xbf16>
    %68 = vector.extract_strided_slice %59 {offsets = [1, 0, 0], sizes = [8, 16, 128], strides = [1, 1, 1]} : vector<10x16x128xbf16> to vector<8x16x128xbf16>
    %69 = vector.shape_cast %68 : vector<8x16x128xbf16> to vector<128x128xbf16>
    %70 = vector.extract_strided_slice %60 {offsets = [1, 0, 0], sizes = [8, 16, 128], strides = [1, 1, 1]} : vector<10x16x128xbf16> to vector<8x16x128xbf16>
    %71 = vector.shape_cast %70 : vector<8x16x128xbf16> to vector<128x128xbf16>
    %72 = vector.extract_strided_slice %61 {offsets = [1, 0, 0], sizes = [8, 16, 128], strides = [1, 1, 1]} : vector<10x16x128xbf16> to vector<8x16x128xbf16>
    %73 = vector.shape_cast %72 : vector<8x16x128xbf16> to vector<128x128xbf16>
    %74 = vector.extract_strided_slice %59 {offsets = [2, 0, 0], sizes = [8, 16, 128], strides = [1, 1, 1]} : vector<10x16x128xbf16> to vector<8x16x128xbf16>
    %75 = vector.shape_cast %74 : vector<8x16x128xbf16> to vector<128x128xbf16>
    %76 = vector.extract_strided_slice %60 {offsets = [2, 0, 0], sizes = [8, 16, 128], strides = [1, 1, 1]} : vector<10x16x128xbf16> to vector<8x16x128xbf16>
    %77 = vector.shape_cast %76 : vector<8x16x128xbf16> to vector<128x128xbf16>
    %78 = vector.extract_strided_slice %61 {offsets = [2, 0, 0], sizes = [8, 16, 128], strides = [1, 1, 1]} : vector<10x16x128xbf16> to vector<8x16x128xbf16>
    %79 = vector.shape_cast %78 : vector<8x16x128xbf16> to vector<128x128xbf16>
    %80 = tpu.concatenate %63, %65, %67, %69, %71, %73, %75, %77, %79 in 1 : vector<128x128xbf16>, vector<128x128xbf16>, vector<128x128xbf16>, vector<128x128xbf16>, vector<128x128xbf16>, vector<128x128xbf16>, vector<128x128xbf16>, vector<128x128xbf16>, vector<128x128xbf16> -> vector<128x1152xbf16>
    %cst_15 = arith.constant dense<0.000000e+00> : vector<128x128xf32>
    %81 = tpu.matmul %80, %58, %cst_15 {dimension_numbers = #tpu.dot_dimension_numbers<[1], [0], [0], [1], [0, 0, 1, 1], [], []>} : vector<128x1152xbf16>, vector<1152x128xbf16>, vector<128x128xf32> -> vector<128x128xf32>
    %82 = vector.extract_strided_slice %4 {offsets = [2, 2, 0], sizes = [8, 16, 128], strides = [1, 1, 1]} : vector<12x26x128xbf16> to vector<8x16x128xbf16>
    %83 = vector.shape_cast %82 : vector<8x16x128xbf16> to vector<128x128xbf16>
    %84 = arith.extf %83 : vector<128x128xbf16> to vector<128x128xf32>
    %c0_16 = arith.constant 0 : index
    %c0_17 = arith.constant 0 : index
    %85 = vector.load %arg6[%c0_16, %c0_17] : memref<1x128xf32, #tpu.memory_space<vmem>>, vector<1x128xf32>
    %86 = vector.broadcast %85 : vector<1x128xf32> to vector<128x128xf32>
    %87 = arith.addf %81, %86 : vector<128x128xf32>
    %88 = arith.addf %87, %84 : vector<128x128xf32>
    %cst_18 = arith.constant 0.000000e+00 : f32
    %89 = vector.broadcast %cst_18 : f32 to vector<128x128xf32>
    %90 = arith.maximumf %88, %89 : vector<128x128xf32>
    %91 = arith.truncf %90 : vector<128x128xf32> to vector<128x128xbf16>
    %c0_19 = arith.constant 0 : index
    %c0_20 = arith.constant 0 : index
    %c0_21 = arith.constant 0 : index
    %92 = vector.load %arg7[%c0_19, %c0_20, %c0_21] : memref<1x128x128xbf16, #tpu.memory_space<vmem>>, vector<1x128x128xbf16>
    %93 = vector.shape_cast %92 : vector<1x128x128xbf16> to vector<128x128xbf16>
    %94 = vector.shape_cast %91 : vector<128x128xbf16> to vector<1x128x128xbf16>
    tpu.vector_store %arg7[%c0_19, %c0_20, %c0_21], %94 {strides = array<i32>} : memref<1x128x128xbf16, #tpu.memory_space<vmem>>, vector<1x128x128xbf16>,
    return
  }
  func.func @transform_0(%arg0: i32, %arg1: i32) -> (i32, i32, i32, i32) {
    %c0_i32 = arith.constant 0 : i32
    %c0_i32_0 = arith.constant 0 : i32
    %c0_i32_1 = arith.constant 0 : i32
    %c0_i32_2 = arith.constant 0 : i32
    return %arg0, %c0_i32, %c0_i32_0, %c0_i32_1 : i32, i32, i32, i32
  }
  func.func @transform_1(%arg0: i32, %arg1: i32) -> (i32, i32) {
    %c0_i32 = arith.constant 0 : i32
    %c0_i32_0 = arith.constant 0 : i32
    %c0_i32_1 = arith.constant 0 : i32
    return %c0_i32, %c0_i32_0 : i32, i32
  }
  func.func @transform_2(%arg0: i32, %arg1: i32) -> (i32, i32) {
    %c0_i32 = arith.constant 0 : i32
    %c0_i32_0 = arith.constant 0 : i32
    %c0_i32_1 = arith.constant 0 : i32
    return %c0_i32, %c0_i32_0 : i32, i32
  }
  func.func @transform_3(%arg0: i32, %arg1: i32) -> (i32, i32) {
    %c0_i32 = arith.constant 0 : i32
    %c0_i32_0 = arith.constant 0 : i32
    %c0_i32_1 = arith.constant 0 : i32
    return %c0_i32, %c0_i32_0 : i32, i32
  }
  func.func @transform_4(%arg0: i32, %arg1: i32) -> (i32, i32) {
    %c0_i32 = arith.constant 0 : i32
    %c0_i32_0 = arith.constant 0 : i32
    %c0_i32_1 = arith.constant 0 : i32
    return %c0_i32, %c0_i32_0 : i32, i32
  }
  func.func @transform_5(%arg0: i32, %arg1: i32) -> (i32, i32, i32) {
    %c0_i32 = arith.constant 0 : i32
    %c0_i32_0 = arith.constant 0 : i32
    return %arg0, %arg1, %c0_i32 : i32, i32, i32
  }
}

</mosaic_0001>

<llo_original>
// kernel: tpu_custom_call.1
$region0: #{tpu_custom_call.1}
  #allocation0 [shape = 'u32[]', space=smem, size = 0x4, offset = 0x4, fixed_abs, tag = 'smem constant byte address 0x4 - core index']
  #allocation1 [shape = 'u32[144,128]{1,0:T(1,128)}', space=vmem, size = 0x12000, scoped, tag = 'internal scratch']
  %s0 = inlined_call_operand.vmem [shape: bf16[2,20,26,128], index: 0, kind: input, shape index: {}]
  %s1 = inlined_call_operand.vmem [shape: bf16[1152,128], index: 1, kind: input, shape index: {}]
  %s2 = inlined_call_operand.vmem [shape: f32[1,128], index: 2, kind: input, shape index: {}]
  %s3 = inlined_call_operand.vmem [shape: bf16[1152,128], index: 3, kind: input, shape index: {}]
  %s4 = inlined_call_operand.vmem [shape: f32[1,128], index: 4, kind: input, shape index: {}]
  %s5 = inlined_call_operand.hbm [shape: bf16[2,256,128], index: 5, kind: output, shape index: {}]
  %s6 = sld [smem:[#allocation0]]
  $region53: #{tpu_custom_call.1} parent=0
    _
  %s8 = ssub.s32 1, %s6
  %s9 = scalar_select 0, %s8, %s6
  $region1: #{tpu_custom_call.1} parent=0
    #allocation2 [shape = 'u8[65536]{0}', space=vmem, size = 0x10000, scoped, tag = 'output window, operand 0']
    #allocation3 [shape = 's32[2]{0}', space=sflag, size = 0x8, scoped, tag = 'scoped memory for tpu_custom_call.1']
    %10 = vsyncpa [#allocation3], 0
    %s11 = scalar_lea.sflag [#allocation3], 1
    %12 = vsyncpa %s11, 0
    loop: start=0, step=1, limit=6
    $region2: #{tpu_custom_call.1} parent=1 // loop_pre_header
      _
    $region3: #{tpu_custom_call.1} parent=1 // loop_header
      %s14 = sphi 0, %s18
      %p15 = scmp.ge.s32.totalorder %s14, 6
      %s21 = sphi 0, %s33
      %s22 = sphi 0, %s29
      %s23 = sphi 0, %s21
      %s24 = sphi 0, %s22
      %s25 = sphi 0, %s23
      %s26 = sphi 0, %s24
      %s36 = sphi 0, %s38
      %s39 = sphi 0, %s36
      %s40 = sphi 0, %s39
      %s56 = sphi 0, %s40
      %s60 = sphi 0, %s60
      %s62 = sphi 0, %s60
      %s63 = sphi 0, %s62
      %s77 = sphi 0, %s63
      %s81 = sphi 0, %s81
      %s83 = sphi 0, %s81
      %s84 = sphi 0, %s83
      %s98 = sphi 0, %s84
      %s102 = sphi 0, %s102
      %s104 = sphi 0, %s102
      %s105 = sphi 0, %s104
      %s119 = sphi 0, %s105
      %s123 = sphi 0, %s123
      %s125 = sphi 0, %s123
      %s126 = sphi 0, %s125
      %s140 = sphi 0, %s126
      %s148 = sphi 0, %s150
      %s151 = sphi 0, %s148
      %s152 = sphi 0, %s151
      %s168 = sphi 0, %s152
    $region4: #{tpu_custom_call.1} parent=1 // loop_header_branch
      %17 = sbr.rel (%p15) target = $region8
    $region5: #{tpu_custom_call.1} parent=1 // loop_body
      %s19 = ssub.s32 %s14, 1
      %s20 = ssub.s32 %s14, 2
      %s27 = sadd.s32 1, %s22
      %p28 = scmp.ge.s32.totalorder %s27, 2
      %s29 = scalar_select %p28, 0, %s27
      %s30 = sadd.s32 1, %s21
      %s31 = scalar_select %p28, %s30, %s21
      %p32 = scmp.ge.s32.totalorder %s31, 2
      %s33 = scalar_select %p32, 0, %s31
      %s34 = ssub.s32 %s21, %s33
      %p35 = scmp.eq.s32.totalorder %s34, 0
      %s37 = sadd.s32 %s36, 1
      %s38 = scalar_select %p35, %s36, %s37
      %p41 = pneg %p35
      %p42 = scmp.eq.s32.totalorder %s14, 3
      %p43 = por %p41, %p42
      %p44 = scmp.ne.s32.totalorder %s36, %s39
      %p45 = scmp.eq.s32.totalorder %s14, 0
      %p46 = por %p44, %p45
      %p47 = scmp.ne.s32.totalorder %s36, %s39
      %p48 = scmp.eq.s32.totalorder %s19, 3
      %p49 = por %p47, %p48
      %p50 = scmp.ne.s32.totalorder %s39, %s40
      %p51 = scmp.eq.s32.totalorder %s19, 0
      %p52 = por %p50, %p51
      %p53 = scmp.ne.s32.totalorder %s39, %s40
      %p54 = scmp.eq.s32.totalorder %s20, 3
      %p55 = por %p53, %p54
      %p57 = scmp.ne.s32.totalorder %s40, %s56
      %p58 = scmp.eq.s32.totalorder %s20, 0
      %p59 = por %p57, %p58
      %s61 = sadd.s32 %s60, 1
      %p64 = scmp.eq.s32.totalorder %s14, 3
      %p65 = scmp.ne.s32.totalorder %s60, %s62
      %p66 = scmp.eq.s32.totalorder %s14, 0
      %p67 = por %p65, %p66
      %p68 = scmp.ne.s32.totalorder %s60, %s62
      %p69 = scmp.eq.s32.totalorder %s19, 3
      %p70 = por %p68, %p69
      %p71 = scmp.ne.s32.totalorder %s62, %s63
      %p72 = scmp.eq.s32.totalorder %s19, 0
      %p73 = por %p71, %p72
      %p74 = scmp.ne.s32.totalorder %s62, %s63
      %p75 = scmp.eq.s32.totalorder %s20, 3
      %p76 = por %p74, %p75
      %p78 = scmp.ne.s32.totalorder %s63, %s77
      %p79 = scmp.eq.s32.totalorder %s20, 0
      %p80 = por %p78, %p79
      %s82 = sadd.s32 %s81, 1
      %p85 = scmp.eq.s32.totalorder %s14, 3
      %p86 = scmp.ne.s32.totalorder %s81, %s83
      %p87 = scmp.eq.s32.totalorder %s14, 0
      %p88 = por %p86, %p87
      %p89 = scmp.ne.s32.totalorder %s81, %s83
      %p90 = scmp.eq.s32.totalorder %s19, 3
      %p91 = por %p89, %p90
      %p92 = scmp.ne.s32.totalorder %s83, %s84
      %p93 = scmp.eq.s32.totalorder %s19, 0
      %p94 = por %p92, %p93
      %p95 = scmp.ne.s32.totalorder %s83, %s84
      %p96 = scmp.eq.s32.totalorder %s20, 3
      %p97 = por %p95, %p96
      %p99 = scmp.ne.s32.totalorder %s84, %s98
      %p100 = scmp.eq.s32.totalorder %s20, 0
      %p101 = por %p99, %p100
      %s103 = sadd.s32 %s102, 1
      %p106 = scmp.eq.s32.totalorder %s14, 3
      %p107 = scmp.ne.s32.totalorder %s102, %s104
      %p108 = scmp.eq.s32.totalorder %s14, 0
      %p109 = por %p107, %p108
      %p110 = scmp.ne.s32.totalorder %s102, %s104
      %p111 = scmp.eq.s32.totalorder %s19, 3
      %p112 = por %p110, %p111
      %p113 = scmp.ne.s32.totalorder %s104, %s105
      %p114 = scmp.eq.s32.totalorder %s19, 0
      %p115 = por %p113, %p114
      %p116 = scmp.ne.s32.totalorder %s104, %s105
      %p117 = scmp.eq.s32.totalorder %s20, 3
      %p118 = por %p116, %p117
      %p120 = scmp.ne.s32.totalorder %s105, %s119
      %p121 = scmp.eq.s32.totalorder %s20, 0
      %p122 = por %p120, %p121
      %s124 = sadd.s32 %s123, 1
      %p127 = scmp.eq.s32.totalorder %s14, 3
      %p128 = scmp.ne.s32.totalorder %s123, %s125
      %p129 = scmp.eq.s32.totalorder %s14, 0
      %p130 = por %p128, %p129
      %p131 = scmp.ne.s32.totalorder %s123, %s125
      %p132 = scmp.eq.s32.totalorder %s19, 3
      %p133 = por %p131, %p132
      %p134 = scmp.ne.s32.totalorder %s125, %s126
      %p135 = scmp.eq.s32.totalorder %s19, 0
      %p136 = por %p134, %p135
      %p137 = scmp.ne.s32.totalorder %s125, %s126
      %p138 = scmp.eq.s32.totalorder %s20, 3
      %p139 = por %p137, %p138
      %p141 = scmp.ne.s32.totalorder %s126, %s140
      %p142 = scmp.eq.s32.totalorder %s20, 0
      %p143 = por %p141, %p142
      %s144 = ssub.s32 %s21, %s33
      %s145 = ssub.s32 %s22, %s29
      %s146 = sor.u32 %s144, %s145
      %p147 = scmp.eq.s32.totalorder %s146, 0
      %s149 = sadd.s32 %s148, 1
      %s150 = scalar_select %p147, %s148, %s149
      %p153 = pneg %p147
      %p154 = scmp.eq.s32.totalorder %s14, 3
      %p155 = por %p153, %p154
      %p156 = scmp.ne.s32.totalorder %s148, %s151
      %p157 = scmp.eq.s32.totalorder %s14, 0
      %p158 = por %p156, %p157
      %p159 = scmp.ne.s32.totalorder %s148, %s151
      %p160 = scmp.eq.s32.totalorder %s19, 3
      %p161 = por %p159, %p160
      %p162 = scmp.ne.s32.totalorder %s151, %s152
      %p163 = scmp.eq.s32.totalorder %s19, 0
      %p164 = por %p162, %p163
      %p165 = scmp.ne.s32.totalorder %s151, %s152
      %p166 = scmp.eq.s32.totalorder %s20, 3
      %p167 = por %p165, %p166
      %p169 = scmp.ne.s32.totalorder %s152, %s168
      %p170 = scmp.eq.s32.totalorder %s20, 0
      %p171 = por %p169, %p170
      %p172 = scmp.le.s32.totalorder 1, %s14
      %p173 = scmp.lt.s32.totalorder %s14, 5
      %p174 = pnand %p172, %p173
      %p175 = pneg %p174
      // Predicated region
      $region9: #{tpu_custom_call.1} parent=5 // pred_check
        _
      $region10: #{tpu_custom_call.1} parent=5 // pred_check_branch
        %177 = sbr.rel (%p174) target = $region12
      $region11: #{tpu_custom_call.1} parent=5 // pred_region
        %s178 = ssub.s32 %s14, 1
        // Predicated region
        $region13: #{tpu_custom_call.1} parent=11 // pred_check
          %p179 = pneg %p73
        $region14: #{tpu_custom_call.1} parent=11 // pred_check_branch
          %181 = sbr.rel (%p179) target = $region16
        $region15: #{tpu_custom_call.1} parent=11 // pred_region
          _
        $region16: #{tpu_custom_call.1} parent=11 // pred_fallthru
          _
        // Predicated region
        $region17: #{tpu_custom_call.1} parent=11 // pred_check
          %p182 = pneg %p94
        $region18: #{tpu_custom_call.1} parent=11 // pred_check_branch
          %184 = sbr.rel (%p182) target = $region20
        $region19: #{tpu_custom_call.1} parent=11 // pred_region
          _
        $region20: #{tpu_custom_call.1} parent=11 // pred_fallthru
          _
        // Predicated region
        $region21: #{tpu_custom_call.1} parent=11 // pred_check
          %p185 = pneg %p115
        $region22: #{tpu_custom_call.1} parent=11 // pred_check_branch
          %187 = sbr.rel (%p185) target = $region24
        $region23: #{tpu_custom_call.1} parent=11 // pred_region
          _
        $region24: #{tpu_custom_call.1} parent=11 // pred_fallthru
          _
        // Predicated region
        $region25: #{tpu_custom_call.1} parent=11 // pred_check
          %p188 = pneg %p136
        $region26: #{tpu_custom_call.1} parent=11 // pred_check_branch
          %190 = sbr.rel (%p188) target = $region28
        $region27: #{tpu_custom_call.1} parent=11 // pred_region
          _
        $region28: #{tpu_custom_call.1} parent=11 // pred_fallthru
          _
      $region12: #{tpu_custom_call.1} parent=5 // pred_fallthru
        _
      %p191 = scmp.lt.s32.totalorder %s14, 4
      // Predicated region
      $region29: #{tpu_custom_call.1} parent=5 // pred_check
        %p192 = pneg %p191
      $region30: #{tpu_custom_call.1} parent=5 // pred_check_branch
        %194 = sbr.rel (%p192) target = $region32
      $region31: #{tpu_custom_call.1} parent=5 // pred_region
        // Predicated region
        $region33: #{tpu_custom_call.1} parent=31 // pred_check
          %p195 = pneg %p46
        $region34: #{tpu_custom_call.1} parent=31 // pred_check_branch
          %197 = sbr.rel (%p195) target = $region36
        $region35: #{tpu_custom_call.1} parent=31 // pred_region
          %p198 = scmp.lt.s32.totalorder %s21, 1
          %s199 = scalar_select %p198, %s21, 1
          %s200 = smul.addr %s199, 80
          %s201 = smul.addr %s200, 4
          %s202 = scalar_lea.vmem %s0, %s201
        $region36: #{tpu_custom_call.1} parent=31 // pred_fallthru
          _
      $region32: #{tpu_custom_call.1} parent=5 // pred_fallthru
        _
      %p203 = scmp.le.s32.totalorder 1, %s14
      %p204 = scmp.lt.s32.totalorder %s14, 5
      %p205 = pnand %p203, %p204
      %p206 = pneg %p205
      // Predicated region
      $region37: #{tpu_custom_call.1} parent=5 // pred_check
        _
      $region38: #{tpu_custom_call.1} parent=5 // pred_check_branch
        %208 = sbr.rel (%p205) target = $region40
      $region39: #{tpu_custom_call.1} parent=5 // pred_region
        %s209 = ssub.s32 %s14, 1
        %p210 = scmp.lt.s32.totalorder %s23, 1
        %s211 = scalar_select %p210, %s23, 1
        %s212 = smul.addr %s211, 80
        %s213 = smul.addr %s212, 4
        %s214 = scalar_lea.vmem %s0, %s213
        %p215 = pneg %p52
        %p216 = pneg %p49
        %p217 = pneg %p73
        %p218 = pneg %p70
        %p219 = pneg %p94
        %p220 = pneg %p91
        %p221 = pneg %p115
        %p222 = pneg %p112
        %p223 = pneg %p136
        %p224 = pneg %p133
        %p225 = pneg %p164
        %p226 = pneg %p161
        %s227 = sand.u32 %s151, 1
        %s228 = scalar_lea.sflag [#allocation3], %s227
        %s229 = sand.u32 %s151, 1
        %s230 = smul.addr %s229, 64
        %s231 = scalar_lea.vmem [#allocation2], %s230
        %p232 = scmp.lt.s32.totalorder %s23, 1
        %s233 = scalar_select %p232, %s23, 1
        %s234 = smul.addr %s233, 80
        %s235 = smul.addr %s234, 4
        %s236 = scalar_lea.vmem %s0, %s235
        %s237 = smul.u32 16, %s24
        %s239 = smul.u32 %s24, 8
        %s240 = smul.u32 %s239, 4
        %s241 = smul.addr %s240, 4
        %s242 = scalar_lea.vmem %s236, %s241
        %v243 = vld [vmem:[%s242] sm:$0xf]
        %v244 = vld [vmem:[%s242 + $0x4] sm:$0xf]
        %v245 = vld [vmem:[%s242 + $0x8] sm:$0xf]
        %v246 = vld [vmem:[%s242 + $0xc] sm:$0x1]
        %v247 = vld [vmem:[%s242 + $0x10] sm:$0xf]
        %v248 = vld [vmem:[%s242 + $0x14] sm:$0xf]
        %v249 = vld [vmem:[%s242 + $0x18] sm:$0xf]
        %v250 = vld [vmem:[%s242 + $0x1c] sm:$0x1]
        %v251 = vld [vmem:[%s242 + $0x20] sm:$0xf]
        %v252 = vld [vmem:[%s242 + $0x24] sm:$0xf]
        %v253 = vld [vmem:[%s242 + $0x28] sm:$0xf]
        %v254 = vld [vmem:[%s242 + $0x2c] sm:$0x1]
        %v255 = vld [vmem:[%s242 + $0x30] sm:$0xf]
        %v256 = vld [vmem:[%s242 + $0x34] sm:$0xf]
        %v257 = vld [vmem:[%s242 + $0x38] sm:$0xf]
        %v258 = vld [vmem:[%s242 + $0x3c] sm:$0x1]
        %v259 = vld [vmem:[%s242 + $0x40] sm:$0xf]
        %v260 = vld [vmem:[%s242 + $0x44] sm:$0xf]
        %v261 = vld [vmem:[%s242 + $0x48] sm:$0xf]
        %v262 = vld [vmem:[%s242 + $0x4c] sm:$0x1]
        %v263 = vld [vmem:[%s242 + $0x50] sm:$0xf]
        %v264 = vld [vmem:[%s242 + $0x54] sm:$0xf]
        %v265 = vld [vmem:[%s242 + $0x58] sm:$0xf]
        %v266 = vld [vmem:[%s242 + $0x5c] sm:$0x1]
        %v267 = vld [vmem:[%s242 + $0x60] sm:$0xf]
        %v268 = vld [vmem:[%s242 + $0x64] sm:$0xf]
        %v269 = vld [vmem:[%s242 + $0x68] sm:$0xf]
        %v270 = vld [vmem:[%s242 + $0x6c] sm:$0x1]
        %v271 = vld [vmem:[%s242 + $0x70] sm:$0xf]
        %v272 = vld [vmem:[%s242 + $0x74] sm:$0xf]
        %v273 = vld [vmem:[%s242 + $0x78] sm:$0xf]
        %v274 = vld [vmem:[%s242 + $0x7c] sm:$0x1]
        %v275 = vld [vmem:[%s242 + $0x80] sm:$0xf]
        %v276 = vld [vmem:[%s242 + $0x84] sm:$0xf]
        %v277 = vld [vmem:[%s242 + $0x88] sm:$0xf]
        %v278 = vld [vmem:[%s242 + $0x8c] sm:$0x1]
        %v279 = vld [vmem:[%s242 + $0x90] sm:$0xf]
        %v280 = vld [vmem:[%s242 + $0x94] sm:$0xf]
        %v281 = vld [vmem:[%s242 + $0x98] sm:$0xf]
        %v282 = vld [vmem:[%s242 + $0x9c] sm:$0x1]
        %v283 = vld [vmem:[%s242 + $0xa0] sm:$0xf]
        %v284 = vld [vmem:[%s242 + $0xa4] sm:$0xf]
        %v285 = vld [vmem:[%s242 + $0xa8] sm:$0xf]
        %v286 = vld [vmem:[%s242 + $0xac] sm:$0x1]
        %v287 = vld [vmem:[%s242 + $0xb0] sm:$0xf]
        %v288 = vld [vmem:[%s242 + $0xb4] sm:$0xf]
        %v289 = vld [vmem:[%s242 + $0xb8] sm:$0xf]
        %v290 = vld [vmem:[%s242 + $0xbc] sm:$0x1]
        %v291 = vld [vmem:[%s1] sm:$0xf]
        %v292 = vld [vmem:[%s1 + $0x4] sm:$0xf]
        %v293 = vld [vmem:[%s1 + $0x8] sm:$0xf]
        %v294 = vld [vmem:[%s1 + $0xc] sm:$0xf]
        %v295 = vld [vmem:[%s1 + $0x10] sm:$0xf]
        %v296 = vld [vmem:[%s1 + $0x14] sm:$0xf]
        %v297 = vld [vmem:[%s1 + $0x18] sm:$0xf]
        %v298 = vld [vmem:[%s1 + $0x1c] sm:$0xf]
        %v299 = vld [vmem:[%s1 + $0x20] sm:$0xf]
        %v300 = vld [vmem:[%s1 + $0x24] sm:$0xf]
        %v301 = vld [vmem:[%s1 + $0x28] sm:$0xf]
        %v302 = vld [vmem:[%s1 + $0x2c] sm:$0xf]
        %v303 = vld [vmem:[%s1 + $0x30] sm:$0xf]
        %v304 = vld [vmem:[%s1 + $0x34] sm:$0xf]
        %v305 = vld [vmem:[%s1 + $0x38] sm:$0xf]
        %v306 = vld [vmem:[%s1 + $0x3c] sm:$0xf]
        %v307 = vld [vmem:[%s1 + $0x40] sm:$0xf]
        %v308 = vld [vmem:[%s1 + $0x44] sm:$0xf]
        %v309 = vld [vmem:[%s1 + $0x48] sm:$0xf]
        %v310 = vld [vmem:[%s1 + $0x4c] sm:$0xf]
        %v311 = vld [vmem:[%s1 + $0x50] sm:$0xf]
        %v312 = vld [vmem:[%s1 + $0x54] sm:$0xf]
        %v313 = vld [vmem:[%s1 + $0x58] sm:$0xf]
        %v314 = vld [vmem:[%s1 + $0x5c] sm:$0xf]
        %v315 = vld [vmem:[%s1 + $0x60] sm:$0xf]
        %v316 = vld [vmem:[%s1 + $0x64] sm:$0xf]
        %v317 = vld [vmem:[%s1 + $0x68] sm:$0xf]
        %v318 = vld [vmem:[%s1 + $0x6c] sm:$0xf]
        %v319 = vld [vmem:[%s1 + $0x70] sm:$0xf]
        %v320 = vld [vmem:[%s1 + $0x74] sm:$0xf]
        %v321 = vld [vmem:[%s1 + $0x78] sm:$0xf]
        %v322 = vld [vmem:[%s1 + $0x7c] sm:$0xf]
        %v323 = vld [vmem:[%s1 + $0x80] sm:$0xf]
        %v324 = vld [vmem:[%s1 + $0x84] sm:$0xf]
        %v325 = vld [vmem:[%s1 + $0x88] sm:$0xf]
        %v326 = vld [vmem:[%s1 + $0x8c] sm:$0xf]
        %v327 = vld [vmem:[%s1 + $0x90] sm:$0xf]
        %v328 = vld [vmem:[%s1 + $0x94] sm:$0xf]
        %v329 = vld [vmem:[%s1 + $0x98] sm:$0xf]
        %v330 = vld [vmem:[%s1 + $0x9c] sm:$0xf]
        %v331 = vld [vmem:[%s1 + $0xa0] sm:$0xf]
        %v332 = vld [vmem:[%s1 + $0xa4] sm:$0xf]
        %v333 = vld [vmem:[%s1 + $0xa8] sm:$0xf]
        %v334 = vld [vmem:[%s1 + $0xac] sm:$0xf]
        %v335 = vld [vmem:[%s1 + $0xb0] sm:$0xf]
        %v336 = vld [vmem:[%s1 + $0xb4] sm:$0xf]
        %v337 = vld [vmem:[%s1 + $0xb8] sm:$0xf]
        %v338 = vld [vmem:[%s1 + $0xbc] sm:$0xf]
        %v339 = vld [vmem:[%s1 + $0xc0] sm:$0xf]
        %v340 = vld [vmem:[%s1 + $0xc4] sm:$0xf]
        %v341 = vld [vmem:[%s1 + $0xc8] sm:$0xf]
        %v342 = vld [vmem:[%s1 + $0xcc] sm:$0xf]
        %v343 = vld [vmem:[%s1 + $0xd0] sm:$0xf]
        %v344 = vld [vmem:[%s1 + $0xd4] sm:$0xf]
        %v345 = vld [vmem:[%s1 + $0xd8] sm:$0xf]
        %v346 = vld [vmem:[%s1 + $0xdc] sm:$0xf]
        %v347 = vld [vmem:[%s1 + $0xe0] sm:$0xf]
        %v348 = vld [vmem:[%s1 + $0xe4] sm:$0xf]
        %v349 = vld [vmem:[%s1 + $0xe8] sm:$0xf]
        %v350 = vld [vmem:[%s1 + $0xec] sm:$0xf]
        %v351 = vld [vmem:[%s1 + $0xf0] sm:$0xf]
        %v352 = vld [vmem:[%s1 + $0xf4] sm:$0xf]
        %v353 = vld [vmem:[%s1 + $0xf8] sm:$0xf]
        %v354 = vld [vmem:[%s1 + $0xfc] sm:$0xf]
        %v355 = vld [vmem:[%s1 + $0x100] sm:$0xf]
        %v356 = vld [vmem:[%s1 + $0x104] sm:$0xf]
        %v357 = vld [vmem:[%s1 + $0x108] sm:$0xf]
        %v358 = vld [vmem:[%s1 + $0x10c] sm:$0xf]
        %v359 = vld [vmem:[%s1 + $0x110] sm:$0xf]
        %v360 = vld [vmem:[%s1 + $0x114] sm:$0xf]
        %v361 = vld [vmem:[%s1 + $0x118] sm:$0xf]
        %v362 = vld [vmem:[%s1 + $0x11c] sm:$0xf]
        %v363 = vld [vmem:[%s1 + $0x120] sm:$0xf]
        %v364 = vld [vmem:[%s1 + $0x124] sm:$0xf]
        %v365 = vld [vmem:[%s1 + $0x128] sm:$0xf]
        %v366 = vld [vmem:[%s1 + $0x12c] sm:$0xf]
        %v367 = vld [vmem:[%s1 + $0x130] sm:$0xf]
        %v368 = vld [vmem:[%s1 + $0x134] sm:$0xf]
        %v369 = vld [vmem:[%s1 + $0x138] sm:$0xf]
        %v370 = vld [vmem:[%s1 + $0x13c] sm:$0xf]
        %v371 = vld [vmem:[%s1 + $0x140] sm:$0xf]
        %v372 = vld [vmem:[%s1 + $0x144] sm:$0xf]
        %v373 = vld [vmem:[%s1 + $0x148] sm:$0xf]
        %v374 = vld [vmem:[%s1 + $0x14c] sm:$0xf]
        %v375 = vld [vmem:[%s1 + $0x150] sm:$0xf]
        %v376 = vld [vmem:[%s1 + $0x154] sm:$0xf]
        %v377 = vld [vmem:[%s1 + $0x158] sm:$0xf]
        %v378 = vld [vmem:[%s1 + $0x15c] sm:$0xf]
        %v379 = vld [vmem:[%s1 + $0x160] sm:$0xf]
        %v380 = vld [vmem:[%s1 + $0x164] sm:$0xf]
        %v381 = vld [vmem:[%s1 + $0x168] sm:$0xf]
        %v382 = vld [vmem:[%s1 + $0x16c] sm:$0xf]
        %v383 = vld [vmem:[%s1 + $0x170] sm:$0xf]
        %v384 = vld [vmem:[%s1 + $0x174] sm:$0xf]
        %v385 = vld [vmem:[%s1 + $0x178] sm:$0xf]
        %v386 = vld [vmem:[%s1 + $0x17c] sm:$0xf]
        %v387 = vld [vmem:[%s1 + $0x180] sm:$0xf]
        %v388 = vld [vmem:[%s1 + $0x184] sm:$0xf]
        %v389 = vld [vmem:[%s1 + $0x188] sm:$0xf]
        %v390 = vld [vmem:[%s1 + $0x18c] sm:$0xf]
        %v391 = vld [vmem:[%s1 + $0x190] sm:$0xf]
        %v392 = vld [vmem:[%s1 + $0x194] sm:$0xf]
        %v393 = vld [vmem:[%s1 + $0x198] sm:$0xf]
        %v394 = vld [vmem:[%s1 + $0x19c] sm:$0xf]
        %v395 = vld [vmem:[%s1 + $0x1a0] sm:$0xf]
        %v396 = vld [vmem:[%s1 + $0x1a4] sm:$0xf]
        %v397 = vld [vmem:[%s1 + $0x1a8] sm:$0xf]
        %v398 = vld [vmem:[%s1 + $0x1ac] sm:$0xf]
        %v399 = vld [vmem:[%s1 + $0x1b0] sm:$0xf]
        %v400 = vld [vmem:[%s1 + $0x1b4] sm:$0xf]
        %v401 = vld [vmem:[%s1 + $0x1b8] sm:$0xf]
        %v402 = vld [vmem:[%s1 + $0x1bc] sm:$0xf]
        %v403 = vld [vmem:[%s1 + $0x1c0] sm:$0xf]
        %v404 = vld [vmem:[%s1 + $0x1c4] sm:$0xf]
        %v405 = vld [vmem:[%s1 + $0x1c8] sm:$0xf]
        %v406 = vld [vmem:[%s1 + $0x1cc] sm:$0xf]
        %v407 = vld [vmem:[%s1 + $0x1d0] sm:$0xf]
        %v408 = vld [vmem:[%s1 + $0x1d4] sm:$0xf]
        %v409 = vld [vmem:[%s1 + $0x1d8] sm:$0xf]
        %v410 = vld [vmem:[%s1 + $0x1dc] sm:$0xf]
        %v411 = vld [vmem:[%s1 + $0x1e0] sm:$0xf]
        %v412 = vld [vmem:[%s1 + $0x1e4] sm:$0xf]
        %v413 = vld [vmem:[%s1 + $0x1e8] sm:$0xf]
        %v414 = vld [vmem:[%s1 + $0x1ec] sm:$0xf]
        %v415 = vld [vmem:[%s1 + $0x1f0] sm:$0xf]
        %v416 = vld [vmem:[%s1 + $0x1f4] sm:$0xf]
        %v417 = vld [vmem:[%s1 + $0x1f8] sm:$0xf]
        %v418 = vld [vmem:[%s1 + $0x1fc] sm:$0xf]
        %v419 = vld [vmem:[%s1 + $0x200] sm:$0xf]
        %v420 = vld [vmem:[%s1 + $0x204] sm:$0xf]
        %v421 = vld [vmem:[%s1 + $0x208] sm:$0xf]
        %v422 = vld [vmem:[%s1 + $0x20c] sm:$0xf]
        %v423 = vld [vmem:[%s1 + $0x210] sm:$0xf]
        %v424 = vld [vmem:[%s1 + $0x214] sm:$0xf]
        %v425 = vld [vmem:[%s1 + $0x218] sm:$0xf]
        %v426 = vld [vmem:[%s1 + $0x21c] sm:$0xf]
        %v427 = vld [vmem:[%s1 + $0x220] sm:$0xf]
        %v428 = vld [vmem:[%s1 + $0x224] sm:$0xf]
        %v429 = vld [vmem:[%s1 + $0x228] sm:$0xf]
        %v430 = vld [vmem:[%s1 + $0x22c] sm:$0xf]
        %v431 = vld [vmem:[%s1 + $0x230] sm:$0xf]
        %v432 = vld [vmem:[%s1 + $0x234] sm:$0xf]
        %v433 = vld [vmem:[%s1 + $0x238] sm:$0xf]
        %v434 = vld [vmem:[%s1 + $0x23c] sm:$0xf]
        %vm435 = vsmask.f32 3328
        %vm436 = vsmask.f32 7440
        %vm437 = vmor %vm435, %vm436
        %v439 = vshrl.u32 %v243, 16
        %v441 = vrot.slane %v439, 4
        %v442 = vshll.u32 %v243, 16
        %v444 = vrot.slane %v442, 5
        %v445 = vor.u32 %v441, %v444
        %v446 = vrot.slane %v445, 4
        %v448 = vshll.u32 %v244, 16
        %v450 = vrot.slane %v448, 5
        %v451 = vsel %vm437, %v446, %v450
        %v452 = vshrl.u32 %v244, 16
        %v454 = vrot.slane %v452, 4
        %v455 = vor.u32 %v454, %v450
        %v456 = vrot.slane %v455, 4
        %v458 = vshll.u32 %v245, 16
        %v460 = vrot.slane %v458, 5
        %v461 = vsel %vm437, %v456, %v460
        %v462 = vshrl.u32 %v245, 16
        %v464 = vrot.slane %v462, 4
        %v465 = vor.u32 %v464, %v460
        %v466 = vrot.slane %v465, 4
        %v468 = vshll.u32 %v246, 16
        %v470 = vrot.slane %v468, 5
        %v471 = vsel %vm437, %v466, %v470
        %v473 = vshrl.u32 %v247, 16
        %v475 = vrot.slane %v473, 4
        %v476 = vshll.u32 %v247, 16
        %v478 = vrot.slane %v476, 5
        %v479 = vor.u32 %v475, %v478
        %v480 = vrot.slane %v479, 4
        %v482 = vshll.u32 %v248, 16
        %v484 = vrot.slane %v482, 5
        %v485 = vsel %vm437, %v480, %v484
        %v486 = vshrl.u32 %v248, 16
        %v488 = vrot.slane %v486, 4
        %v489 = vor.u32 %v488, %v484
        %v490 = vrot.slane %v489, 4
        %v492 = vshll.u32 %v249, 16
        %v494 = vrot.slane %v492, 5
        %v495 = vsel %vm437, %v490, %v494
        %v496 = vshrl.u32 %v249, 16
        %v498 = vrot.slane %v496, 4
        %v499 = vor.u32 %v498, %v494
        %v500 = vrot.slane %v499, 4
        %v502 = vshll.u32 %v250, 16
        %v504 = vrot.slane %v502, 5
        %v505 = vsel %vm437, %v500, %v504
        %v507 = vshrl.u32 %v251, 16
        %v509 = vrot.slane %v507, 4
        %v510 = vshll.u32 %v251, 16
        %v512 = vrot.slane %v510, 5
        %v513 = vor.u32 %v509, %v512
        %v514 = vrot.slane %v513, 4
        %v516 = vshll.u32 %v252, 16
        %v518 = vrot.slane %v516, 5
        %v519 = vsel %vm437, %v514, %v518
        %v520 = vshrl.u32 %v252, 16
        %v522 = vrot.slane %v520, 4
        %v523 = vor.u32 %v522, %v518
        %v524 = vrot.slane %v523, 4
        %v526 = vshll.u32 %v253, 16
        %v528 = vrot.slane %v526, 5
        %v529 = vsel %vm437, %v524, %v528
        %v530 = vshrl.u32 %v253, 16
        %v532 = vrot.slane %v530, 4
        %v533 = vor.u32 %v532, %v528
        %v534 = vrot.slane %v533, 4
        %v536 = vshll.u32 %v254, 16
        %v538 = vrot.slane %v536, 5
        %v539 = vsel %vm437, %v534, %v538
        %v541 = vshrl.u32 %v255, 16
        %v543 = vrot.slane %v541, 4
        %v544 = vshll.u32 %v255, 16
        %v546 = vrot.slane %v544, 5
        %v547 = vor.u32 %v543, %v546
        %v548 = vrot.slane %v547, 4
        %v550 = vshll.u32 %v256, 16
        %v552 = vrot.slane %v550, 5
        %v553 = vsel %vm437, %v548, %v552
        %v554 = vshrl.u32 %v256, 16
        %v556 = vrot.slane %v554, 4
        %v557 = vor.u32 %v556, %v552
        %v558 = vrot.slane %v557, 4
        %v560 = vshll.u32 %v257, 16
        %v562 = vrot.slane %v560, 5
        %v563 = vsel %vm437, %v558, %v562
        %v564 = vshrl.u32 %v257, 16
        %v566 = vrot.slane %v564, 4
        %v567 = vor.u32 %v566, %v562
        %v568 = vrot.slane %v567, 4
        %v570 = vshll.u32 %v258, 16
        %v572 = vrot.slane %v570, 5
        %v573 = vsel %vm437, %v568, %v572
        %v575 = vshrl.u32 %v259, 16
        %v577 = vrot.slane %v575, 4
        %v578 = vshll.u32 %v259, 16
        %v580 = vrot.slane %v578, 5
        %v581 = vor.u32 %v577, %v580
        %v582 = vrot.slane %v581, 4
        %v584 = vshll.u32 %v260, 16
        %v586 = vrot.slane %v584, 5
        %v587 = vsel %vm437, %v582, %v586
        %v588 = vshrl.u32 %v260, 16
        %v590 = vrot.slane %v588, 4
        %v591 = vor.u32 %v590, %v586
        %v592 = vrot.slane %v591, 4
        %v594 = vshll.u32 %v261, 16
        %v596 = vrot.slane %v594, 5
        %v597 = vsel %vm437, %v592, %v596
        %v598 = vshrl.u32 %v261, 16
        %v600 = vrot.slane %v598, 4
        %v601 = vor.u32 %v600, %v596
        %v602 = vrot.slane %v601, 4
        %v604 = vshll.u32 %v262, 16
        %v606 = vrot.slane %v604, 5
        %v607 = vsel %vm437, %v602, %v606
        %v609 = vshrl.u32 %v263, 16
        %v611 = vrot.slane %v609, 4
        %v612 = vshll.u32 %v263, 16
        %v614 = vrot.slane %v612, 5
        %v615 = vor.u32 %v611, %v614
        %v616 = vrot.slane %v615, 4
        %v618 = vshll.u32 %v264, 16
        %v620 = vrot.slane %v618, 5
        %v621 = vsel %vm437, %v616, %v620
        %v622 = vshrl.u32 %v264, 16
        %v624 = vrot.slane %v622, 4
        %v625 = vor.u32 %v624, %v620
        %v626 = vrot.slane %v625, 4
        %v628 = vshll.u32 %v265, 16
        %v630 = vrot.slane %v628, 5
        %v631 = vsel %vm437, %v626, %v630
        %v632 = vshrl.u32 %v265, 16
        %v634 = vrot.slane %v632, 4
        %v635 = vor.u32 %v634, %v630
        %v636 = vrot.slane %v635, 4
        %v638 = vshll.u32 %v266, 16
        %v640 = vrot.slane %v638, 5
        %v641 = vsel %vm437, %v636, %v640
        %v643 = vshrl.u32 %v267, 16
        %v645 = vrot.slane %v643, 4
        %v646 = vshll.u32 %v267, 16
        %v648 = vrot.slane %v646, 5
        %v649 = vor.u32 %v645, %v648
        %v650 = vrot.slane %v649, 4
        %v652 = vshll.u32 %v268, 16
        %v654 = vrot.slane %v652, 5
        %v655 = vsel %vm437, %v650, %v654
        %v656 = vshrl.u32 %v268, 16
        %v658 = vrot.slane %v656, 4
        %v659 = vor.u32 %v658, %v654
        %v660 = vrot.slane %v659, 4
        %v662 = vshll.u32 %v269, 16
        %v664 = vrot.slane %v662, 5
        %v665 = vsel %vm437, %v660, %v664
        %v666 = vshrl.u32 %v269, 16
        %v668 = vrot.slane %v666, 4
        %v669 = vor.u32 %v668, %v664
        %v670 = vrot.slane %v669, 4
        %v672 = vshll.u32 %v270, 16
        %v674 = vrot.slane %v672, 5
        %v675 = vsel %vm437, %v670, %v674
        %v677 = vshrl.u32 %v271, 16
        %v679 = vrot.slane %v677, 4
        %v680 = vshll.u32 %v271, 16
        %v682 = vrot.slane %v680, 5
        %v683 = vor.u32 %v679, %v682
        %v684 = vrot.slane %v683, 4
        %v686 = vshll.u32 %v272, 16
        %v688 = vrot.slane %v686, 5
        %v689 = vsel %vm437, %v684, %v688
        %v690 = vshrl.u32 %v272, 16
        %v692 = vrot.slane %v690, 4
        %v693 = vor.u32 %v692, %v688
        %v694 = vrot.slane %v693, 4
        %v696 = vshll.u32 %v273, 16
        %v698 = vrot.slane %v696, 5
        %v699 = vsel %vm437, %v694, %v698
        %v700 = vshrl.u32 %v273, 16
        %v702 = vrot.slane %v700, 4
        %v703 = vor.u32 %v702, %v698
        %v704 = vrot.slane %v703, 4
        %v706 = vshll.u32 %v274, 16
        %v708 = vrot.slane %v706, 5
        %v709 = vsel %vm437, %v704, %v708
        %v711 = vshrl.u32 %v275, 16
        %v713 = vrot.slane %v711, 4
        %v714 = vshll.u32 %v275, 16
        %v716 = vrot.slane %v714, 5
        %v717 = vor.u32 %v713, %v716
        %v718 = vrot.slane %v717, 4
        %v720 = vshll.u32 %v276, 16
        %v722 = vrot.slane %v720, 5
        %v723 = vsel %vm437, %v718, %v722
        %v724 = vshrl.u32 %v276, 16
        %v726 = vrot.slane %v724, 4
        %v727 = vor.u32 %v726, %v722
        %v728 = vrot.slane %v727, 4
        %v730 = vshll.u32 %v277, 16
        %v732 = vrot.slane %v730, 5
        %v733 = vsel %vm437, %v728, %v732
        %v734 = vshrl.u32 %v277, 16
        %v736 = vrot.slane %v734, 4
        %v737 = vor.u32 %v736, %v732
        %v738 = vrot.slane %v737, 4
        %v740 = vshll.u32 %v278, 16
        %v742 = vrot.slane %v740, 5
        %v743 = vsel %vm437, %v738, %v742
        %v745 = vshrl.u32 %v279, 16
        %v747 = vrot.slane %v745, 4
        %v748 = vshll.u32 %v279, 16
        %v750 = vrot.slane %v748, 5
        %v751 = vor.u32 %v747, %v750
        %v752 = vrot.slane %v751, 4
        %v754 = vshll.u32 %v280, 16
        %v756 = vrot.slane %v754, 5
        %v757 = vsel %vm437, %v752, %v756
        %v758 = vshrl.u32 %v280, 16
        %v760 = vrot.slane %v758, 4
        %v761 = vor.u32 %v760, %v756
        %v762 = vrot.slane %v761, 4
        %v764 = vshll.u32 %v281, 16
        %v766 = vrot.slane %v764, 5
        %v767 = vsel %vm437, %v762, %v766
        %v768 = vshrl.u32 %v281, 16
        %v770 = vrot.slane %v768, 4
        %v771 = vor.u32 %v770, %v766
        %v772 = vrot.slane %v771, 4
        %v774 = vshll.u32 %v282, 16
        %v776 = vrot.slane %v774, 5
        %v777 = vsel %vm437, %v772, %v776
        %vm818 = vcmask 1042432
        %vm819 = vcmask 1046532
        %vm820 = vmor %vm818, %vm819
        %v821 = vrot.slane %v243, 5
        %v822 = vrot.slane %v821, 4
        %v823 = vrot.slane %v244, 5
        %v824 = vsel %vm820, %v822, %v823
        %v825 = vrot.slane %v823, 4
        %v826 = vrot.slane %v245, 5
        %v827 = vsel %vm820, %v825, %v826
        %v828 = vrot.slane %v826, 4
        %v829 = vrot.slane %v246, 5
        %v830 = vsel %vm820, %v828, %v829
        %v831 = vrot.slane %v247, 5
        %v832 = vrot.slane %v831, 4
        %v833 = vrot.slane %v248, 5
        %v834 = vsel %vm820, %v832, %v833
        %v835 = vrot.slane %v833, 4
        %v836 = vrot.slane %v249, 5
        %v837 = vsel %vm820, %v835, %v836
        %v838 = vrot.slane %v836, 4
        %v839 = vrot.slane %v250, 5
        %v840 = vsel %vm820, %v838, %v839
        %v841 = vrot.slane %v251, 5
        %v842 = vrot.slane %v841, 4
        %v843 = vrot.slane %v252, 5
        %v844 = vsel %vm820, %v842, %v843
        %v845 = vrot.slane %v843, 4
        %v846 = vrot.slane %v253, 5
        %v847 = vsel %vm820, %v845, %v846
        %v848 = vrot.slane %v846, 4
        %v849 = vrot.slane %v254, 5
        %v850 = vsel %vm820, %v848, %v849
        %v851 = vrot.slane %v255, 5
        %v852 = vrot.slane %v851, 4
        %v853 = vrot.slane %v256, 5
        %v854 = vsel %vm820, %v852, %v853
        %v855 = vrot.slane %v853, 4
        %v856 = vrot.slane %v257, 5
        %v857 = vsel %vm820, %v855, %v856
        %v858 = vrot.slane %v856, 4
        %v859 = vrot.slane %v258, 5
        %v860 = vsel %vm820, %v858, %v859
        %v861 = vrot.slane %v259, 5
        %v862 = vrot.slane %v861, 4
        %v863 = vrot.slane %v260, 5
        %v864 = vsel %vm820, %v862, %v863
        %v865 = vrot.slane %v863, 4
        %v866 = vrot.slane %v261, 5
        %v867 = vsel %vm820, %v865, %v866
        %v868 = vrot.slane %v866, 4
        %v869 = vrot.slane %v262, 5
        %v870 = vsel %vm820, %v868, %v869
        %v871 = vrot.slane %v263, 5
        %v872 = vrot.slane %v871, 4
        %v873 = vrot.slane %v264, 5
        %v874 = vsel %vm820, %v872, %v873
        %v875 = vrot.slane %v873, 4
        %v876 = vrot.slane %v265, 5
        %v877 = vsel %vm820, %v875, %v876
        %v878 = vrot.slane %v876, 4
        %v879 = vrot.slane %v266, 5
        %v880 = vsel %vm820, %v878, %v879
        %v881 = vrot.slane %v267, 5
        %v882 = vrot.slane %v881, 4
        %v883 = vrot.slane %v268, 5
        %v884 = vsel %vm820, %v882, %v883
        %v885 = vrot.slane %v883, 4
        %v886 = vrot.slane %v269, 5
        %v887 = vsel %vm820, %v885, %v886
        %v888 = vrot.slane %v886, 4
        %v889 = vrot.slane %v270, 5
        %v890 = vsel %vm820, %v888, %v889
        %v891 = vrot.slane %v271, 5
        %v892 = vrot.slane %v891, 4
        %v893 = vrot.slane %v272, 5
        %v894 = vsel %vm820, %v892, %v893
        %v895 = vrot.slane %v893, 4
        %v896 = vrot.slane %v273, 5
        %v897 = vsel %vm820, %v895, %v896
        %v898 = vrot.slane %v896, 4
        %v899 = vrot.slane %v274, 5
        %v900 = vsel %vm820, %v898, %v899
        %v901 = vrot.slane %v275, 5
        %v902 = vrot.slane %v901, 4
        %v903 = vrot.slane %v276, 5
        %v904 = vsel %vm820, %v902, %v903
        %v905 = vrot.slane %v903, 4
        %v906 = vrot.slane %v277, 5
        %v907 = vsel %vm820, %v905, %v906
        %v908 = vrot.slane %v906, 4
        %v909 = vrot.slane %v278, 5
        %v910 = vsel %vm820, %v908, %v909
        %v911 = vrot.slane %v279, 5
        %v912 = vrot.slane %v911, 4
        %v913 = vrot.slane %v280, 5
        %v914 = vsel %vm820, %v912, %v913
        %v915 = vrot.slane %v913, 4
        %v916 = vrot.slane %v281, 5
        %v917 = vsel %vm820, %v915, %v916
        %v918 = vrot.slane %v916, 4
        %v919 = vrot.slane %v282, 5
        %v920 = vsel %vm820, %v918, %v919
        %v922 = vshrl.u32 %v283, 16
        %v924 = vrot.slane %v922, 4
        %v925 = vshll.u32 %v283, 16
        %v927 = vrot.slane %v925, 5
        %v928 = vor.u32 %v924, %v927
        %v929 = vrot.slane %v928, 4
        %v931 = vshll.u32 %v284, 16
        %v933 = vrot.slane %v931, 5
        %v934 = vsel %vm437, %v929, %v933
        %v935 = vshrl.u32 %v284, 16
        %v937 = vrot.slane %v935, 4
        %v938 = vor.u32 %v937, %v933
        %v939 = vrot.slane %v938, 4
        %v941 = vshll.u32 %v285, 16
        %v943 = vrot.slane %v941, 5
        %v944 = vsel %vm437, %v939, %v943
        %v945 = vshrl.u32 %v285, 16
        %v947 = vrot.slane %v945, 4
        %v948 = vor.u32 %v947, %v943
        %v949 = vrot.slane %v948, 4
        %v951 = vshll.u32 %v286, 16
        %v953 = vrot.slane %v951, 5
        %v954 = vsel %vm437, %v949, %v953
        %v959 = vrot.slane %v283, 5
        %v960 = vrot.slane %v959, 4
        %v961 = vrot.slane %v284, 5
        %v962 = vsel %vm820, %v960, %v961
        %v963 = vrot.slane %v961, 4
        %v964 = vrot.slane %v285, 5
        %v965 = vsel %vm820, %v963, %v964
        %v966 = vrot.slane %v964, 4
        %v967 = vrot.slane %v286, 5
        %v968 = vsel %vm820, %v966, %v967
        %v970 = vshrl.u32 %v287, 16
        %v972 = vrot.slane %v970, 4
        %v973 = vshll.u32 %v287, 16
        %v975 = vrot.slane %v973, 5
        %v976 = vor.u32 %v972, %v975
        %v977 = vrot.slane %v976, 4
        %v979 = vshll.u32 %v288, 16
        %v981 = vrot.slane %v979, 5
        %v982 = vsel %vm437, %v977, %v981
        %v983 = vshrl.u32 %v288, 16
        %v985 = vrot.slane %v983, 4
        %v986 = vor.u32 %v985, %v981
        %v987 = vrot.slane %v986, 4
        %v989 = vshll.u32 %v289, 16
        %v991 = vrot.slane %v989, 5
        %v992 = vsel %vm437, %v987, %v991
        %v993 = vshrl.u32 %v289, 16
        %v995 = vrot.slane %v993, 4
        %v996 = vor.u32 %v995, %v991
        %v997 = vrot.slane %v996, 4
        %v999 = vshll.u32 %v290, 16
        %v1001 = vrot.slane %v999, 5
        %v1002 = vsel %vm437, %v997, %v1001
        %v1007 = vrot.slane %v287, 5
        %v1008 = vrot.slane %v1007, 4
        %v1009 = vrot.slane %v288, 5
        %v1010 = vsel %vm820, %v1008, %v1009
        %v1011 = vrot.slane %v1009, 4
        %v1012 = vrot.slane %v289, 5
        %v1013 = vsel %vm820, %v1011, %v1012
        %v1014 = vrot.slane %v1012, 4
        %v1015 = vrot.slane %v290, 5
        %v1016 = vsel %vm820, %v1014, %v1015
        %v1017 = vunpack.c.l.b16 %v243
        %v1018 = vunpack.c.l.b16 %v244
        %v1019 = vunpack.c.l.b16 %v245
        %v1020 = vunpack.c.l.b16 %v247
        %v1021 = vunpack.c.l.b16 %v248
        %v1022 = vunpack.c.l.b16 %v249
        %v1023 = vunpack.c.l.b16 %v251
        %v1024 = vunpack.c.l.b16 %v252
        %v1025 = vunpack.c.l.b16 %v253
        %v1026 = vunpack.c.l.b16 %v255
        %v1027 = vunpack.c.l.b16 %v256
        %v1028 = vunpack.c.l.b16 %v257
        %v1029 = vunpack.c.l.b16 %v259
        %v1030 = vunpack.c.l.b16 %v260
        %v1031 = vunpack.c.l.b16 %v261
        %v1032 = vunpack.c.l.b16 %v263
        %v1033 = vunpack.c.l.b16 %v264
        %v1034 = vunpack.c.l.b16 %v265
        %v1035 = vunpack.c.l.b16 %v267
        %v1036 = vunpack.c.l.b16 %v268
        %v1037 = vunpack.c.l.b16 %v269
        %v1038 = vunpack.c.l.b16 %v271
        %v1039 = vunpack.c.l.b16 %v272
        %v1040 = vunpack.c.l.b16 %v273
        %v1041 = vunpack.c.l.b16 %v275
        %v1042 = vunpack.c.l.b16 %v276
        %v1043 = vunpack.c.l.b16 %v277
        %v1044 = vunpack.c.l.b16 %v279
        %v1045 = vunpack.c.l.b16 %v280
        %v1046 = vunpack.c.l.b16 %v281
        %v1047 = vpack.c.b16 %v1018, %v1017
        %v1048 = vpack.c.b16 %v1020, %v1019
        %v1049 = vpack.c.b16 %v1022, %v1021
        %v1050 = vpack.c.b16 %v1024, %v1023
        %v1051 = vpack.c.b16 %v1026, %v1025
        %v1052 = vpack.c.b16 %v1028, %v1027
        %v1053 = vpack.c.b16 %v1030, %v1029
        %v1054 = vpack.c.b16 %v1032, %v1031
        %v1055 = vpack.c.b16 %v1034, %v1033
        %v1056 = vpack.c.b16 %v1036, %v1035
        %v1057 = vpack.c.b16 %v1038, %v1037
        %v1058 = vpack.c.b16 %v1040, %v1039
        %v1059 = vpack.c.b16 %v1042, %v1041
        %v1060 = vpack.c.b16 %v1044, %v1043
        %v1061 = vpack.c.b16 %v1046, %v1045
        %v1077 = vunpack.c.l.b16 %v451
        %v1078 = vunpack.c.l.b16 %v461
        %v1079 = vunpack.c.l.b16 %v471
        %v1080 = vunpack.c.l.b16 %v485
        %v1081 = vunpack.c.l.b16 %v495
        %v1082 = vunpack.c.l.b16 %v505
        %v1083 = vunpack.c.l.b16 %v519
        %v1084 = vunpack.c.l.b16 %v529
        %v1085 = vunpack.c.l.b16 %v539
        %v1086 = vunpack.c.l.b16 %v553
        %v1087 = vunpack.c.l.b16 %v563
        %v1088 = vunpack.c.l.b16 %v573
        %v1089 = vunpack.c.l.b16 %v587
        %v1090 = vunpack.c.l.b16 %v597
        %v1091 = vunpack.c.l.b16 %v607
        %v1092 = vunpack.c.l.b16 %v621
        %v1093 = vunpack.c.l.b16 %v631
        %v1094 = vunpack.c.l.b16 %v641
        %v1095 = vunpack.c.l.b16 %v655
        %v1096 = vunpack.c.l.b16 %v665
        %v1097 = vunpack.c.l.b16 %v675
        %v1098 = vunpack.c.l.b16 %v689
        %v1099 = vunpack.c.l.b16 %v699
        %v1100 = vunpack.c.l.b16 %v709
        %v1101 = vunpack.c.l.b16 %v723
        %v1102 = vunpack.c.l.b16 %v733
        %v1103 = vunpack.c.l.b16 %v743
        %v1104 = vunpack.c.l.b16 %v757
        %v1105 = vunpack.c.l.b16 %v767
        %v1106 = vunpack.c.l.b16 %v777
        %v1107 = vpack.c.b16 %v1078, %v1077
        %v1108 = vpack.c.b16 %v1080, %v1079
        %v1109 = vpack.c.b16 %v1082, %v1081
        %v1110 = vpack.c.b16 %v1084, %v1083
        %v1111 = vpack.c.b16 %v1086, %v1085
        %v1112 = vpack.c.b16 %v1088, %v1087
        %v1113 = vpack.c.b16 %v1090, %v1089
        %v1114 = vpack.c.b16 %v1092, %v1091
        %v1115 = vpack.c.b16 %v1094, %v1093
        %v1116 = vpack.c.b16 %v1096, %v1095
        %v1117 = vpack.c.b16 %v1098, %v1097
        %v1118 = vpack.c.b16 %v1100, %v1099
        %v1119 = vpack.c.b16 %v1102, %v1101
        %v1120 = vpack.c.b16 %v1104, %v1103
        %v1121 = vpack.c.b16 %v1106, %v1105
        %v1137 = vunpack.c.l.b16 %v824
        %v1138 = vunpack.c.l.b16 %v827
        %v1139 = vunpack.c.l.b16 %v830
        %v1140 = vunpack.c.l.b16 %v834
        %v1141 = vunpack.c.l.b16 %v837
        %v1142 = vunpack.c.l.b16 %v840
        %v1143 = vunpack.c.l.b16 %v844
        %v1144 = vunpack.c.l.b16 %v847
        %v1145 = vunpack.c.l.b16 %v850
        %v1146 = vunpack.c.l.b16 %v854
        %v1147 = vunpack.c.l.b16 %v857
        %v1148 = vunpack.c.l.b16 %v860
        %v1149 = vunpack.c.l.b16 %v864
        %v1150 = vunpack.c.l.b16 %v867
        %v1151 = vunpack.c.l.b16 %v870
        %v1152 = vunpack.c.l.b16 %v874
        %v1153 = vunpack.c.l.b16 %v877
        %v1154 = vunpack.c.l.b16 %v880
        %v1155 = vunpack.c.l.b16 %v884
        %v1156 = vunpack.c.l.b16 %v887
        %v1157 = vunpack.c.l.b16 %v890
        %v1158 = vunpack.c.l.b16 %v894
        %v1159 = vunpack.c.l.b16 %v897
        %v1160 = vunpack.c.l.b16 %v900
        %v1161 = vunpack.c.l.b16 %v904
        %v1162 = vunpack.c.l.b16 %v907
        %v1163 = vunpack.c.l.b16 %v910
        %v1164 = vunpack.c.l.b16 %v914
        %v1165 = vunpack.c.l.b16 %v917
        %v1166 = vunpack.c.l.b16 %v920
        %v1167 = vpack.c.b16 %v1138, %v1137
        %v1168 = vpack.c.b16 %v1140, %v1139
        %v1169 = vpack.c.b16 %v1142, %v1141
        %v1170 = vpack.c.b16 %v1144, %v1143
        %v1171 = vpack.c.b16 %v1146, %v1145
        %v1172 = vpack.c.b16 %v1148, %v1147
        %v1173 = vpack.c.b16 %v1150, %v1149
        %v1174 = vpack.c.b16 %v1152, %v1151
        %v1175 = vpack.c.b16 %v1154, %v1153
        %v1176 = vpack.c.b16 %v1156, %v1155
        %v1177 = vpack.c.b16 %v1158, %v1157
        %v1178 = vpack.c.b16 %v1160, %v1159
        %v1179 = vpack.c.b16 %v1162, %v1161
        %v1180 = vpack.c.b16 %v1164, %v1163
        %v1181 = vpack.c.b16 %v1166, %v1165
        %v1197 = vunpack.c.l.b16 %v283
        %v1198 = vunpack.c.l.b16 %v284
        %v1199 = vunpack.c.l.b16 %v285
        %v1200 = vpack.c.b16 %v1021, %v1020
        %v1201 = vpack.c.b16 %v1023, %v1022
        %v1202 = vpack.c.b16 %v1025, %v1024
        %v1203 = vpack.c.b16 %v1027, %v1026
        %v1204 = vpack.c.b16 %v1029, %v1028
        %v1205 = vpack.c.b16 %v1031, %v1030
        %v1206 = vpack.c.b16 %v1033, %v1032
        %v1207 = vpack.c.b16 %v1035, %v1034
        %v1208 = vpack.c.b16 %v1037, %v1036
        %v1209 = vpack.c.b16 %v1039, %v1038
        %v1210 = vpack.c.b16 %v1041, %v1040
        %v1211 = vpack.c.b16 %v1043, %v1042
        %v1212 = vpack.c.b16 %v1045, %v1044
        %v1213 = vpack.c.b16 %v1197, %v1046
        %v1214 = vpack.c.b16 %v1199, %v1198
        %v1230 = vunpack.c.l.b16 %v934
        %v1231 = vunpack.c.l.b16 %v944
        %v1232 = vunpack.c.l.b16 %v954
        %v1233 = vpack.c.b16 %v1081, %v1080
        %v1234 = vpack.c.b16 %v1083, %v1082
        %v1235 = vpack.c.b16 %v1085, %v1084
        %v1236 = vpack.c.b16 %v1087, %v1086
        %v1237 = vpack.c.b16 %v1089, %v1088
        %v1238 = vpack.c.b16 %v1091, %v1090
        %v1239 = vpack.c.b16 %v1093, %v1092
        %v1240 = vpack.c.b16 %v1095, %v1094
        %v1241 = vpack.c.b16 %v1097, %v1096
        %v1242 = vpack.c.b16 %v1099, %v1098
        %v1243 = vpack.c.b16 %v1101, %v1100
        %v1244 = vpack.c.b16 %v1103, %v1102
        %v1245 = vpack.c.b16 %v1105, %v1104
        %v1246 = vpack.c.b16 %v1230, %v1106
        %v1247 = vpack.c.b16 %v1232, %v1231
        %v1263 = vunpack.c.l.b16 %v962
        %v1264 = vunpack.c.l.b16 %v965
        %v1265 = vunpack.c.l.b16 %v968
        %v1266 = vpack.c.b16 %v1141, %v1140
        %v1267 = vpack.c.b16 %v1143, %v1142
        %v1268 = vpack.c.b16 %v1145, %v1144
        %v1269 = vpack.c.b16 %v1147, %v1146
        %v1270 = vpack.c.b16 %v1149, %v1148
        %v1271 = vpack.c.b16 %v1151, %v1150
        %v1272 = vpack.c.b16 %v1153, %v1152
        %v1273 = vpack.c.b16 %v1155, %v1154
        %v1274 = vpack.c.b16 %v1157, %v1156
        %v1275 = vpack.c.b16 %v1159, %v1158
        %v1276 = vpack.c.b16 %v1161, %v1160
        %v1277 = vpack.c.b16 %v1163, %v1162
        %v1278 = vpack.c.b16 %v1165, %v1164
        %v1279 = vpack.c.b16 %v1263, %v1166
        %v1280 = vpack.c.b16 %v1265, %v1264
        %v1296 = vunpack.c.l.b16 %v287
        %v1297 = vunpack.c.l.b16 %v288
        %v1298 = vunpack.c.l.b16 %v289
        %v1299 = vpack.c.b16 %v1198, %v1197
        %v1300 = vpack.c.b16 %v1296, %v1199
        %v1301 = vpack.c.b16 %v1298, %v1297
        %v1305 = vunpack.c.l.b16 %v982
        %v1306 = vunpack.c.l.b16 %v992
        %v1307 = vunpack.c.l.b16 %v1002
        %v1308 = vpack.c.b16 %v1231, %v1230
        %v1309 = vpack.c.b16 %v1305, %v1232
        %v1310 = vpack.c.b16 %v1307, %v1306
        %v1314 = vunpack.c.l.b16 %v1010
        %v1315 = vunpack.c.l.b16 %v1013
        %v1316 = vunpack.c.l.b16 %v1016
        %v1317 = vpack.c.b16 %v1264, %v1263
        %v1318 = vpack.c.b16 %v1314, %v1265
        %v1319 = vpack.c.b16 %v1316, %v1315
        %v1323 = vld [vmem:[%s2] sm:$0x1]
        %v1325 = vlaneseq
        %v1326 = vshrl.u32 %v1325, 7
        %v1327 = vsub.s32 0, %v1326
        %v1328 = vrot.slane %v1323, %v1327
        %v1474 = vunpack.c.l.b16 %v291
        %v1475 = vunpack.c.l.b16 %v292
        %v1476 = vunpack.c.l.b16 %v293
        %v1477 = vunpack.c.l.b16 %v294
        %v1478 = vunpack.c.l.b16 %v295
        %v1479 = vunpack.c.l.b16 %v296
        %v1480 = vunpack.c.l.b16 %v297
        %v1481 = vunpack.c.l.b16 %v298
        %v1482 = vunpack.c.l.b16 %v299
        %v1483 = vunpack.c.l.b16 %v300
        %v1484 = vunpack.c.l.b16 %v301
        %v1485 = vunpack.c.l.b16 %v302
        %v1486 = vunpack.c.l.b16 %v303
        %v1487 = vunpack.c.l.b16 %v304
        %v1488 = vunpack.c.l.b16 %v305
        %v1489 = vunpack.c.l.b16 %v306
        %v1490 = vunpack.c.l.b16 %v307
        %v1491 = vunpack.c.l.b16 %v308
        %v1492 = vunpack.c.l.b16 %v309
        %v1493 = vunpack.c.l.b16 %v310
        %v1494 = vunpack.c.l.b16 %v311
        %v1495 = vunpack.c.l.b16 %v312
        %v1496 = vunpack.c.l.b16 %v313
        %v1497 = vunpack.c.l.b16 %v314
        %v1498 = vunpack.c.l.b16 %v315
        %v1499 = vunpack.c.l.b16 %v316
        %v1500 = vunpack.c.l.b16 %v317
        %v1501 = vunpack.c.l.b16 %v318
        %v1502 = vunpack.c.l.b16 %v319
        %v1503 = vunpack.c.l.b16 %v320
        %v1504 = vunpack.c.l.b16 %v321
        %v1505 = vunpack.c.l.b16 %v322
        %v1506 = vunpack.c.l.b16 %v323
        %v1507 = vunpack.c.l.b16 %v324
        %v1508 = vunpack.c.l.b16 %v325
        %v1509 = vunpack.c.l.b16 %v326
        %v1510 = vunpack.c.l.b16 %v327
        %v1511 = vunpack.c.l.b16 %v328
        %v1512 = vunpack.c.l.b16 %v329
        %v1513 = vunpack.c.l.b16 %v330
        %v1514 = vunpack.c.l.b16 %v331
        %v1515 = vunpack.c.l.b16 %v332
        %v1516 = vunpack.c.l.b16 %v333
        %v1517 = vunpack.c.l.b16 %v334
        %v1518 = vunpack.c.l.b16 %v335
        %v1519 = vunpack.c.l.b16 %v336
        %v1520 = vunpack.c.l.b16 %v337
        %v1521 = vunpack.c.l.b16 %v338
        %v1522 = vunpack.c.l.b16 %v339
        %v1523 = vunpack.c.l.b16 %v340
        %v1524 = vunpack.c.l.b16 %v341
        %v1525 = vunpack.c.l.b16 %v342
        %v1526 = vunpack.c.l.b16 %v343
        %v1527 = vunpack.c.l.b16 %v344
        %v1528 = vunpack.c.l.b16 %v345
        %v1529 = vunpack.c.l.b16 %v346
        %v1530 = vunpack.c.l.b16 %v347
        %v1531 = vunpack.c.l.b16 %v348
        %v1532 = vunpack.c.l.b16 %v349
        %v1533 = vunpack.c.l.b16 %v350
        %v1534 = vunpack.c.l.b16 %v351
        %v1535 = vunpack.c.l.b16 %v352
        %v1536 = vunpack.c.l.b16 %v353
        %v1537 = vunpack.c.l.b16 %v354
        %v1538 = vunpack.c.l.b16 %v355
        %v1539 = vunpack.c.l.b16 %v356
        %v1540 = vunpack.c.l.b16 %v357
        %v1541 = vunpack.c.l.b16 %v358
        %v1542 = vunpack.c.l.b16 %v359
        %v1543 = vunpack.c.l.b16 %v360
        %v1544 = vunpack.c.l.b16 %v361
        %v1545 = vunpack.c.l.b16 %v362
        %v1546 = vunpack.c.l.b16 %v363
        %v1547 = vunpack.c.l.b16 %v364
        %v1548 = vunpack.c.l.b16 %v365
        %v1549 = vunpack.c.l.b16 %v366
        %v1550 = vunpack.c.l.b16 %v367
        %v1551 = vunpack.c.l.b16 %v368
        %v1552 = vunpack.c.l.b16 %v369
        %v1553 = vunpack.c.l.b16 %v370
        %v1554 = vunpack.c.l.b16 %v371
        %v1555 = vunpack.c.l.b16 %v372
        %v1556 = vunpack.c.l.b16 %v373
        %v1557 = vunpack.c.l.b16 %v374
        %v1558 = vunpack.c.l.b16 %v375
        %v1559 = vunpack.c.l.b16 %v376
        %v1560 = vunpack.c.l.b16 %v377
        %v1561 = vunpack.c.l.b16 %v378
        %v1562 = vunpack.c.l.b16 %v379
        %v1563 = vunpack.c.l.b16 %v380
        %v1564 = vunpack.c.l.b16 %v381
        %v1565 = vunpack.c.l.b16 %v382
        %v1566 = vunpack.c.l.b16 %v383
        %v1567 = vunpack.c.l.b16 %v384
        %v1568 = vunpack.c.l.b16 %v385
        %v1569 = vunpack.c.l.b16 %v386
        %v1570 = vunpack.c.l.b16 %v387
        %v1571 = vunpack.c.l.b16 %v388
        %v1572 = vunpack.c.l.b16 %v389
        %v1573 = vunpack.c.l.b16 %v390
        %v1574 = vunpack.c.l.b16 %v391
        %v1575 = vunpack.c.l.b16 %v392
        %v1576 = vunpack.c.l.b16 %v393
        %v1577 = vunpack.c.l.b16 %v394
        %v1578 = vunpack.c.l.b16 %v395
        %v1579 = vunpack.c.l.b16 %v396
        %v1580 = vunpack.c.l.b16 %v397
        %v1581 = vunpack.c.l.b16 %v398
        %v1582 = vunpack.c.l.b16 %v399
        %v1583 = vunpack.c.l.b16 %v400
        %v1584 = vunpack.c.l.b16 %v401
        %v1585 = vunpack.c.l.b16 %v402
        %v1586 = vunpack.c.l.b16 %v403
        %v1587 = vunpack.c.l.b16 %v404
        %v1588 = vunpack.c.l.b16 %v405
        %v1589 = vunpack.c.l.b16 %v406
        %v1590 = vunpack.c.l.b16 %v407
        %v1591 = vunpack.c.l.b16 %v408
        %v1592 = vunpack.c.l.b16 %v409
        %v1593 = vunpack.c.l.b16 %v410
        %v1594 = vunpack.c.l.b16 %v411
        %v1595 = vunpack.c.l.b16 %v412
        %v1596 = vunpack.c.l.b16 %v413
        %v1597 = vunpack.c.l.b16 %v414
        %v1598 = vunpack.c.l.b16 %v415
        %v1599 = vunpack.c.l.b16 %v416
        %v1600 = vunpack.c.l.b16 %v417
        %v1601 = vunpack.c.l.b16 %v418
        %v1602 = vunpack.c.l.b16 %v419
        %v1603 = vunpack.c.l.b16 %v420
        %v1604 = vunpack.c.l.b16 %v421
        %v1605 = vunpack.c.l.b16 %v422
        %v1606 = vunpack.c.l.b16 %v423
        %v1607 = vunpack.c.l.b16 %v424
        %v1608 = vunpack.c.l.b16 %v425
        %v1609 = vunpack.c.l.b16 %v426
        %v1610 = vunpack.c.l.b16 %v427
        %v1611 = vunpack.c.l.b16 %v428
        %v1612 = vunpack.c.l.b16 %v429
        %v1613 = vunpack.c.l.b16 %v430
        %v1614 = vunpack.c.l.b16 %v431
        %v1615 = vunpack.c.l.b16 %v432
        %v1616 = vunpack.c.l.b16 %v433
        %v1617 = vunpack.c.l.b16 %v434
        %v1618 = vpack.c.b16 %v1475, %v1474
        %v1619 = vpack.c.b16 %v1477, %v1476
        %v1620 = vpack.c.b16 %v1479, %v1478
        %v1621 = vpack.c.b16 %v1481, %v1480
        %v1622 = vpack.c.b16 %v1483, %v1482
        %v1623 = vpack.c.b16 %v1485, %v1484
        %v1624 = vpack.c.b16 %v1487, %v1486
        %v1625 = vpack.c.b16 %v1489, %v1488
        %v1626 = vpack.c.b16 %v1491, %v1490
        %v1627 = vpack.c.b16 %v1493, %v1492
        %v1628 = vpack.c.b16 %v1495, %v1494
        %v1629 = vpack.c.b16 %v1497, %v1496
        %v1630 = vpack.c.b16 %v1499, %v1498
        %v1631 = vpack.c.b16 %v1501, %v1500
        %v1632 = vpack.c.b16 %v1503, %v1502
        %v1633 = vpack.c.b16 %v1505, %v1504
        %v1634 = vpack.c.b16 %v1507, %v1506
        %v1635 = vpack.c.b16 %v1509, %v1508
        %v1636 = vpack.c.b16 %v1511, %v1510
        %v1637 = vpack.c.b16 %v1513, %v1512
        %v1638 = vpack.c.b16 %v1515, %v1514
        %v1639 = vpack.c.b16 %v1517, %v1516
        %v1640 = vpack.c.b16 %v1519, %v1518
        %v1641 = vpack.c.b16 %v1521, %v1520
        %v1642 = vpack.c.b16 %v1523, %v1522
        %v1643 = vpack.c.b16 %v1525, %v1524
        %v1644 = vpack.c.b16 %v1527, %v1526
        %v1645 = vpack.c.b16 %v1529, %v1528
        %v1646 = vpack.c.b16 %v1531, %v1530
        %v1647 = vpack.c.b16 %v1533, %v1532
        %v1648 = vpack.c.b16 %v1535, %v1534
        %v1649 = vpack.c.b16 %v1537, %v1536
        %v1650 = vpack.c.b16 %v1539, %v1538
        %v1651 = vpack.c.b16 %v1541, %v1540
        %v1652 = vpack.c.b16 %v1543, %v1542
        %v1653 = vpack.c.b16 %v1545, %v1544
        %v1654 = vpack.c.b16 %v1547, %v1546
        %v1655 = vpack.c.b16 %v1549, %v1548
        %v1656 = vpack.c.b16 %v1551, %v1550
        %v1657 = vpack.c.b16 %v1553, %v1552
        %v1658 = vpack.c.b16 %v1555, %v1554
        %v1659 = vpack.c.b16 %v1557, %v1556
        %v1660 = vpack.c.b16 %v1559, %v1558
        %v1661 = vpack.c.b16 %v1561, %v1560
        %v1662 = vpack.c.b16 %v1563, %v1562
        %v1663 = vpack.c.b16 %v1565, %v1564
        %v1664 = vpack.c.b16 %v1567, %v1566
        %v1665 = vpack.c.b16 %v1569, %v1568
        %v1666 = vpack.c.b16 %v1571, %v1570
        %v1667 = vpack.c.b16 %v1573, %v1572
        %v1668 = vpack.c.b16 %v1575, %v1574
        %v1669 = vpack.c.b16 %v1577, %v1576
        %v1670 = vpack.c.b16 %v1579, %v1578
        %v1671 = vpack.c.b16 %v1581, %v1580
        %v1672 = vpack.c.b16 %v1583, %v1582
        %v1673 = vpack.c.b16 %v1585, %v1584
        %v1674 = vpack.c.b16 %v1587, %v1586
        %v1675 = vpack.c.b16 %v1589, %v1588
        %v1676 = vpack.c.b16 %v1591, %v1590
        %v1677 = vpack.c.b16 %v1593, %v1592
        %v1678 = vpack.c.b16 %v1595, %v1594
        %v1679 = vpack.c.b16 %v1597, %v1596
        %v1680 = vpack.c.b16 %v1599, %v1598
        %v1681 = vpack.c.b16 %v1601, %v1600
        %v1682 = vpack.c.b16 %v1603, %v1602
        %v1683 = vpack.c.b16 %v1605, %v1604
        %v1684 = vpack.c.b16 %v1607, %v1606
        %v1685 = vpack.c.b16 %v1609, %v1608
        %v1686 = vpack.c.b16 %v1611, %v1610
        %v1687 = vpack.c.b16 %v1613, %v1612
        %v1688 = vpack.c.b16 %v1615, %v1614
        %v1689 = vpack.c.b16 %v1617, %v1616
        %1762 = vmatprep.subr.bf16.mxu0 0
        %1763 = vmatpush1.bf16.msra.mxu0 %v1625
        %1764 = vmatprep.subr.bf16.mxu0 0
        %1765 = vmatpush1.bf16.msra.mxu0 %v1624
        %1766 = vmatprep.subr.bf16.mxu0 0
        %1767 = vmatpush1.bf16.msra.mxu0 %v1623
        %1768 = vmatprep.subr.bf16.mxu0 0
        %1769 = vmatpush1.bf16.msra.mxu0 %v1622
        %1770 = vmatprep.subr.bf16.mxu0 0
        %1771 = vmatpush1.bf16.msra.mxu0 %v1621
        %1772 = vmatprep.subr.bf16.mxu0 0
        %1773 = vmatpush1.bf16.msra.mxu0 %v1620
        %1774 = vmatprep.subr.bf16.mxu0 0
        %1775 = vmatpush1.bf16.msra.mxu0 %v1619
        %1776 = vmatprep.subr.bf16.mxu0 0
        %1777 = vmatpush1.bf16.msra.mxu0 %v1618
        %1778 = vmatprep.subr.bf16.mxu0 0
        %1779 = vmatpush2.bf16.msra.mxu0 %v1633
        %1780 = vmatprep.subr.bf16.mxu0 0
        %1781 = vmatpush2.bf16.msra.mxu0 %v1632
        %1782 = vmatprep.subr.bf16.mxu0 0
        %1783 = vmatpush2.bf16.msra.mxu0 %v1631
        %1784 = vmatprep.subr.bf16.mxu0 0
        %1785 = vmatpush2.bf16.msra.mxu0 %v1630
        %1786 = vmatprep.subr.bf16.mxu0 0
        %1787 = vmatpush2.bf16.msra.mxu0 %v1629
        %1788 = vmatprep.subr.bf16.mxu0 0
        %1789 = vmatpush2.bf16.msra.mxu0 %v1628
        %1790 = vmatprep.subr.bf16.mxu0 0
        %1791 = vmatpush2.bf16.msra.mxu0 %v1627
        %1792 = vmatprep.subr.bf16.mxu0 0
        %1793 = vmatpush2.bf16.msra.mxu0 %v1626
        %1794 = vmatprep.mubr.bf16.mxu0 %v1107
        %1795 = vmatmul.mubr.bf16.gmra.mxu0 %v1047
        %v1796 = vpop.f32.mrf.mxu0
        %v1797 = vadd.f32 %v1328, %v1796
        %v1798 = vpop.f32.mrf.mxu0
        %v1799 = vpop.f32.mrf.mxu0
        %v1800 = vadd.f32 %v1328, %v1799
        %v1801 = vpop.f32.mrf.mxu0
        %1802 = vmatprep.mubr.bf16.mxu0 %v1108
        %1803 = vmatmul.mubr.bf16.gmra.mxu0 %v1048
        %v1804 = vpop.f32.mrf.mxu0
        %v1805 = vadd.f32 %v1328, %v1804
        %v1806 = vpop.f32.mrf.mxu0
        %v1807 = vpop.f32.mrf.mxu0
        %v1808 = vadd.f32 %v1328, %v1807
        %v1809 = vpop.f32.mrf.mxu0
        %1810 = vmatprep.mubr.bf16.mxu0 %v1109
        %1811 = vmatmul.mubr.bf16.gmra.mxu0 %v1049
        %v1812 = vpop.f32.mrf.mxu0
        %v1813 = vadd.f32 %v1328, %v1812
        %v1814 = vpop.f32.mrf.mxu0
        %v1815 = vpop.f32.mrf.mxu0
        %v1816 = vadd.f32 %v1328, %v1815
        %v1817 = vpop.f32.mrf.mxu0
        %1818 = vmatprep.mubr.bf16.mxu0 %v1110
        %1819 = vmatmul.mubr.bf16.gmra.mxu0 %v1050
        %v1820 = vpop.f32.mrf.mxu0
        %v1821 = vadd.f32 %v1328, %v1820
        %v1822 = vpop.f32.mrf.mxu0
        %v1823 = vpop.f32.mrf.mxu0
        %v1824 = vadd.f32 %v1328, %v1823
        %v1825 = vpop.f32.mrf.mxu0
        %1826 = vmatprep.mubr.bf16.mxu0 %v1111
        %1827 = vmatmul.mubr.bf16.gmra.mxu0 %v1051
        %v1828 = vpop.f32.mrf.mxu0
        %v1829 = vadd.f32 %v1328, %v1828
        %v1830 = vpop.f32.mrf.mxu0
        %v1831 = vpop.f32.mrf.mxu0
        %v1832 = vadd.f32 %v1328, %v1831
        %v1833 = vpop.f32.mrf.mxu0
        %1834 = vmatprep.mubr.bf16.mxu0 %v1112
        %1835 = vmatmul.mubr.bf16.gmra.mxu0 %v1052
        %v1836 = vpop.f32.mrf.mxu0
        %v1837 = vadd.f32 %v1328, %v1836
        %v1838 = vpop.f32.mrf.mxu0
        %v1839 = vpop.f32.mrf.mxu0
        %v1840 = vadd.f32 %v1328, %v1839
        %v1841 = vpop.f32.mrf.mxu0
        %1842 = vmatprep.mubr.bf16.mxu0 %v1113
        %1843 = vmatmul.mubr.bf16.gmra.mxu0 %v1053
        %v1844 = vpop.f32.mrf.mxu0
        %v1845 = vadd.f32 %v1328, %v1844
        %v1846 = vpop.f32.mrf.mxu0
        %v1847 = vpop.f32.mrf.mxu0
        %v1848 = vadd.f32 %v1328, %v1847
        %v1849 = vpop.f32.mrf.mxu0
        %1850 = vmatprep.mubr.bf16.mxu0 %v1114
        %1851 = vmatmul.mubr.bf16.gmra.mxu0 %v1054
        %v1852 = vpop.f32.mrf.mxu0
        %v1853 = vadd.f32 %v1328, %v1852
        %v1854 = vpop.f32.mrf.mxu0
        %v1855 = vpop.f32.mrf.mxu0
        %v1856 = vadd.f32 %v1328, %v1855
        %v1857 = vpop.f32.mrf.mxu0
        %1858 = vmatprep.mubr.bf16.mxu0 %v1115
        %1859 = vmatmul.mubr.bf16.gmra.mxu0 %v1055
        %v1860 = vpop.f32.mrf.mxu0
        %v1861 = vadd.f32 %v1328, %v1860
        %v1862 = vpop.f32.mrf.mxu0
        %v1863 = vpop.f32.mrf.mxu0
        %v1864 = vadd.f32 %v1328, %v1863
        %v1865 = vpop.f32.mrf.mxu0
        %1866 = vmatprep.mubr.bf16.mxu0 %v1116
        %1867 = vmatmul.mubr.bf16.gmra.mxu0 %v1056
        %v1868 = vpop.f32.mrf.mxu0
        %v1869 = vadd.f32 %v1328, %v1868
        %v1870 = vpop.f32.mrf.mxu0
        %v1871 = vpop.f32.mrf.mxu0
        %v1872 = vadd.f32 %v1328, %v1871
        %v1873 = vpop.f32.mrf.mxu0
        %1874 = vmatprep.mubr.bf16.mxu0 %v1117
        %1875 = vmatmul.mubr.bf16.gmra.mxu0 %v1057
        %v1876 = vpop.f32.mrf.mxu0
        %v1877 = vadd.f32 %v1328, %v1876
        %v1878 = vpop.f32.mrf.mxu0
        %v1879 = vpop.f32.mrf.mxu0
        %v1880 = vadd.f32 %v1328, %v1879
        %v1881 = vpop.f32.mrf.mxu0
        %1882 = vmatprep.mubr.bf16.mxu0 %v1118
        %1883 = vmatmul.mubr.bf16.gmra.mxu0 %v1058
        %v1884 = vpop.f32.mrf.mxu0
        %v1885 = vadd.f32 %v1328, %v1884
        %v1886 = vpop.f32.mrf.mxu0
        %v1887 = vpop.f32.mrf.mxu0
        %v1888 = vadd.f32 %v1328, %v1887
        %v1889 = vpop.f32.mrf.mxu0
        %1890 = vmatprep.mubr.bf16.mxu0 %v1119
        %1891 = vmatmul.mubr.bf16.gmra.mxu0 %v1059
        %v1892 = vpop.f32.mrf.mxu0
        %v1893 = vadd.f32 %v1328, %v1892
        %v1894 = vpop.f32.mrf.mxu0
        %v1895 = vpop.f32.mrf.mxu0
        %v1896 = vadd.f32 %v1328, %v1895
        %v1897 = vpop.f32.mrf.mxu0
        %1898 = vmatprep.mubr.bf16.mxu0 %v1120
        %1899 = vmatmul.mubr.bf16.gmra.mxu0 %v1060
        %v1900 = vpop.f32.mrf.mxu0
        %v1901 = vadd.f32 %v1328, %v1900
        %v1902 = vpop.f32.mrf.mxu0
        %v1903 = vpop.f32.mrf.mxu0
        %v1904 = vadd.f32 %v1328, %v1903
        %v1905 = vpop.f32.mrf.mxu0
        %1906 = vmatprep.mubr.bf16.mxu0 %v1121
        %1907 = vmatmul.mubr.bf16.gmra.mxu0 %v1061
        %v1908 = vpop.f32.mrf.mxu0
        %v1909 = vadd.f32 %v1328, %v1908
        %v1910 = vpop.f32.mrf.mxu0
        %v1911 = vpop.f32.mrf.mxu0
        %v1912 = vadd.f32 %v1328, %v1911
        %v1913 = vpop.f32.mrf.mxu0
        %1914 = vdwg.mxu0
        %1915 = vmatprep.subr.bf16.mxu0 0
        %1916 = vmatpush1.bf16.msra.mxu0 %v1641
        %1917 = vmatprep.subr.bf16.mxu0 0
        %1918 = vmatpush1.bf16.msra.mxu0 %v1640
        %1919 = vmatprep.subr.bf16.mxu0 0
        %1920 = vmatpush1.bf16.msra.mxu0 %v1639
        %1921 = vmatprep.subr.bf16.mxu0 0
        %1922 = vmatpush1.bf16.msra.mxu0 %v1638
        %1923 = vmatprep.subr.bf16.mxu0 0
        %1924 = vmatpush1.bf16.msra.mxu0 %v1637
        %1925 = vmatprep.subr.bf16.mxu0 0
        %1926 = vmatpush1.bf16.msra.mxu0 %v1636
        %1927 = vmatprep.subr.bf16.mxu0 0
        %1928 = vmatpush1.bf16.msra.mxu0 %v1635
        %1929 = vmatprep.subr.bf16.mxu0 0
        %1930 = vmatpush1.bf16.msra.mxu0 %v1634
        %1931 = vmatprep.subr.bf16.mxu0 0
        %1932 = vmatpush2.bf16.msra.mxu0 %v1649
        %1933 = vmatprep.subr.bf16.mxu0 0
        %1934 = vmatpush2.bf16.msra.mxu0 %v1648
        %1935 = vmatprep.subr.bf16.mxu0 0
        %1936 = vmatpush2.bf16.msra.mxu0 %v1647
        %1937 = vmatprep.subr.bf16.mxu0 0
        %1938 = vmatpush2.bf16.msra.mxu0 %v1646
        %1939 = vmatprep.subr.bf16.mxu0 0
        %1940 = vmatpush2.bf16.msra.mxu0 %v1645
        %1941 = vmatprep.subr.bf16.mxu0 0
        %1942 = vmatpush2.bf16.msra.mxu0 %v1644
        %1943 = vmatprep.subr.bf16.mxu0 0
        %1944 = vmatpush2.bf16.msra.mxu0 %v1643
        %1945 = vmatprep.subr.bf16.mxu0 0
        %1946 = vmatpush2.bf16.msra.mxu0 %v1642
        %1947 = vmatprep.mubr.bf16.mxu0 %v1200
        %1948 = vmatmul.mubr.bf16.gmra.mxu0 %v1167
        %v1949 = vpop.f32.mrf.mxu0
        %v1950 = vadd.f32 %v1797, %v1949
        %v1951 = vpop.f32.mrf.mxu0
        %v1952 = vpop.f32.mrf.mxu0
        %v1953 = vadd.f32 %v1800, %v1952
        %v1954 = vpop.f32.mrf.mxu0
        %1955 = vmatprep.mubr.bf16.mxu0 %v1201
        %1956 = vmatmul.mubr.bf16.gmra.mxu0 %v1168
        %v1957 = vpop.f32.mrf.mxu0
        %v1958 = vadd.f32 %v1805, %v1957
        %v1959 = vpop.f32.mrf.mxu0
        %v1960 = vpop.f32.mrf.mxu0
        %v1961 = vadd.f32 %v1808, %v1960
        %v1962 = vpop.f32.mrf.mxu0
        %1963 = vmatprep.mubr.bf16.mxu0 %v1202
        %1964 = vmatmul.mubr.bf16.gmra.mxu0 %v1169
        %v1965 = vpop.f32.mrf.mxu0
        %v1966 = vadd.f32 %v1813, %v1965
        %v1967 = vpop.f32.mrf.mxu0
        %v1968 = vpop.f32.mrf.mxu0
        %v1969 = vadd.f32 %v1816, %v1968
        %v1970 = vpop.f32.mrf.mxu0
        %1971 = vmatprep.mubr.bf16.mxu0 %v1203
        %1972 = vmatmul.mubr.bf16.gmra.mxu0 %v1170
        %v1973 = vpop.f32.mrf.mxu0
        %v1974 = vadd.f32 %v1821, %v1973
        %v1975 = vpop.f32.mrf.mxu0
        %v1976 = vpop.f32.mrf.mxu0
        %v1977 = vadd.f32 %v1824, %v1976
        %v1978 = vpop.f32.mrf.mxu0
        %1979 = vmatprep.mubr.bf16.mxu0 %v1204
        %1980 = vmatmul.mubr.bf16.gmra.mxu0 %v1171
        %v1981 = vpop.f32.mrf.mxu0
        %v1982 = vadd.f32 %v1829, %v1981
        %v1983 = vpop.f32.mrf.mxu0
        %v1984 = vpop.f32.mrf.mxu0
        %v1985 = vadd.f32 %v1832, %v1984
        %v1986 = vpop.f32.mrf.mxu0
        %1987 = vmatprep.mubr.bf16.mxu0 %v1205
        %1988 = vmatmul.mubr.bf16.gmra.mxu0 %v1172
        %v1989 = vpop.f32.mrf.mxu0
        %v1990 = vadd.f32 %v1837, %v1989
        %v1991 = vpop.f32.mrf.mxu0
        %v1992 = vpop.f32.mrf.mxu0
        %v1993 = vadd.f32 %v1840, %v1992
        %v1994 = vpop.f32.mrf.mxu0
        %1995 = vmatprep.mubr.bf16.mxu0 %v1206
        %1996 = vmatmul.mubr.bf16.gmra.mxu0 %v1173
        %v1997 = vpop.f32.mrf.mxu0
        %v1998 = vadd.f32 %v1845, %v1997
        %v1999 = vpop.f32.mrf.mxu0
        %v2000 = vpop.f32.mrf.mxu0
        %v2001 = vadd.f32 %v1848, %v2000
        %v2002 = vpop.f32.mrf.mxu0
        %2003 = vmatprep.mubr.bf16.mxu0 %v1207
        %2004 = vmatmul.mubr.bf16.gmra.mxu0 %v1174
        %v2005 = vpop.f32.mrf.mxu0
        %v2006 = vadd.f32 %v1853, %v2005
        %v2007 = vpop.f32.mrf.mxu0
        %v2008 = vpop.f32.mrf.mxu0
        %v2009 = vadd.f32 %v1856, %v2008
        %v2010 = vpop.f32.mrf.mxu0
        %2011 = vmatprep.mubr.bf16.mxu0 %v1208
        %2012 = vmatmul.mubr.bf16.gmra.mxu0 %v1175
        %v2013 = vpop.f32.mrf.mxu0
        %v2014 = vadd.f32 %v1861, %v2013
        %v2015 = vpop.f32.mrf.mxu0
        %v2016 = vpop.f32.mrf.mxu0
        %v2017 = vadd.f32 %v1864, %v2016
        %v2018 = vpop.f32.mrf.mxu0
        %2019 = vmatprep.mubr.bf16.mxu0 %v1209
        %2020 = vmatmul.mubr.bf16.gmra.mxu0 %v1176
        %v2021 = vpop.f32.mrf.mxu0
        %v2022 = vadd.f32 %v1869, %v2021
        %v2023 = vpop.f32.mrf.mxu0
        %v2024 = vpop.f32.mrf.mxu0
        %v2025 = vadd.f32 %v1872, %v2024
        %v2026 = vpop.f32.mrf.mxu0
        %2027 = vmatprep.mubr.bf16.mxu0 %v1210
        %2028 = vmatmul.mubr.bf16.gmra.mxu0 %v1177
        %v2029 = vpop.f32.mrf.mxu0
        %v2030 = vadd.f32 %v1877, %v2029
        %v2031 = vpop.f32.mrf.mxu0
        %v2032 = vpop.f32.mrf.mxu0
        %v2033 = vadd.f32 %v1880, %v2032
        %v2034 = vpop.f32.mrf.mxu0
        %2035 = vmatprep.mubr.bf16.mxu0 %v1211
        %2036 = vmatmul.mubr.bf16.gmra.mxu0 %v1178
        %v2037 = vpop.f32.mrf.mxu0
        %v2038 = vadd.f32 %v1885, %v2037
        %v2039 = vpop.f32.mrf.mxu0
        %v2040 = vpop.f32.mrf.mxu0
        %v2041 = vadd.f32 %v1888, %v2040
        %v2042 = vpop.f32.mrf.mxu0
        %2043 = vmatprep.mubr.bf16.mxu0 %v1212
        %2044 = vmatmul.mubr.bf16.gmra.mxu0 %v1179
        %v2045 = vpop.f32.mrf.mxu0
        %v2046 = vadd.f32 %v1893, %v2045
        %v2047 = vpop.f32.mrf.mxu0
        %v2048 = vpop.f32.mrf.mxu0
        %v2049 = vadd.f32 %v1896, %v2048
        %v2050 = vpop.f32.mrf.mxu0
        %2051 = vmatprep.mubr.bf16.mxu0 %v1213
        %2052 = vmatmul.mubr.bf16.gmra.mxu0 %v1180
        %v2053 = vpop.f32.mrf.mxu0
        %v2054 = vadd.f32 %v1901, %v2053
        %v2055 = vpop.f32.mrf.mxu0
        %v2056 = vpop.f32.mrf.mxu0
        %v2057 = vadd.f32 %v1904, %v2056
        %v2058 = vpop.f32.mrf.mxu0
        %2059 = vmatprep.mubr.bf16.mxu0 %v1214
        %2060 = vmatmul.mubr.bf16.gmra.mxu0 %v1181
        %v2061 = vpop.f32.mrf.mxu0
        %v2062 = vadd.f32 %v1909, %v2061
        %v2063 = vpop.f32.mrf.mxu0
        %v2064 = vpop.f32.mrf.mxu0
        %v2065 = vadd.f32 %v1912, %v2064
        %v2066 = vpop.f32.mrf.mxu0
        %2067 = vdwg.mxu0
        %2068 = vmatprep.subr.bf16.mxu0 0
        %2069 = vmatpush1.bf16.msra.mxu0 %v1657
        %2070 = vmatprep.subr.bf16.mxu0 0
        %2071 = vmatpush1.bf16.msra.mxu0 %v1656
        %2072 = vmatprep.subr.bf16.mxu0 0
        %2073 = vmatpush1.bf16.msra.mxu0 %v1655
        %2074 = vmatprep.subr.bf16.mxu0 0
        %2075 = vmatpush1.bf16.msra.mxu0 %v1654
        %2076 = vmatprep.subr.bf16.mxu0 0
        %2077 = vmatpush1.bf16.msra.mxu0 %v1653
        %2078 = vmatprep.subr.bf16.mxu0 0
        %2079 = vmatpush1.bf16.msra.mxu0 %v1652
        %2080 = vmatprep.subr.bf16.mxu0 0
        %2081 = vmatpush1.bf16.msra.mxu0 %v1651
        %2082 = vmatprep.subr.bf16.mxu0 0
        %2083 = vmatpush1.bf16.msra.mxu0 %v1650
        %2084 = vmatprep.subr.bf16.mxu0 0
        %2085 = vmatpush2.bf16.msra.mxu0 %v1665
        %2086 = vmatprep.subr.bf16.mxu0 0
        %2087 = vmatpush2.bf16.msra.mxu0 %v1664
        %2088 = vmatprep.subr.bf16.mxu0 0
        %2089 = vmatpush2.bf16.msra.mxu0 %v1663
        %2090 = vmatprep.subr.bf16.mxu0 0
        %2091 = vmatpush2.bf16.msra.mxu0 %v1662
        %2092 = vmatprep.subr.bf16.mxu0 0
        %2093 = vmatpush2.bf16.msra.mxu0 %v1661
        %2094 = vmatprep.subr.bf16.mxu0 0
        %2095 = vmatpush2.bf16.msra.mxu0 %v1660
        %2096 = vmatprep.subr.bf16.mxu0 0
        %2097 = vmatpush2.bf16.msra.mxu0 %v1659
        %2098 = vmatprep.subr.bf16.mxu0 0
        %2099 = vmatpush2.bf16.msra.mxu0 %v1658
        %2100 = vmatprep.mubr.bf16.mxu0 %v1266
        %2101 = vmatmul.mubr.bf16.gmra.mxu0 %v1233
        %v2102 = vpop.f32.mrf.mxu0
        %v2103 = vadd.f32 %v1950, %v2102
        %v2104 = vpop.f32.mrf.mxu0
        %v2105 = vpop.f32.mrf.mxu0
        %v2106 = vadd.f32 %v1953, %v2105
        %v2107 = vpop.f32.mrf.mxu0
        %2108 = vmatprep.mubr.bf16.mxu0 %v1267
        %2109 = vmatmul.mubr.bf16.gmra.mxu0 %v1234
        %v2110 = vpop.f32.mrf.mxu0
        %v2111 = vadd.f32 %v1958, %v2110
        %v2112 = vpop.f32.mrf.mxu0
        %v2113 = vpop.f32.mrf.mxu0
        %v2114 = vadd.f32 %v1961, %v2113
        %v2115 = vpop.f32.mrf.mxu0
        %2116 = vmatprep.mubr.bf16.mxu0 %v1268
        %2117 = vmatmul.mubr.bf16.gmra.mxu0 %v1235
        %v2118 = vpop.f32.mrf.mxu0
        %v2119 = vadd.f32 %v1966, %v2118
        %v2120 = vpop.f32.mrf.mxu0
        %v2121 = vpop.f32.mrf.mxu0
        %v2122 = vadd.f32 %v1969, %v2121
        %v2123 = vpop.f32.mrf.mxu0
        %2124 = vmatprep.mubr.bf16.mxu0 %v1269
        %2125 = vmatmul.mubr.bf16.gmra.mxu0 %v1236
        %v2126 = vpop.f32.mrf.mxu0
        %v2127 = vadd.f32 %v1974, %v2126
        %v2128 = vpop.f32.mrf.mxu0
        %v2129 = vpop.f32.mrf.mxu0
        %v2130 = vadd.f32 %v1977, %v2129
        %v2131 = vpop.f32.mrf.mxu0
        %2132 = vmatprep.mubr.bf16.mxu0 %v1270
        %2133 = vmatmul.mubr.bf16.gmra.mxu0 %v1237
        %v2134 = vpop.f32.mrf.mxu0
        %v2135 = vadd.f32 %v1982, %v2134
        %v2136 = vpop.f32.mrf.mxu0
        %v2137 = vpop.f32.mrf.mxu0
        %v2138 = vadd.f32 %v1985, %v2137
        %v2139 = vpop.f32.mrf.mxu0
        %2140 = vmatprep.mubr.bf16.mxu0 %v1271
        %2141 = vmatmul.mubr.bf16.gmra.mxu0 %v1238
        %v2142 = vpop.f32.mrf.mxu0
        %v2143 = vadd.f32 %v1990, %v2142
        %v2144 = vpop.f32.mrf.mxu0
        %v2145 = vpop.f32.mrf.mxu0
        %v2146 = vadd.f32 %v1993, %v2145
        %v2147 = vpop.f32.mrf.mxu0
        %2148 = vmatprep.mubr.bf16.mxu0 %v1272
        %2149 = vmatmul.mubr.bf16.gmra.mxu0 %v1239
        %v2150 = vpop.f32.mrf.mxu0
        %v2151 = vadd.f32 %v1998, %v2150
        %v2152 = vpop.f32.mrf.mxu0
        %v2153 = vpop.f32.mrf.mxu0
        %v2154 = vadd.f32 %v2001, %v2153
        %v2155 = vpop.f32.mrf.mxu0
        %2156 = vmatprep.mubr.bf16.mxu0 %v1273
        %2157 = vmatmul.mubr.bf16.gmra.mxu0 %v1240
        %v2158 = vpop.f32.mrf.mxu0
        %v2159 = vadd.f32 %v2006, %v2158
        %v2160 = vpop.f32.mrf.mxu0
        %v2161 = vpop.f32.mrf.mxu0
        %v2162 = vadd.f32 %v2009, %v2161
        %v2163 = vpop.f32.mrf.mxu0
        %2164 = vmatprep.mubr.bf16.mxu0 %v1274
        %2165 = vmatmul.mubr.bf16.gmra.mxu0 %v1241
        %v2166 = vpop.f32.mrf.mxu0
        %v2167 = vadd.f32 %v2014, %v2166
        %v2168 = vpop.f32.mrf.mxu0
        %v2169 = vpop.f32.mrf.mxu0
        %v2170 = vadd.f32 %v2017, %v2169
        %v2171 = vpop.f32.mrf.mxu0
        %2172 = vmatprep.mubr.bf16.mxu0 %v1275
        %2173 = vmatmul.mubr.bf16.gmra.mxu0 %v1242
        %v2174 = vpop.f32.mrf.mxu0
        %v2175 = vadd.f32 %v2022, %v2174
        %v2176 = vpop.f32.mrf.mxu0
        %v2177 = vpop.f32.mrf.mxu0
        %v2178 = vadd.f32 %v2025, %v2177
        %v2179 = vpop.f32.mrf.mxu0
        %2180 = vmatprep.mubr.bf16.mxu0 %v1276
        %2181 = vmatmul.mubr.bf16.gmra.mxu0 %v1243
        %v2182 = vpop.f32.mrf.mxu0
        %v2183 = vadd.f32 %v2030, %v2182
        %v2184 = vpop.f32.mrf.mxu0
        %v2185 = vpop.f32.mrf.mxu0
        %v2186 = vadd.f32 %v2033, %v2185
        %v2187 = vpop.f32.mrf.mxu0
        %2188 = vmatprep.mubr.bf16.mxu0 %v1277
        %2189 = vmatmul.mubr.bf16.gmra.mxu0 %v1244
        %v2190 = vpop.f32.mrf.mxu0
        %v2191 = vadd.f32 %v2038, %v2190
        %v2192 = vpop.f32.mrf.mxu0
        %v2193 = vpop.f32.mrf.mxu0
        %v2194 = vadd.f32 %v2041, %v2193
        %v2195 = vpop.f32.mrf.mxu0
        %2196 = vmatprep.mubr.bf16.mxu0 %v1278
        %2197 = vmatmul.mubr.bf16.gmra.mxu0 %v1245
        %v2198 = vpop.f32.mrf.mxu0
        %v2199 = vadd.f32 %v2046, %v2198
        %v2200 = vpop.f32.mrf.mxu0
        %v2201 = vpop.f32.mrf.mxu0
        %v2202 = vadd.f32 %v2049, %v2201
        %v2203 = vpop.f32.mrf.mxu0
        %2204 = vmatprep.mubr.bf16.mxu0 %v1279
        %2205 = vmatmul.mubr.bf16.gmra.mxu0 %v1246
        %v2206 = vpop.f32.mrf.mxu0
        %v2207 = vadd.f32 %v2054, %v2206
        %v2208 = vpop.f32.mrf.mxu0
        %v2209 = vpop.f32.mrf.mxu0
        %v2210 = vadd.f32 %v2057, %v2209
        %v2211 = vpop.f32.mrf.mxu0
        %2212 = vmatprep.mubr.bf16.mxu0 %v1280
        %2213 = vmatmul.mubr.bf16.gmra.mxu0 %v1247
        %v2214 = vpop.f32.mrf.mxu0
        %v2215 = vadd.f32 %v2062, %v2214
        %v2216 = vpop.f32.mrf.mxu0
        %v2217 = vpop.f32.mrf.mxu0
        %v2218 = vadd.f32 %v2065, %v2217
        %v2219 = vpop.f32.mrf.mxu0
        %2220 = vdwg.mxu0
        %2221 = vmatprep.subr.bf16.mxu0 0
        %2222 = vmatpush1.bf16.msra.mxu0 %v1673
        %2223 = vmatprep.subr.bf16.mxu0 0
        %2224 = vmatpush1.bf16.msra.mxu0 %v1672
        %2225 = vmatprep.subr.bf16.mxu0 0
        %2226 = vmatpush1.bf16.msra.mxu0 %v1671
        %2227 = vmatprep.subr.bf16.mxu0 0
        %2228 = vmatpush1.bf16.msra.mxu0 %v1670
        %2229 = vmatprep.subr.bf16.mxu0 0
        %2230 = vmatpush1.bf16.msra.mxu0 %v1669
        %2231 = vmatprep.subr.bf16.mxu0 0
        %2232 = vmatpush1.bf16.msra.mxu0 %v1668
        %2233 = vmatprep.subr.bf16.mxu0 0
        %2234 = vmatpush1.bf16.msra.mxu0 %v1667
        %2235 = vmatprep.subr.bf16.mxu0 0
        %2236 = vmatpush1.bf16.msra.mxu0 %v1666
        %2237 = vmatprep.subr.bf16.mxu0 0
        %2238 = vmatpush2.bf16.msra.mxu0 %v1681
        %2239 = vmatprep.subr.bf16.mxu0 0
        %2240 = vmatpush2.bf16.msra.mxu0 %v1680
        %2241 = vmatprep.subr.bf16.mxu0 0
        %2242 = vmatpush2.bf16.msra.mxu0 %v1679
        %2243 = vmatprep.subr.bf16.mxu0 0
        %2244 = vmatpush2.bf16.msra.mxu0 %v1678
        %2245 = vmatprep.subr.bf16.mxu0 0
        %2246 = vmatpush2.bf16.msra.mxu0 %v1677
        %2247 = vmatprep.subr.bf16.mxu0 0
        %2248 = vmatpush2.bf16.msra.mxu0 %v1676
        %2249 = vmatprep.subr.bf16.mxu0 0
        %2250 = vmatpush2.bf16.msra.mxu0 %v1675
        %2251 = vmatprep.subr.bf16.mxu0 0
        %2252 = vmatpush2.bf16.msra.mxu0 %v1674
        %2253 = vmatprep.mubr.bf16.mxu0 %v1110
        %2254 = vmatmul.mubr.bf16.gmra.mxu0 %v1050
        %v2255 = vpop.f32.mrf.mxu0
        %v2256 = vadd.f32 %v2103, %v2255
        %v2257 = vpop.f32.mrf.mxu0
        %v2258 = vpop.f32.mrf.mxu0
        %v2259 = vadd.f32 %v2106, %v2258
        %v2260 = vpop.f32.mrf.mxu0
        %2261 = vmatprep.mubr.bf16.mxu0 %v1111
        %2262 = vmatmul.mubr.bf16.gmra.mxu0 %v1051
        %v2263 = vpop.f32.mrf.mxu0
        %v2264 = vadd.f32 %v2111, %v2263
        %v2265 = vpop.f32.mrf.mxu0
        %v2266 = vpop.f32.mrf.mxu0
        %v2267 = vadd.f32 %v2114, %v2266
        %v2268 = vpop.f32.mrf.mxu0
        %2269 = vmatprep.mubr.bf16.mxu0 %v1112
        %2270 = vmatmul.mubr.bf16.gmra.mxu0 %v1052
        %v2271 = vpop.f32.mrf.mxu0
        %v2272 = vadd.f32 %v2119, %v2271
        %v2273 = vpop.f32.mrf.mxu0
        %v2274 = vpop.f32.mrf.mxu0
        %v2275 = vadd.f32 %v2122, %v2274
        %v2276 = vpop.f32.mrf.mxu0
        %2277 = vmatprep.mubr.bf16.mxu0 %v1113
        %2278 = vmatmul.mubr.bf16.gmra.mxu0 %v1053
        %v2279 = vpop.f32.mrf.mxu0
        %v2280 = vadd.f32 %v2127, %v2279
        %v2281 = vpop.f32.mrf.mxu0
        %v2282 = vpop.f32.mrf.mxu0
        %v2283 = vadd.f32 %v2130, %v2282
        %v2284 = vpop.f32.mrf.mxu0
        %2285 = vmatprep.mubr.bf16.mxu0 %v1114
        %2286 = vmatmul.mubr.bf16.gmra.mxu0 %v1054
        %v2287 = vpop.f32.mrf.mxu0
        %v2288 = vadd.f32 %v2135, %v2287
        %v2289 = vpop.f32.mrf.mxu0
        %v2290 = vpop.f32.mrf.mxu0
        %v2291 = vadd.f32 %v2138, %v2290
        %v2292 = vpop.f32.mrf.mxu0
        %2293 = vmatprep.mubr.bf16.mxu0 %v1115
        %2294 = vmatmul.mubr.bf16.gmra.mxu0 %v1055
        %v2295 = vpop.f32.mrf.mxu0
        %v2296 = vadd.f32 %v2143, %v2295
        %v2297 = vpop.f32.mrf.mxu0
        %v2298 = vpop.f32.mrf.mxu0
        %v2299 = vadd.f32 %v2146, %v2298
        %v2300 = vpop.f32.mrf.mxu0
        %2301 = vmatprep.mubr.bf16.mxu0 %v1116
        %2302 = vmatmul.mubr.bf16.gmra.mxu0 %v1056
        %v2303 = vpop.f32.mrf.mxu0
        %v2304 = vadd.f32 %v2151, %v2303
        %v2305 = vpop.f32.mrf.mxu0
        %v2306 = vpop.f32.mrf.mxu0
        %v2307 = vadd.f32 %v2154, %v2306
        %v2308 = vpop.f32.mrf.mxu0
        %2309 = vmatprep.mubr.bf16.mxu0 %v1117
        %2310 = vmatmul.mubr.bf16.gmra.mxu0 %v1057
        %v2311 = vpop.f32.mrf.mxu0
        %v2312 = vadd.f32 %v2159, %v2311
        %v2313 = vpop.f32.mrf.mxu0
        %v2314 = vpop.f32.mrf.mxu0
        %v2315 = vadd.f32 %v2162, %v2314
        %v2316 = vpop.f32.mrf.mxu0
        %2317 = vmatprep.mubr.bf16.mxu0 %v1118
        %2318 = vmatmul.mubr.bf16.gmra.mxu0 %v1058
        %v2319 = vpop.f32.mrf.mxu0
        %v2320 = vadd.f32 %v2167, %v2319
        %v2321 = vpop.f32.mrf.mxu0
        %v2322 = vpop.f32.mrf.mxu0
        %v2323 = vadd.f32 %v2170, %v2322
        %v2324 = vpop.f32.mrf.mxu0
        %2325 = vmatprep.mubr.bf16.mxu0 %v1119
        %2326 = vmatmul.mubr.bf16.gmra.mxu0 %v1059
        %v2327 = vpop.f32.mrf.mxu0
        %v2328 = vadd.f32 %v2175, %v2327
        %v2329 = vpop.f32.mrf.mxu0
        %v2330 = vpop.f32.mrf.mxu0
        %v2331 = vadd.f32 %v2178, %v2330
        %v2332 = vpop.f32.mrf.mxu0
        %2333 = vmatprep.mubr.bf16.mxu0 %v1120
        %2334 = vmatmul.mubr.bf16.gmra.mxu0 %v1060
        %v2335 = vpop.f32.mrf.mxu0
        %v2336 = vadd.f32 %v2183, %v2335
        %v2337 = vpop.f32.mrf.mxu0
        %v2338 = vpop.f32.mrf.mxu0
        %v2339 = vadd.f32 %v2186, %v2338
        %v2340 = vpop.f32.mrf.mxu0
        %2341 = vmatprep.mubr.bf16.mxu0 %v1121
        %2342 = vmatmul.mubr.bf16.gmra.mxu0 %v1061
        %v2343 = vpop.f32.mrf.mxu0
        %v2344 = vadd.f32 %v2191, %v2343
        %v2345 = vpop.f32.mrf.mxu0
        %v2346 = vpop.f32.mrf.mxu0
        %v2347 = vadd.f32 %v2194, %v2346
        %v2348 = vpop.f32.mrf.mxu0
        %2349 = vmatprep.mubr.bf16.mxu0 %v1308
        %2350 = vmatmul.mubr.bf16.gmra.mxu0 %v1299
        %v2351 = vpop.f32.mrf.mxu0
        %v2352 = vadd.f32 %v2199, %v2351
        %v2353 = vpop.f32.mrf.mxu0
        %v2354 = vpop.f32.mrf.mxu0
        %v2355 = vadd.f32 %v2202, %v2354
        %v2356 = vpop.f32.mrf.mxu0
        %2357 = vmatprep.mubr.bf16.mxu0 %v1309
        %2358 = vmatmul.mubr.bf16.gmra.mxu0 %v1300
        %v2359 = vpop.f32.mrf.mxu0
        %v2360 = vadd.f32 %v2207, %v2359
        %v2361 = vpop.f32.mrf.mxu0
        %v2362 = vpop.f32.mrf.mxu0
        %v2363 = vadd.f32 %v2210, %v2362
        %v2364 = vpop.f32.mrf.mxu0
        %2365 = vmatprep.mubr.bf16.mxu0 %v1310
        %2366 = vmatmul.mubr.bf16.gmra.mxu0 %v1301
        %v2367 = vpop.f32.mrf.mxu0
        %v2368 = vadd.f32 %v2215, %v2367
        %v2369 = vpop.f32.mrf.mxu0
        %v2370 = vpop.f32.mrf.mxu0
        %v2371 = vadd.f32 %v2218, %v2370
        %v2372 = vpop.f32.mrf.mxu0
        %2373 = vdwg.mxu0
        %2374 = vmatprep.subr.bf16.mxu0 0
        %2375 = vmatpush1.bf16.msra.mxu0 %v1689
        %2376 = vmatprep.subr.bf16.mxu0 0
        %2377 = vmatpush1.bf16.msra.mxu0 %v1688
        %2378 = vmatprep.subr.bf16.mxu0 0
        %2379 = vmatpush1.bf16.msra.mxu0 %v1687
        %2380 = vmatprep.subr.bf16.mxu0 0
        %2381 = vmatpush1.bf16.msra.mxu0 %v1686
        %2382 = vmatprep.subr.bf16.mxu0 0
        %2383 = vmatpush1.bf16.msra.mxu0 %v1685
        %2384 = vmatprep.subr.bf16.mxu0 0
        %2385 = vmatpush1.bf16.msra.mxu0 %v1684
        %2386 = vmatprep.subr.bf16.mxu0 0
        %2387 = vmatpush1.bf16.msra.mxu0 %v1683
        %2388 = vmatprep.subr.bf16.mxu0 0
        %2389 = vmatpush1.bf16.msra.mxu0 %v1682
        %2390 = vmatprep.subr.bf16.mxu0 0
        %2391 = vmatpush2.bf16.msra.mxu0 0
        %2392 = vmatprep.subr.bf16.mxu0 0
        %2393 = vmatpush2.bf16.msra.mxu0 0
        %2394 = vmatprep.subr.bf16.mxu0 0
        %2395 = vmatpush2.bf16.msra.mxu0 0
        %2396 = vmatprep.subr.bf16.mxu0 0
        %2397 = vmatpush2.bf16.msra.mxu0 0
        %2398 = vmatprep.subr.bf16.mxu0 0
        %2399 = vmatpush2.bf16.msra.mxu0 0
        %2400 = vmatprep.subr.bf16.mxu0 0
        %2401 = vmatpush2.bf16.msra.mxu0 0
        %2402 = vmatprep.subr.bf16.mxu0 0
        %2403 = vmatpush2.bf16.msra.mxu0 0
        %2404 = vmatprep.subr.bf16.mxu0 0
        %2405 = vmatpush2.bf16.msra.mxu0 0
        %2406 = vmatprep.mubr.bf16.mxu0 0
        %2407 = vmatmul.mubr.bf16.gmra.mxu0 %v1170
        %v2408 = vpop.f32.mrf.mxu0
        %v2409 = vadd.f32 %v2256, %v2408
        %v2410 = vpop.f32.mrf.mxu0
        %v2411 = vpop.f32.mrf.mxu0
        %v2412 = vadd.f32 %v2259, %v2411
        %v2413 = vpop.f32.mrf.mxu0
        %2414 = vmatprep.mubr.bf16.mxu0 0
        %2415 = vmatmul.mubr.bf16.gmra.mxu0 %v1171
        %v2416 = vpop.f32.mrf.mxu0
        %v2417 = vadd.f32 %v2264, %v2416
        %v2418 = vpop.f32.mrf.mxu0
        %v2419 = vpop.f32.mrf.mxu0
        %v2420 = vadd.f32 %v2267, %v2419
        %v2421 = vpop.f32.mrf.mxu0
        %2422 = vmatprep.mubr.bf16.mxu0 0
        %2423 = vmatmul.mubr.bf16.gmra.mxu0 %v1172
        %v2424 = vpop.f32.mrf.mxu0
        %v2425 = vadd.f32 %v2272, %v2424
        %v2426 = vpop.f32.mrf.mxu0
        %v2427 = vpop.f32.mrf.mxu0
        %v2428 = vadd.f32 %v2275, %v2427
        %v2429 = vpop.f32.mrf.mxu0
        %2430 = vmatprep.mubr.bf16.mxu0 0
        %2431 = vmatmul.mubr.bf16.gmra.mxu0 %v1173
        %v2432 = vpop.f32.mrf.mxu0
        %v2433 = vadd.f32 %v2280, %v2432
        %v2434 = vpop.f32.mrf.mxu0
        %v2435 = vpop.f32.mrf.mxu0
        %v2436 = vadd.f32 %v2283, %v2435
        %v2437 = vpop.f32.mrf.mxu0
        %2438 = vmatprep.mubr.bf16.mxu0 0
        %2439 = vmatmul.mubr.bf16.gmra.mxu0 %v1174
        %v2440 = vpop.f32.mrf.mxu0
        %v2441 = vadd.f32 %v2288, %v2440
        %v2442 = vpop.f32.mrf.mxu0
        %v2443 = vpop.f32.mrf.mxu0
        %v2444 = vadd.f32 %v2291, %v2443
        %v2445 = vpop.f32.mrf.mxu0
        %2446 = vmatprep.mubr.bf16.mxu0 0
        %2447 = vmatmul.mubr.bf16.gmra.mxu0 %v1175
        %v2448 = vpop.f32.mrf.mxu0
        %v2449 = vadd.f32 %v2296, %v2448
        %v2450 = vpop.f32.mrf.mxu0
        %v2451 = vpop.f32.mrf.mxu0
        %v2452 = vadd.f32 %v2299, %v2451
        %v2453 = vpop.f32.mrf.mxu0
        %2454 = vmatprep.mubr.bf16.mxu0 0
        %2455 = vmatmul.mubr.bf16.gmra.mxu0 %v1176
        %v2456 = vpop.f32.mrf.mxu0
        %v2457 = vadd.f32 %v2304, %v2456
        %v2458 = vpop.f32.mrf.mxu0
        %v2459 = vpop.f32.mrf.mxu0
        %v2460 = vadd.f32 %v2307, %v2459
        %v2461 = vpop.f32.mrf.mxu0
        %2462 = vmatprep.mubr.bf16.mxu0 0
        %2463 = vmatmul.mubr.bf16.gmra.mxu0 %v1177
        %v2464 = vpop.f32.mrf.mxu0
        %v2465 = vadd.f32 %v2312, %v2464
        %v2466 = vpop.f32.mrf.mxu0
        %v2467 = vpop.f32.mrf.mxu0
        %v2468 = vadd.f32 %v2315, %v2467
        %v2469 = vpop.f32.mrf.mxu0
        %2470 = vmatprep.mubr.bf16.mxu0 0
        %2471 = vmatmul.mubr.bf16.gmra.mxu0 %v1178
        %v2472 = vpop.f32.mrf.mxu0
        %v2473 = vadd.f32 %v2320, %v2472
        %v2474 = vpop.f32.mrf.mxu0
        %v2475 = vpop.f32.mrf.mxu0
        %v2476 = vadd.f32 %v2323, %v2475
        %v2477 = vpop.f32.mrf.mxu0
        %2478 = vmatprep.mubr.bf16.mxu0 0
        %2479 = vmatmul.mubr.bf16.gmra.mxu0 %v1179
        %v2480 = vpop.f32.mrf.mxu0
        %v2481 = vadd.f32 %v2328, %v2480
        %v2482 = vpop.f32.mrf.mxu0
        %v2483 = vpop.f32.mrf.mxu0
        %v2484 = vadd.f32 %v2331, %v2483
        %v2485 = vpop.f32.mrf.mxu0
        %2486 = vmatprep.mubr.bf16.mxu0 0
        %2487 = vmatmul.mubr.bf16.gmra.mxu0 %v1180
        %v2488 = vpop.f32.mrf.mxu0
        %v2489 = vadd.f32 %v2336, %v2488
        %v2490 = vpop.f32.mrf.mxu0
        %v2491 = vpop.f32.mrf.mxu0
        %v2492 = vadd.f32 %v2339, %v2491
        %v2493 = vpop.f32.mrf.mxu0
        %2494 = vmatprep.mubr.bf16.mxu0 0
        %2495 = vmatmul.mubr.bf16.gmra.mxu0 %v1181
        %v2496 = vpop.f32.mrf.mxu0
        %v2497 = vadd.f32 %v2344, %v2496
        %v2498 = vpop.f32.mrf.mxu0
        %v2499 = vpop.f32.mrf.mxu0
        %v2500 = vadd.f32 %v2347, %v2499
        %v2501 = vpop.f32.mrf.mxu0
        %2502 = vmatprep.mubr.bf16.mxu0 0
        %2503 = vmatmul.mubr.bf16.gmra.mxu0 %v1317
        %v2504 = vpop.f32.mrf.mxu0
        %v2505 = vadd.f32 %v2352, %v2504
        %v2506 = vpop.f32.mrf.mxu0
        %v2507 = vpop.f32.mrf.mxu0
        %v2508 = vadd.f32 %v2355, %v2507
        %v2509 = vpop.f32.mrf.mxu0
        %2510 = vmatprep.mubr.bf16.mxu0 0
        %2511 = vmatmul.mubr.bf16.gmra.mxu0 %v1318
        %v2512 = vpop.f32.mrf.mxu0
        %v2513 = vadd.f32 %v2360, %v2512
        %v2514 = vpop.f32.mrf.mxu0
        %v2515 = vpop.f32.mrf.mxu0
        %v2516 = vadd.f32 %v2363, %v2515
        %v2517 = vpop.f32.mrf.mxu0
        %2518 = vmatprep.mubr.bf16.mxu0 0
        %2519 = vmatmul.mubr.bf16.gmra.mxu0 %v1319
        %v2520 = vpop.f32.mrf.mxu0
        %v2521 = vadd.f32 %v2368, %v2520
        %v2522 = vpop.f32.mrf.mxu0
        %v2523 = vpop.f32.mrf.mxu0
        %v2524 = vadd.f32 %v2371, %v2523
        %v2525 = vpop.f32.mrf.mxu0
        %2526 = vdwg.mxu0
        %v2527 = vmax.f32 %v2409, 0.0
        %v2528 = vmax.f32 %v2412, 0.0
        %v2529 = vmax.f32 %v2417, 0.0
        %v2530 = vmax.f32 %v2420, 0.0
        %v2531 = vmax.f32 %v2425, 0.0
        %v2532 = vmax.f32 %v2428, 0.0
        %v2533 = vmax.f32 %v2433, 0.0
        %v2534 = vmax.f32 %v2436, 0.0
        %v2535 = vmax.f32 %v2441, 0.0
        %v2536 = vmax.f32 %v2444, 0.0
        %v2537 = vmax.f32 %v2449, 0.0
        %v2538 = vmax.f32 %v2452, 0.0
        %v2539 = vmax.f32 %v2457, 0.0
        %v2540 = vmax.f32 %v2460, 0.0
        %v2541 = vmax.f32 %v2465, 0.0
        %v2542 = vmax.f32 %v2468, 0.0
        %v2543 = vmax.f32 %v2473, 0.0
        %v2544 = vmax.f32 %v2476, 0.0
        %v2545 = vmax.f32 %v2481, 0.0
        %v2546 = vmax.f32 %v2484, 0.0
        %v2547 = vmax.f32 %v2489, 0.0
        %v2548 = vmax.f32 %v2492, 0.0
        %v2549 = vmax.f32 %v2497, 0.0
        %v2550 = vmax.f32 %v2500, 0.0
        %v2551 = vmax.f32 %v2505, 0.0
        %v2552 = vmax.f32 %v2508, 0.0
        %v2553 = vmax.f32 %v2513, 0.0
        %v2554 = vmax.f32 %v2516, 0.0
        %v2555 = vmax.f32 %v2521, 0.0
        %v2556 = vmax.f32 %v2524, 0.0
        %v2557 = vlaneseq
        %v2558 = vshrl.u32 %v2557, 7
        %v2559 = vadd.s32 %v2558, 8
        %v2560 = vadd.s32 %v2558, 16
        %vm2561 = vcmp.ge.s32.totalorder %v2558, 1
        %vm2562 = vcmp.ge.s32.totalorder %v2559, 1
        %vm2563 = vcmp.ge.s32.totalorder %v2560, 1
        %vm2564 = vcmp.le.s32.totalorder %v2558, 16
        %vm2565 = vcmp.le.s32.totalorder %v2559, 16
        %vm2566 = vcmp.le.s32.totalorder %v2560, 16
        %vm2567 = vmand %vm2561, %vm2564
        %vm2568 = vmand %vm2562, %vm2565
        %vm2569 = vmand %vm2563, %vm2566
        %v2570 = vsel %vm2567, 1, 0
        %v2571 = vsel %vm2568, 1, 0
        %v2572 = vsel %vm2569, 1, 0
        %vm2573 = vcmp.eq.s32.totalorder %v2570, 1
        %vm2574 = vcmp.eq.s32.totalorder %v2571, 1
        %vm2575 = vcmp.eq.s32.totalorder %v2572, 1
        %v2576 = vsel %vm2573, %v2527, 0.0
        %v2577 = vsel %vm2574, %v2528, 0.0
        %v2578 = vsel %vm2575, %v2529, 0.0
        %v2579 = vsel %vm2573, %v2530, 0.0
        %v2580 = vsel %vm2574, %v2531, 0.0
        %v2581 = vsel %vm2575, %v2532, 0.0
        %v2582 = vsel %vm2573, %v2533, 0.0
        %v2583 = vsel %vm2574, %v2534, 0.0
        %v2584 = vsel %vm2575, %v2535, 0.0
        %v2585 = vsel %vm2573, %v2536, 0.0
        %v2586 = vsel %vm2574, %v2537, 0.0
        %v2587 = vsel %vm2575, %v2538, 0.0
        %v2588 = vsel %vm2573, %v2539, 0.0
        %v2589 = vsel %vm2574, %v2540, 0.0
        %v2590 = vsel %vm2575, %v2541, 0.0
        %v2591 = vsel %vm2573, %v2542, 0.0
        %v2592 = vsel %vm2574, %v2543, 0.0
        %v2593 = vsel %vm2575, %v2544, 0.0
        %v2594 = vsel %vm2573, %v2545, 0.0
        %v2595 = vsel %vm2574, %v2546, 0.0
        %v2596 = vsel %vm2575, %v2547, 0.0
        %v2597 = vsel %vm2573, %v2548, 0.0
        %v2598 = vsel %vm2574, %v2549, 0.0
        %v2599 = vsel %vm2575, %v2550, 0.0
        %v2600 = vsel %vm2573, %v2551, 0.0
        %v2601 = vsel %vm2574, %v2552, 0.0
        %v2602 = vsel %vm2575, %v2553, 0.0
        %v2603 = vsel %vm2573, %v2554, 0.0
        %v2604 = vsel %vm2574, %v2555, 0.0
        %v2605 = vsel %vm2575, %v2556, 0.0
        %p2606 = scmp.ge.s32.totalorder %s239, 1
        %s2607 = scalar_select %p2606, 1, 0
        %v2608 = vstv %s2607
        %vm2609 = vcmp.eq.s32.totalorder %v2608, 1
        %v2610 = vsel %vm2609, %v2576, 0.0
        %v2611 = vsel %vm2609, %v2577, 0.0
        %v2612 = vsel %vm2609, %v2578, 0.0
        %s2613 = sadd.s32 %s239, 8
        %p2614 = scmp.lt.s32.totalorder %s2613, 16
        %s2615 = scalar_select %p2614, 1, 0
        %v2616 = vstv %s2615
        %vm2617 = vcmp.eq.s32.totalorder %v2616, 1
        %v2618 = vsel %vm2617, %v2603, 0.0
        %v2619 = vsel %vm2617, %v2604, 0.0
        %v2620 = vsel %vm2617, %v2605, 0.0
        %v2621 = vpack.c.bf16 %v2611, %v2610
        %v2622 = vpack.c.bf16 %v2612, %v2612
        %v2623 = vpack.c.bf16 %v2580, %v2579
        %v2624 = vpack.c.bf16 %v2581, %v2581
        %v2625 = vpack.c.bf16 %v2583, %v2582
        %v2626 = vpack.c.bf16 %v2584, %v2584
        %v2627 = vpack.c.bf16 %v2586, %v2585
        %v2628 = vpack.c.bf16 %v2587, %v2587
        %v2629 = vpack.c.bf16 %v2589, %v2588
        %v2630 = vpack.c.bf16 %v2590, %v2590
        %v2631 = vpack.c.bf16 %v2592, %v2591
        %v2632 = vpack.c.bf16 %v2593, %v2593
        %v2633 = vpack.c.bf16 %v2595, %v2594
        %v2634 = vpack.c.bf16 %v2596, %v2596
        %v2635 = vpack.c.bf16 %v2598, %v2597
        %v2636 = vpack.c.bf16 %v2599, %v2599
        %v2637 = vpack.c.bf16 %v2601, %v2600
        %v2638 = vpack.c.bf16 %v2602, %v2602
        %v2639 = vpack.c.bf16 %v2619, %v2618
        %v2640 = vpack.c.bf16 %v2620, %v2620
        %v2641 = vld [vmem:[%s3] sm:$0xf]
        %v2642 = vld [vmem:[%s3 + $0x4] sm:$0xf]
        %v2643 = vld [vmem:[%s3 + $0x8] sm:$0xf]
        %v2644 = vld [vmem:[%s3 + $0xc] sm:$0xf]
        %v2645 = vld [vmem:[%s3 + $0x10] sm:$0xf]
        %v2646 = vld [vmem:[%s3 + $0x14] sm:$0xf]
        %v2647 = vld [vmem:[%s3 + $0x18] sm:$0xf]
        %v2648 = vld [vmem:[%s3 + $0x1c] sm:$0xf]
        %v2649 = vld [vmem:[%s3 + $0x20] sm:$0xf]
        %v2650 = vld [vmem:[%s3 + $0x24] sm:$0xf]
        %v2651 = vld [vmem:[%s3 + $0x28] sm:$0xf]
        %v2652 = vld [vmem:[%s3 + $0x2c] sm:$0xf]
        %v2653 = vld [vmem:[%s3 + $0x30] sm:$0xf]
        %v2654 = vld [vmem:[%s3 + $0x34] sm:$0xf]
        %v2655 = vld [vmem:[%s3 + $0x38] sm:$0xf]
        %v2656 = vld [vmem:[%s3 + $0x3c] sm:$0xf]
        %v2657 = vld [vmem:[%s3 + $0x40] sm:$0xf]
        %v2658 = vld [vmem:[%s3 + $0x44] sm:$0xf]
        %v2659 = vld [vmem:[%s3 + $0x48] sm:$0xf]
        %v2660 = vld [vmem:[%s3 + $0x4c] sm:$0xf]
        %v2661 = vld [vmem:[%s3 + $0x50] sm:$0xf]
        %v2662 = vld [vmem:[%s3 + $0x54] sm:$0xf]
        %v2663 = vld [vmem:[%s3 + $0x58] sm:$0xf]
        %v2664 = vld [vmem:[%s3 + $0x5c] sm:$0xf]
        %v2665 = vld [vmem:[%s3 + $0x60] sm:$0xf]
        %v2666 = vld [vmem:[%s3 + $0x64] sm:$0xf]
        %v2667 = vld [vmem:[%s3 + $0x68] sm:$0xf]
        %v2668 = vld [vmem:[%s3 + $0x6c] sm:$0xf]
        %v2669 = vld [vmem:[%s3 + $0x70] sm:$0xf]
        %v2670 = vld [vmem:[%s3 + $0x74] sm:$0xf]
        %v2671 = vld [vmem:[%s3 + $0x78] sm:$0xf]
        %v2672 = vld [vmem:[%s3 + $0x7c] sm:$0xf]
        %v2673 = vld [vmem:[%s3 + $0x80] sm:$0xf]
        %v2674 = vld [vmem:[%s3 + $0x84] sm:$0xf]
        %v2675 = vld [vmem:[%s3 + $0x88] sm:$0xf]
        %v2676 = vld [vmem:[%s3 + $0x8c] sm:$0xf]
        %v2677 = vld [vmem:[%s3 + $0x90] sm:$0xf]
        %v2678 = vld [vmem:[%s3 + $0x94] sm:$0xf]
        %v2679 = vld [vmem:[%s3 + $0x98] sm:$0xf]
        %v2680 = vld [vmem:[%s3 + $0x9c] sm:$0xf]
        %v2681 = vld [vmem:[%s3 + $0xa0] sm:$0xf]
        %v2682 = vld [vmem:[%s3 + $0xa4] sm:$0xf]
        %v2683 = vld [vmem:[%s3 + $0xa8] sm:$0xf]
        %v2684 = vld [vmem:[%s3 + $0xac] sm:$0xf]
        %v2685 = vld [vmem:[%s3 + $0xb0] sm:$0xf]
        %v2686 = vld [vmem:[%s3 + $0xb4] sm:$0xf]
        %v2687 = vld [vmem:[%s3 + $0xb8] sm:$0xf]
        %v2688 = vld [vmem:[%s3 + $0xbc] sm:$0xf]
        %v2689 = vld [vmem:[%s3 + $0xc0] sm:$0xf]
        %v2690 = vld [vmem:[%s3 + $0xc4] sm:$0xf]
        %v2691 = vld [vmem:[%s3 + $0xc8] sm:$0xf]
        %v2692 = vld [vmem:[%s3 + $0xcc] sm:$0xf]
        %v2693 = vld [vmem:[%s3 + $0xd0] sm:$0xf]
        %v2694 = vld [vmem:[%s3 + $0xd4] sm:$0xf]
        %v2695 = vld [vmem:[%s3 + $0xd8] sm:$0xf]
        %v2696 = vld [vmem:[%s3 + $0xdc] sm:$0xf]
        %v2697 = vld [vmem:[%s3 + $0xe0] sm:$0xf]
        %v2698 = vld [vmem:[%s3 + $0xe4] sm:$0xf]
        %v2699 = vld [vmem:[%s3 + $0xe8] sm:$0xf]
        %v2700 = vld [vmem:[%s3 + $0xec] sm:$0xf]
        %v2701 = vld [vmem:[%s3 + $0xf0] sm:$0xf]
        %v2702 = vld [vmem:[%s3 + $0xf4] sm:$0xf]
        %v2703 = vld [vmem:[%s3 + $0xf8] sm:$0xf]
        %v2704 = vld [vmem:[%s3 + $0xfc] sm:$0xf]
        %v2705 = vld [vmem:[%s3 + $0x100] sm:$0xf]
        %v2706 = vld [vmem:[%s3 + $0x104] sm:$0xf]
        %v2707 = vld [vmem:[%s3 + $0x108] sm:$0xf]
        %v2708 = vld [vmem:[%s3 + $0x10c] sm:$0xf]
        %v2709 = vld [vmem:[%s3 + $0x110] sm:$0xf]
        %v2710 = vld [vmem:[%s3 + $0x114] sm:$0xf]
        %v2711 = vld [vmem:[%s3 + $0x118] sm:$0xf]
        %v2712 = vld [vmem:[%s3 + $0x11c] sm:$0xf]
        %v2713 = vld [vmem:[%s3 + $0x120] sm:$0xf]
        %v2714 = vld [vmem:[%s3 + $0x124] sm:$0xf]
        %v2715 = vld [vmem:[%s3 + $0x128] sm:$0xf]
        %v2716 = vld [vmem:[%s3 + $0x12c] sm:$0xf]
        %v2717 = vld [vmem:[%s3 + $0x130] sm:$0xf]
        %v2718 = vld [vmem:[%s3 + $0x134] sm:$0xf]
        %v2719 = vld [vmem:[%s3 + $0x138] sm:$0xf]
        %v2720 = vld [vmem:[%s3 + $0x13c] sm:$0xf]
        %v2721 = vld [vmem:[%s3 + $0x140] sm:$0xf]
        %v2722 = vld [vmem:[%s3 + $0x144] sm:$0xf]
        %v2723 = vld [vmem:[%s3 + $0x148] sm:$0xf]
        %v2724 = vld [vmem:[%s3 + $0x14c] sm:$0xf]
        %v2725 = vld [vmem:[%s3 + $0x150] sm:$0xf]
        %v2726 = vld [vmem:[%s3 + $0x154] sm:$0xf]
        %v2727 = vld [vmem:[%s3 + $0x158] sm:$0xf]
        %v2728 = vld [vmem:[%s3 + $0x15c] sm:$0xf]
        %v2729 = vld [vmem:[%s3 + $0x160] sm:$0xf]
        %v2730 = vld [vmem:[%s3 + $0x164] sm:$0xf]
        %v2731 = vld [vmem:[%s3 + $0x168] sm:$0xf]
        %v2732 = vld [vmem:[%s3 + $0x16c] sm:$0xf]
        %v2733 = vld [vmem:[%s3 + $0x170] sm:$0xf]
        %v2734 = vld [vmem:[%s3 + $0x174] sm:$0xf]
        %v2735 = vld [vmem:[%s3 + $0x178] sm:$0xf]
        %v2736 = vld [vmem:[%s3 + $0x17c] sm:$0xf]
        %v2737 = vld [vmem:[%s3 + $0x180] sm:$0xf]
        %v2738 = vld [vmem:[%s3 + $0x184] sm:$0xf]
        %v2739 = vld [vmem:[%s3 + $0x188] sm:$0xf]
        %v2740 = vld [vmem:[%s3 + $0x18c] sm:$0xf]
        %v2741 = vld [vmem:[%s3 + $0x190] sm:$0xf]
        %v2742 = vld [vmem:[%s3 + $0x194] sm:$0xf]
        %v2743 = vld [vmem:[%s3 + $0x198] sm:$0xf]
        %v2744 = vld [vmem:[%s3 + $0x19c] sm:$0xf]
        %v2745 = vld [vmem:[%s3 + $0x1a0] sm:$0xf]
        %v2746 = vld [vmem:[%s3 + $0x1a4] sm:$0xf]
        %v2747 = vld [vmem:[%s3 + $0x1a8] sm:$0xf]
        %v2748 = vld [vmem:[%s3 + $0x1ac] sm:$0xf]
        %v2749 = vld [vmem:[%s3 + $0x1b0] sm:$0xf]
        %v2750 = vld [vmem:[%s3 + $0x1b4] sm:$0xf]
        %v2751 = vld [vmem:[%s3 + $0x1b8] sm:$0xf]
        %v2752 = vld [vmem:[%s3 + $0x1bc] sm:$0xf]
        %v2753 = vld [vmem:[%s3 + $0x1c0] sm:$0xf]
        %v2754 = vld [vmem:[%s3 + $0x1c4] sm:$0xf]
        %v2755 = vld [vmem:[%s3 + $0x1c8] sm:$0xf]
        %v2756 = vld [vmem:[%s3 + $0x1cc] sm:$0xf]
        %v2757 = vld [vmem:[%s3 + $0x1d0] sm:$0xf]
        %v2758 = vld [vmem:[%s3 + $0x1d4] sm:$0xf]
        %v2759 = vld [vmem:[%s3 + $0x1d8] sm:$0xf]
        %v2760 = vld [vmem:[%s3 + $0x1dc] sm:$0xf]
        %v2761 = vld [vmem:[%s3 + $0x1e0] sm:$0xf]
        %v2762 = vld [vmem:[%s3 + $0x1e4] sm:$0xf]
        %v2763 = vld [vmem:[%s3 + $0x1e8] sm:$0xf]
        %v2764 = vld [vmem:[%s3 + $0x1ec] sm:$0xf]
        %v2765 = vld [vmem:[%s3 + $0x1f0] sm:$0xf]
        %v2766 = vld [vmem:[%s3 + $0x1f4] sm:$0xf]
        %v2767 = vld [vmem:[%s3 + $0x1f8] sm:$0xf]
        %v2768 = vld [vmem:[%s3 + $0x1fc] sm:$0xf]
        %v2769 = vld [vmem:[%s3 + $0x200] sm:$0xf]
        %v2770 = vld [vmem:[%s3 + $0x204] sm:$0xf]
        %v2771 = vld [vmem:[%s3 + $0x208] sm:$0xf]
        %v2772 = vld [vmem:[%s3 + $0x20c] sm:$0xf]
        %v2773 = vld [vmem:[%s3 + $0x210] sm:$0xf]
        %v2774 = vld [vmem:[%s3 + $0x214] sm:$0xf]
        %v2775 = vld [vmem:[%s3 + $0x218] sm:$0xf]
        %v2776 = vld [vmem:[%s3 + $0x21c] sm:$0xf]
        %v2777 = vld [vmem:[%s3 + $0x220] sm:$0xf]
        %v2778 = vld [vmem:[%s3 + $0x224] sm:$0xf]
        %v2779 = vld [vmem:[%s3 + $0x228] sm:$0xf]
        %v2780 = vld [vmem:[%s3 + $0x22c] sm:$0xf]
        %v2781 = vld [vmem:[%s3 + $0x230] sm:$0xf]
        %v2782 = vld [vmem:[%s3 + $0x234] sm:$0xf]
        %v2783 = vld [vmem:[%s3 + $0x238] sm:$0xf]
        %v2784 = vld [vmem:[%s3 + $0x23c] sm:$0xf]
        %vm2785 = vsmask.f32 7424
        %v2787 = vshrl.u32 %v2621, 16
        %v2789 = vshll.u32 %v2621, 16
        %v2791 = vrot.slane %v2789, 1
        %v2792 = vor.u32 %v2787, %v2791
        %v2794 = vshll.u32 %v2622, 16
        %v2796 = vrot.slane %v2794, 1
        %v2797 = vsel %vm2785, %v2792, %v2796
        %v2799 = vshrl.u32 %v2623, 16
        %v2801 = vshll.u32 %v2623, 16
        %v2803 = vrot.slane %v2801, 1
        %v2804 = vor.u32 %v2799, %v2803
        %v2806 = vshll.u32 %v2624, 16
        %v2808 = vrot.slane %v2806, 1
        %v2809 = vsel %vm2785, %v2804, %v2808
        %v2811 = vshrl.u32 %v2625, 16
        %v2813 = vshll.u32 %v2625, 16
        %v2815 = vrot.slane %v2813, 1
        %v2816 = vor.u32 %v2811, %v2815
        %v2818 = vshll.u32 %v2626, 16
        %v2820 = vrot.slane %v2818, 1
        %v2821 = vsel %vm2785, %v2816, %v2820
        %v2823 = vshrl.u32 %v2627, 16
        %v2825 = vshll.u32 %v2627, 16
        %v2827 = vrot.slane %v2825, 1
        %v2828 = vor.u32 %v2823, %v2827
        %v2830 = vshll.u32 %v2628, 16
        %v2832 = vrot.slane %v2830, 1
        %v2833 = vsel %vm2785, %v2828, %v2832
        %v2835 = vshrl.u32 %v2629, 16
        %v2837 = vshll.u32 %v2629, 16
        %v2839 = vrot.slane %v2837, 1
        %v2840 = vor.u32 %v2835, %v2839
        %v2842 = vshll.u32 %v2630, 16
        %v2844 = vrot.slane %v2842, 1
        %v2845 = vsel %vm2785, %v2840, %v2844
        %v2847 = vshrl.u32 %v2631, 16
        %v2849 = vshll.u32 %v2631, 16
        %v2851 = vrot.slane %v2849, 1
        %v2852 = vor.u32 %v2847, %v2851
        %v2854 = vshll.u32 %v2632, 16
        %v2856 = vrot.slane %v2854, 1
        %v2857 = vsel %vm2785, %v2852, %v2856
        %v2859 = vshrl.u32 %v2633, 16
        %v2861 = vshll.u32 %v2633, 16
        %v2863 = vrot.slane %v2861, 1
        %v2864 = vor.u32 %v2859, %v2863
        %v2866 = vshll.u32 %v2634, 16
        %v2868 = vrot.slane %v2866, 1
        %v2869 = vsel %vm2785, %v2864, %v2868
        %v2871 = vshrl.u32 %v2635, 16
        %v2873 = vshll.u32 %v2635, 16
        %v2875 = vrot.slane %v2873, 1
        %v2876 = vor.u32 %v2871, %v2875
        %v2878 = vshll.u32 %v2636, 16
        %v2880 = vrot.slane %v2878, 1
        %v2881 = vsel %vm2785, %v2876, %v2880
        %vm2906 = vcmask 1046528
        %v2907 = vrot.slane %v2621, 1
        %v2908 = vrot.slane %v2622, 1
        %v2909 = vsel %vm2906, %v2907, %v2908
        %v2910 = vrot.slane %v2623, 1
        %v2911 = vrot.slane %v2624, 1
        %v2912 = vsel %vm2906, %v2910, %v2911
        %v2913 = vrot.slane %v2625, 1
        %v2914 = vrot.slane %v2626, 1
        %v2915 = vsel %vm2906, %v2913, %v2914
        %v2916 = vrot.slane %v2627, 1
        %v2917 = vrot.slane %v2628, 1
        %v2918 = vsel %vm2906, %v2916, %v2917
        %v2919 = vrot.slane %v2629, 1
        %v2920 = vrot.slane %v2630, 1
        %v2921 = vsel %vm2906, %v2919, %v2920
        %v2922 = vrot.slane %v2631, 1
        %v2923 = vrot.slane %v2632, 1
        %v2924 = vsel %vm2906, %v2922, %v2923
        %v2925 = vrot.slane %v2633, 1
        %v2926 = vrot.slane %v2634, 1
        %v2927 = vsel %vm2906, %v2925, %v2926
        %v2928 = vrot.slane %v2635, 1
        %v2929 = vrot.slane %v2636, 1
        %v2930 = vsel %vm2906, %v2928, %v2929
        %v2940 = vshrl.u32 %v2637, 16
        %v2942 = vshll.u32 %v2637, 16
        %v2944 = vrot.slane %v2942, 1
        %v2945 = vor.u32 %v2940, %v2944
        %v2947 = vshll.u32 %v2638, 16
        %v2949 = vrot.slane %v2947, 1
        %v2950 = vsel %vm2785, %v2945, %v2949
        %v2954 = vrot.slane %v2637, 1
        %v2955 = vrot.slane %v2638, 1
        %v2956 = vsel %vm2906, %v2954, %v2955
        %v2959 = vshrl.u32 %v2639, 16
        %v2961 = vshll.u32 %v2639, 16
        %v2963 = vrot.slane %v2961, 1
        %v2964 = vor.u32 %v2959, %v2963
        %v2966 = vshll.u32 %v2640, 16
        %v2968 = vrot.slane %v2966, 1
        %v2969 = vsel %vm2785, %v2964, %v2968
        %v2973 = vrot.slane %v2639, 1
        %v2974 = vrot.slane %v2640, 1
        %v2975 = vsel %vm2906, %v2973, %v2974
        %v2993 = vunpack.c.l.bf16 %v844
        %v2994 = vunpack.c.l.bf16 %v847
        %v2995 = vunpack.c.l.bf16 %v854
        %v2996 = vunpack.c.l.bf16 %v857
        %v2997 = vunpack.c.l.bf16 %v864
        %v2998 = vunpack.c.l.bf16 %v867
        %v2999 = vunpack.c.l.bf16 %v874
        %v3000 = vunpack.c.l.bf16 %v877
        %v3001 = vunpack.c.l.bf16 %v884
        %v3002 = vunpack.c.l.bf16 %v887
        %v3003 = vunpack.c.l.bf16 %v894
        %v3004 = vunpack.c.l.bf16 %v897
        %v3005 = vunpack.c.l.bf16 %v904
        %v3006 = vunpack.c.l.bf16 %v907
        %v3007 = vunpack.c.l.bf16 %v914
        %v3008 = vunpack.c.l.bf16 %v917
        %v3009 = vld [vmem:[%s4] sm:$0x1]
        %v3011 = vlaneseq
        %v3012 = vshrl.u32 %v3011, 7
        %v3013 = vsub.s32 0, %v3012
        %v3014 = vrot.slane %v3009, %v3013
        %v3160 = vunpack.c.l.b16 %v2641
        %v3161 = vunpack.c.l.b16 %v2642
        %v3162 = vunpack.c.l.b16 %v2643
        %v3163 = vunpack.c.l.b16 %v2644
        %v3164 = vunpack.c.l.b16 %v2645
        %v3165 = vunpack.c.l.b16 %v2646
        %v3166 = vunpack.c.l.b16 %v2647
        %v3167 = vunpack.c.l.b16 %v2648
        %v3168 = vunpack.c.l.b16 %v2649
        %v3169 = vunpack.c.l.b16 %v2650
        %v3170 = vunpack.c.l.b16 %v2651
        %v3171 = vunpack.c.l.b16 %v2652
        %v3172 = vunpack.c.l.b16 %v2653
        %v3173 = vunpack.c.l.b16 %v2654
        %v3174 = vunpack.c.l.b16 %v2655
        %v3175 = vunpack.c.l.b16 %v2656
        %v3176 = vunpack.c.l.b16 %v2657
        %v3177 = vunpack.c.l.b16 %v2658
        %v3178 = vunpack.c.l.b16 %v2659
        %v3179 = vunpack.c.l.b16 %v2660
        %v3180 = vunpack.c.l.b16 %v2661
        %v3181 = vunpack.c.l.b16 %v2662
        %v3182 = vunpack.c.l.b16 %v2663
        %v3183 = vunpack.c.l.b16 %v2664
        %v3184 = vunpack.c.l.b16 %v2665
        %v3185 = vunpack.c.l.b16 %v2666
        %v3186 = vunpack.c.l.b16 %v2667
        %v3187 = vunpack.c.l.b16 %v2668
        %v3188 = vunpack.c.l.b16 %v2669
        %v3189 = vunpack.c.l.b16 %v2670
        %v3190 = vunpack.c.l.b16 %v2671
        %v3191 = vunpack.c.l.b16 %v2672
        %v3192 = vunpack.c.l.b16 %v2673
        %v3193 = vunpack.c.l.b16 %v2674
        %v3194 = vunpack.c.l.b16 %v2675
        %v3195 = vunpack.c.l.b16 %v2676
        %v3196 = vunpack.c.l.b16 %v2677
        %v3197 = vunpack.c.l.b16 %v2678
        %v3198 = vunpack.c.l.b16 %v2679
        %v3199 = vunpack.c.l.b16 %v2680
        %v3200 = vunpack.c.l.b16 %v2681
        %v3201 = vunpack.c.l.b16 %v2682
        %v3202 = vunpack.c.l.b16 %v2683
        %v3203 = vunpack.c.l.b16 %v2684
        %v3204 = vunpack.c.l.b16 %v2685
        %v3205 = vunpack.c.l.b16 %v2686
        %v3206 = vunpack.c.l.b16 %v2687
        %v3207 = vunpack.c.l.b16 %v2688
        %v3208 = vunpack.c.l.b16 %v2689
        %v3209 = vunpack.c.l.b16 %v2690
        %v3210 = vunpack.c.l.b16 %v2691
        %v3211 = vunpack.c.l.b16 %v2692
        %v3212 = vunpack.c.l.b16 %v2693
        %v3213 = vunpack.c.l.b16 %v2694
        %v3214 = vunpack.c.l.b16 %v2695
        %v3215 = vunpack.c.l.b16 %v2696
        %v3216 = vunpack.c.l.b16 %v2697
        %v3217 = vunpack.c.l.b16 %v2698
        %v3218 = vunpack.c.l.b16 %v2699
        %v3219 = vunpack.c.l.b16 %v2700
        %v3220 = vunpack.c.l.b16 %v2701
        %v3221 = vunpack.c.l.b16 %v2702
        %v3222 = vunpack.c.l.b16 %v2703
        %v3223 = vunpack.c.l.b16 %v2704
        %v3224 = vunpack.c.l.b16 %v2705
        %v3225 = vunpack.c.l.b16 %v2706
        %v3226 = vunpack.c.l.b16 %v2707
        %v3227 = vunpack.c.l.b16 %v2708
        %v3228 = vunpack.c.l.b16 %v2709
        %v3229 = vunpack.c.l.b16 %v2710
        %v3230 = vunpack.c.l.b16 %v2711
        %v3231 = vunpack.c.l.b16 %v2712
        %v3232 = vunpack.c.l.b16 %v2713
        %v3233 = vunpack.c.l.b16 %v2714
        %v3234 = vunpack.c.l.b16 %v2715
        %v3235 = vunpack.c.l.b16 %v2716
        %v3236 = vunpack.c.l.b16 %v2717
        %v3237 = vunpack.c.l.b16 %v2718
        %v3238 = vunpack.c.l.b16 %v2719
        %v3239 = vunpack.c.l.b16 %v2720
        %v3240 = vunpack.c.l.b16 %v2721
        %v3241 = vunpack.c.l.b16 %v2722
        %v3242 = vunpack.c.l.b16 %v2723
        %v3243 = vunpack.c.l.b16 %v2724
        %v3244 = vunpack.c.l.b16 %v2725
        %v3245 = vunpack.c.l.b16 %v2726
        %v3246 = vunpack.c.l.b16 %v2727
        %v3247 = vunpack.c.l.b16 %v2728
        %v3248 = vunpack.c.l.b16 %v2729
        %v3249 = vunpack.c.l.b16 %v2730
        %v3250 = vunpack.c.l.b16 %v2731
        %v3251 = vunpack.c.l.b16 %v2732
        %v3252 = vunpack.c.l.b16 %v2733
        %v3253 = vunpack.c.l.b16 %v2734
        %v3254 = vunpack.c.l.b16 %v2735
        %v3255 = vunpack.c.l.b16 %v2736
        %v3256 = vunpack.c.l.b16 %v2737
        %v3257 = vunpack.c.l.b16 %v2738
        %v3258 = vunpack.c.l.b16 %v2739
        %v3259 = vunpack.c.l.b16 %v2740
        %v3260 = vunpack.c.l.b16 %v2741
        %v3261 = vunpack.c.l.b16 %v2742
        %v3262 = vunpack.c.l.b16 %v2743
        %v3263 = vunpack.c.l.b16 %v2744
        %v3264 = vunpack.c.l.b16 %v2745
        %v3265 = vunpack.c.l.b16 %v2746
        %v3266 = vunpack.c.l.b16 %v2747
        %v3267 = vunpack.c.l.b16 %v2748
        %v3268 = vunpack.c.l.b16 %v2749
        %v3269 = vunpack.c.l.b16 %v2750
        %v3270 = vunpack.c.l.b16 %v2751
        %v3271 = vunpack.c.l.b16 %v2752
        %v3272 = vunpack.c.l.b16 %v2753
        %v3273 = vunpack.c.l.b16 %v2754
        %v3274 = vunpack.c.l.b16 %v2755
        %v3275 = vunpack.c.l.b16 %v2756
        %v3276 = vunpack.c.l.b16 %v2757
        %v3277 = vunpack.c.l.b16 %v2758
        %v3278 = vunpack.c.l.b16 %v2759
        %v3279 = vunpack.c.l.b16 %v2760
        %v3280 = vunpack.c.l.b16 %v2761
        %v3281 = vunpack.c.l.b16 %v2762
        %v3282 = vunpack.c.l.b16 %v2763
        %v3283 = vunpack.c.l.b16 %v2764
        %v3284 = vunpack.c.l.b16 %v2765
        %v3285 = vunpack.c.l.b16 %v2766
        %v3286 = vunpack.c.l.b16 %v2767
        %v3287 = vunpack.c.l.b16 %v2768
        %v3288 = vunpack.c.l.b16 %v2769
        %v3289 = vunpack.c.l.b16 %v2770
        %v3290 = vunpack.c.l.b16 %v2771
        %v3291 = vunpack.c.l.b16 %v2772
        %v3292 = vunpack.c.l.b16 %v2773
        %v3293 = vunpack.c.l.b16 %v2774
        %v3294 = vunpack.c.l.b16 %v2775
        %v3295 = vunpack.c.l.b16 %v2776
        %v3296 = vunpack.c.l.b16 %v2777
        %v3297 = vunpack.c.l.b16 %v2778
        %v3298 = vunpack.c.l.b16 %v2779
        %v3299 = vunpack.c.l.b16 %v2780
        %v3300 = vunpack.c.l.b16 %v2781
        %v3301 = vunpack.c.l.b16 %v2782
        %v3302 = vunpack.c.l.b16 %v2783
        %v3303 = vunpack.c.l.b16 %v2784
        %v3304 = vpack.c.b16 %v3161, %v3160
        %v3305 = vpack.c.b16 %v3163, %v3162
        %v3306 = vpack.c.b16 %v3165, %v3164
        %v3307 = vpack.c.b16 %v3167, %v3166
        %v3308 = vpack.c.b16 %v3169, %v3168
        %v3309 = vpack.c.b16 %v3171, %v3170
        %v3310 = vpack.c.b16 %v3173, %v3172
        %v3311 = vpack.c.b16 %v3175, %v3174
        %v3312 = vpack.c.b16 %v3177, %v3176
        %v3313 = vpack.c.b16 %v3179, %v3178
        %v3314 = vpack.c.b16 %v3181, %v3180
        %v3315 = vpack.c.b16 %v3183, %v3182
        %v3316 = vpack.c.b16 %v3185, %v3184
        %v3317 = vpack.c.b16 %v3187, %v3186
        %v3318 = vpack.c.b16 %v3189, %v3188
        %v3319 = vpack.c.b16 %v3191, %v3190
        %v3320 = vpack.c.b16 %v3193, %v3192
        %v3321 = vpack.c.b16 %v3195, %v3194
        %v3322 = vpack.c.b16 %v3197, %v3196
        %v3323 = vpack.c.b16 %v3199, %v3198
        %v3324 = vpack.c.b16 %v3201, %v3200
        %v3325 = vpack.c.b16 %v3203, %v3202
        %v3326 = vpack.c.b16 %v3205, %v3204
        %v3327 = vpack.c.b16 %v3207, %v3206
        %v3328 = vpack.c.b16 %v3209, %v3208
        %v3329 = vpack.c.b16 %v3211, %v3210
        %v3330 = vpack.c.b16 %v3213, %v3212
        %v3331 = vpack.c.b16 %v3215, %v3214
        %v3332 = vpack.c.b16 %v3217, %v3216
        %v3333 = vpack.c.b16 %v3219, %v3218
        %v3334 = vpack.c.b16 %v3221, %v3220
        %v3335 = vpack.c.b16 %v3223, %v3222
        %v3336 = vpack.c.b16 %v3225, %v3224
        %v3337 = vpack.c.b16 %v3227, %v3226
        %v3338 = vpack.c.b16 %v3229, %v3228
        %v3339 = vpack.c.b16 %v3231, %v3230
        %v3340 = vpack.c.b16 %v3233, %v3232
        %v3341 = vpack.c.b16 %v3235, %v3234
        %v3342 = vpack.c.b16 %v3237, %v3236
        %v3343 = vpack.c.b16 %v3239, %v3238
        %v3344 = vpack.c.b16 %v3241, %v3240
        %v3345 = vpack.c.b16 %v3243, %v3242
        %v3346 = vpack.c.b16 %v3245, %v3244
        %v3347 = vpack.c.b16 %v3247, %v3246
        %v3348 = vpack.c.b16 %v3249, %v3248
        %v3349 = vpack.c.b16 %v3251, %v3250
        %v3350 = vpack.c.b16 %v3253, %v3252
        %v3351 = vpack.c.b16 %v3255, %v3254
        %v3352 = vpack.c.b16 %v3257, %v3256
        %v3353 = vpack.c.b16 %v3259, %v3258
        %v3354 = vpack.c.b16 %v3261, %v3260
        %v3355 = vpack.c.b16 %v3263, %v3262
        %v3356 = vpack.c.b16 %v3265, %v3264
        %v3357 = vpack.c.b16 %v3267, %v3266
        %v3358 = vpack.c.b16 %v3269, %v3268
        %v3359 = vpack.c.b16 %v3271, %v3270
        %v3360 = vpack.c.b16 %v3273, %v3272
        %v3361 = vpack.c.b16 %v3275, %v3274
        %v3362 = vpack.c.b16 %v3277, %v3276
        %v3363 = vpack.c.b16 %v3279, %v3278
        %v3364 = vpack.c.b16 %v3281, %v3280
        %v3365 = vpack.c.b16 %v3283, %v3282
        %v3366 = vpack.c.b16 %v3285, %v3284
        %v3367 = vpack.c.b16 %v3287, %v3286
        %v3368 = vpack.c.b16 %v3289, %v3288
        %v3369 = vpack.c.b16 %v3291, %v3290
        %v3370 = vpack.c.b16 %v3293, %v3292
        %v3371 = vpack.c.b16 %v3295, %v3294
        %v3372 = vpack.c.b16 %v3297, %v3296
        %v3373 = vpack.c.b16 %v3299, %v3298
        %v3374 = vpack.c.b16 %v3301, %v3300
        %v3375 = vpack.c.b16 %v3303, %v3302
        %3448 = vmatprep.subr.bf16.mxu0 0
        %3449 = vmatpush1.bf16.msra.mxu0 %v3311
        %3450 = vmatprep.subr.bf16.mxu0 0
        %3451 = vmatpush1.bf16.msra.mxu0 %v3310
        %3452 = vmatprep.subr.bf16.mxu0 0
        %3453 = vmatpush1.bf16.msra.mxu0 %v3309
        %3454 = vmatprep.subr.bf16.mxu0 0
        %3455 = vmatpush1.bf16.msra.mxu0 %v3308
        %3456 = vmatprep.subr.bf16.mxu0 0
        %3457 = vmatpush1.bf16.msra.mxu0 %v3307
        %3458 = vmatprep.subr.bf16.mxu0 0
        %3459 = vmatpush1.bf16.msra.mxu0 %v3306
        %3460 = vmatprep.subr.bf16.mxu0 0
        %3461 = vmatpush1.bf16.msra.mxu0 %v3305
        %3462 = vmatprep.subr.bf16.mxu0 0
        %3463 = vmatpush1.bf16.msra.mxu0 %v3304
        %3464 = vmatprep.subr.bf16.mxu0 0
        %3465 = vmatpush2.bf16.msra.mxu0 %v3319
        %3466 = vmatprep.subr.bf16.mxu0 0
        %3467 = vmatpush2.bf16.msra.mxu0 %v3318
        %3468 = vmatprep.subr.bf16.mxu0 0
        %3469 = vmatpush2.bf16.msra.mxu0 %v3317
        %3470 = vmatprep.subr.bf16.mxu0 0
        %3471 = vmatpush2.bf16.msra.mxu0 %v3316
        %3472 = vmatprep.subr.bf16.mxu0 0
        %3473 = vmatpush2.bf16.msra.mxu0 %v3315
        %3474 = vmatprep.subr.bf16.mxu0 0
        %3475 = vmatpush2.bf16.msra.mxu0 %v3314
        %3476 = vmatprep.subr.bf16.mxu0 0
        %3477 = vmatpush2.bf16.msra.mxu0 %v3313
        %3478 = vmatprep.subr.bf16.mxu0 0
        %3479 = vmatpush2.bf16.msra.mxu0 %v3312
        %3480 = vmatprep.mubr.bf16.mxu0 %v2797
        %3481 = vmatmul.mubr.bf16.gmra.mxu0 %v2621
        %v3482 = vpop.f32.mrf.mxu0
        %v3483 = vadd.f32 %v3014, %v3482
        %v3484 = vpop.f32.mrf.mxu0
        %v3485 = vpop.f32.mrf.mxu0
        %v3486 = vadd.f32 %v3014, %v3485
        %v3487 = vpop.f32.mrf.mxu0
        %3488 = vmatprep.mubr.bf16.mxu0 %v2809
        %3489 = vmatmul.mubr.bf16.gmra.mxu0 %v2623
        %v3490 = vpop.f32.mrf.mxu0
        %v3491 = vadd.f32 %v3014, %v3490
        %v3492 = vpop.f32.mrf.mxu0
        %v3493 = vpop.f32.mrf.mxu0
        %v3494 = vadd.f32 %v3014, %v3493
        %v3495 = vpop.f32.mrf.mxu0
        %3496 = vmatprep.mubr.bf16.mxu0 %v2821
        %3497 = vmatmul.mubr.bf16.gmra.mxu0 %v2625
        %v3498 = vpop.f32.mrf.mxu0
        %v3499 = vadd.f32 %v3014, %v3498
        %v3500 = vpop.f32.mrf.mxu0
        %v3501 = vpop.f32.mrf.mxu0
        %v3502 = vadd.f32 %v3014, %v3501
        %v3503 = vpop.f32.mrf.mxu0
        %3504 = vmatprep.mubr.bf16.mxu0 %v2833
        %3505 = vmatmul.mubr.bf16.gmra.mxu0 %v2627
        %v3506 = vpop.f32.mrf.mxu0
        %v3507 = vadd.f32 %v3014, %v3506
        %v3508 = vpop.f32.mrf.mxu0
        %v3509 = vpop.f32.mrf.mxu0
        %v3510 = vadd.f32 %v3014, %v3509
        %v3511 = vpop.f32.mrf.mxu0
        %3512 = vmatprep.mubr.bf16.mxu0 %v2845
        %3513 = vmatmul.mubr.bf16.gmra.mxu0 %v2629
        %v3514 = vpop.f32.mrf.mxu0
        %v3515 = vadd.f32 %v3014, %v3514
        %v3516 = vpop.f32.mrf.mxu0
        %v3517 = vpop.f32.mrf.mxu0
        %v3518 = vadd.f32 %v3014, %v3517
        %v3519 = vpop.f32.mrf.mxu0
        %3520 = vmatprep.mubr.bf16.mxu0 %v2857
        %3521 = vmatmul.mubr.bf16.gmra.mxu0 %v2631
        %v3522 = vpop.f32.mrf.mxu0
        %v3523 = vadd.f32 %v3014, %v3522
        %v3524 = vpop.f32.mrf.mxu0
        %v3525 = vpop.f32.mrf.mxu0
        %v3526 = vadd.f32 %v3014, %v3525
        %v3527 = vpop.f32.mrf.mxu0
        %3528 = vmatprep.mubr.bf16.mxu0 %v2869
        %3529 = vmatmul.mubr.bf16.gmra.mxu0 %v2633
        %v3530 = vpop.f32.mrf.mxu0
        %v3531 = vadd.f32 %v3014, %v3530
        %v3532 = vpop.f32.mrf.mxu0
        %v3533 = vpop.f32.mrf.mxu0
        %v3534 = vadd.f32 %v3014, %v3533
        %v3535 = vpop.f32.mrf.mxu0
        %3536 = vmatprep.mubr.bf16.mxu0 %v2881
        %3537 = vmatmul.mubr.bf16.gmra.mxu0 %v2635
        %v3538 = vpop.f32.mrf.mxu0
        %v3539 = vadd.f32 %v3014, %v3538
        %v3540 = vpop.f32.mrf.mxu0
        %v3541 = vpop.f32.mrf.mxu0
        %v3542 = vadd.f32 %v3014, %v3541
        %v3543 = vpop.f32.mrf.mxu0
        %3544 = vdwg.mxu0
        %3545 = vmatprep.subr.bf16.mxu0 0
        %3546 = vmatpush1.bf16.msra.mxu0 %v3327
        %3547 = vmatprep.subr.bf16.mxu0 0
        %3548 = vmatpush1.bf16.msra.mxu0 %v3326
        %3549 = vmatprep.subr.bf16.mxu0 0
        %3550 = vmatpush1.bf16.msra.mxu0 %v3325
        %3551 = vmatprep.subr.bf16.mxu0 0
        %3552 = vmatpush1.bf16.msra.mxu0 %v3324
        %3553 = vmatprep.subr.bf16.mxu0 0
        %3554 = vmatpush1.bf16.msra.mxu0 %v3323
        %3555 = vmatprep.subr.bf16.mxu0 0
        %3556 = vmatpush1.bf16.msra.mxu0 %v3322
        %3557 = vmatprep.subr.bf16.mxu0 0
        %3558 = vmatpush1.bf16.msra.mxu0 %v3321
        %3559 = vmatprep.subr.bf16.mxu0 0
        %3560 = vmatpush1.bf16.msra.mxu0 %v3320
        %3561 = vmatprep.subr.bf16.mxu0 0
        %3562 = vmatpush2.bf16.msra.mxu0 %v3335
        %3563 = vmatprep.subr.bf16.mxu0 0
        %3564 = vmatpush2.bf16.msra.mxu0 %v3334
        %3565 = vmatprep.subr.bf16.mxu0 0
        %3566 = vmatpush2.bf16.msra.mxu0 %v3333
        %3567 = vmatprep.subr.bf16.mxu0 0
        %3568 = vmatpush2.bf16.msra.mxu0 %v3332
        %3569 = vmatprep.subr.bf16.mxu0 0
        %3570 = vmatpush2.bf16.msra.mxu0 %v3331
        %3571 = vmatprep.subr.bf16.mxu0 0
        %3572 = vmatpush2.bf16.msra.mxu0 %v3330
        %3573 = vmatprep.subr.bf16.mxu0 0
        %3574 = vmatpush2.bf16.msra.mxu0 %v3329
        %3575 = vmatprep.subr.bf16.mxu0 0
        %3576 = vmatpush2.bf16.msra.mxu0 %v3328
        %3577 = vmatprep.mubr.bf16.mxu0 %v2623
        %3578 = vmatmul.mubr.bf16.gmra.mxu0 %v2909
        %v3579 = vpop.f32.mrf.mxu0
        %v3580 = vadd.f32 %v3483, %v3579
        %v3581 = vpop.f32.mrf.mxu0
        %v3582 = vpop.f32.mrf.mxu0
        %v3583 = vadd.f32 %v3486, %v3582
        %v3584 = vpop.f32.mrf.mxu0
        %3585 = vmatprep.mubr.bf16.mxu0 %v2625
        %3586 = vmatmul.mubr.bf16.gmra.mxu0 %v2912
        %v3587 = vpop.f32.mrf.mxu0
        %v3588 = vadd.f32 %v3491, %v3587
        %v3589 = vpop.f32.mrf.mxu0
        %v3590 = vpop.f32.mrf.mxu0
        %v3591 = vadd.f32 %v3494, %v3590
        %v3592 = vpop.f32.mrf.mxu0
        %3593 = vmatprep.mubr.bf16.mxu0 %v2627
        %3594 = vmatmul.mubr.bf16.gmra.mxu0 %v2915
        %v3595 = vpop.f32.mrf.mxu0
        %v3596 = vadd.f32 %v3499, %v3595
        %v3597 = vpop.f32.mrf.mxu0
        %v3598 = vpop.f32.mrf.mxu0
        %v3599 = vadd.f32 %v3502, %v3598
        %v3600 = vpop.f32.mrf.mxu0
        %3601 = vmatprep.mubr.bf16.mxu0 %v2629
        %3602 = vmatmul.mubr.bf16.gmra.mxu0 %v2918
        %v3603 = vpop.f32.mrf.mxu0
        %v3604 = vadd.f32 %v3507, %v3603
        %v3605 = vpop.f32.mrf.mxu0
        %v3606 = vpop.f32.mrf.mxu0
        %v3607 = vadd.f32 %v3510, %v3606
        %v3608 = vpop.f32.mrf.mxu0
        %3609 = vmatprep.mubr.bf16.mxu0 %v2631
        %3610 = vmatmul.mubr.bf16.gmra.mxu0 %v2921
        %v3611 = vpop.f32.mrf.mxu0
        %v3612 = vadd.f32 %v3515, %v3611
        %v3613 = vpop.f32.mrf.mxu0
        %v3614 = vpop.f32.mrf.mxu0
        %v3615 = vadd.f32 %v3518, %v3614
        %v3616 = vpop.f32.mrf.mxu0
        %3617 = vmatprep.mubr.bf16.mxu0 %v2633
        %3618 = vmatmul.mubr.bf16.gmra.mxu0 %v2924
        %v3619 = vpop.f32.mrf.mxu0
        %v3620 = vadd.f32 %v3523, %v3619
        %v3621 = vpop.f32.mrf.mxu0
        %v3622 = vpop.f32.mrf.mxu0
        %v3623 = vadd.f32 %v3526, %v3622
        %v3624 = vpop.f32.mrf.mxu0
        %3625 = vmatprep.mubr.bf16.mxu0 %v2635
        %3626 = vmatmul.mubr.bf16.gmra.mxu0 %v2927
        %v3627 = vpop.f32.mrf.mxu0
        %v3628 = vadd.f32 %v3531, %v3627
        %v3629 = vpop.f32.mrf.mxu0
        %v3630 = vpop.f32.mrf.mxu0
        %v3631 = vadd.f32 %v3534, %v3630
        %v3632 = vpop.f32.mrf.mxu0
        %3633 = vmatprep.mubr.bf16.mxu0 %v2637
        %3634 = vmatmul.mubr.bf16.gmra.mxu0 %v2930
        %v3635 = vpop.f32.mrf.mxu0
        %v3636 = vadd.f32 %v3539, %v3635
        %v3637 = vpop.f32.mrf.mxu0
        %v3638 = vpop.f32.mrf.mxu0
        %v3639 = vadd.f32 %v3542, %v3638
        %v3640 = vpop.f32.mrf.mxu0
        %3641 = vdwg.mxu0
        %3642 = vmatprep.subr.bf16.mxu0 0
        %3643 = vmatpush1.bf16.msra.mxu0 %v3343
        %3644 = vmatprep.subr.bf16.mxu0 0
        %3645 = vmatpush1.bf16.msra.mxu0 %v3342
        %3646 = vmatprep.subr.bf16.mxu0 0
        %3647 = vmatpush1.bf16.msra.mxu0 %v3341
        %3648 = vmatprep.subr.bf16.mxu0 0
        %3649 = vmatpush1.bf16.msra.mxu0 %v3340
        %3650 = vmatprep.subr.bf16.mxu0 0
        %3651 = vmatpush1.bf16.msra.mxu0 %v3339
        %3652 = vmatprep.subr.bf16.mxu0 0
        %3653 = vmatpush1.bf16.msra.mxu0 %v3338
        %3654 = vmatprep.subr.bf16.mxu0 0
        %3655 = vmatpush1.bf16.msra.mxu0 %v3337
        %3656 = vmatprep.subr.bf16.mxu0 0
        %3657 = vmatpush1.bf16.msra.mxu0 %v3336
        %3658 = vmatprep.subr.bf16.mxu0 0
        %3659 = vmatpush2.bf16.msra.mxu0 %v3351
        %3660 = vmatprep.subr.bf16.mxu0 0
        %3661 = vmatpush2.bf16.msra.mxu0 %v3350
        %3662 = vmatprep.subr.bf16.mxu0 0
        %3663 = vmatpush2.bf16.msra.mxu0 %v3349
        %3664 = vmatprep.subr.bf16.mxu0 0
        %3665 = vmatpush2.bf16.msra.mxu0 %v3348
        %3666 = vmatprep.subr.bf16.mxu0 0
        %3667 = vmatpush2.bf16.msra.mxu0 %v3347
        %3668 = vmatprep.subr.bf16.mxu0 0
        %3669 = vmatpush2.bf16.msra.mxu0 %v3346
        %3670 = vmatprep.subr.bf16.mxu0 0
        %3671 = vmatpush2.bf16.msra.mxu0 %v3345
        %3672 = vmatprep.subr.bf16.mxu0 0
        %3673 = vmatpush2.bf16.msra.mxu0 %v3344
        %3674 = vmatprep.mubr.bf16.mxu0 %v2912
        %3675 = vmatmul.mubr.bf16.gmra.mxu0 %v2809
        %v3676 = vpop.f32.mrf.mxu0
        %v3677 = vadd.f32 %v3580, %v3676
        %v3678 = vpop.f32.mrf.mxu0
        %v3679 = vpop.f32.mrf.mxu0
        %v3680 = vadd.f32 %v3583, %v3679
        %v3681 = vpop.f32.mrf.mxu0
        %3682 = vmatprep.mubr.bf16.mxu0 %v2915
        %3683 = vmatmul.mubr.bf16.gmra.mxu0 %v2821
        %v3684 = vpop.f32.mrf.mxu0
        %v3685 = vadd.f32 %v3588, %v3684
        %v3686 = vpop.f32.mrf.mxu0
        %v3687 = vpop.f32.mrf.mxu0
        %v3688 = vadd.f32 %v3591, %v3687
        %v3689 = vpop.f32.mrf.mxu0
        %3690 = vmatprep.mubr.bf16.mxu0 %v2918
        %3691 = vmatmul.mubr.bf16.gmra.mxu0 %v2833
        %v3692 = vpop.f32.mrf.mxu0
        %v3693 = vadd.f32 %v3596, %v3692
        %v3694 = vpop.f32.mrf.mxu0
        %v3695 = vpop.f32.mrf.mxu0
        %v3696 = vadd.f32 %v3599, %v3695
        %v3697 = vpop.f32.mrf.mxu0
        %3698 = vmatprep.mubr.bf16.mxu0 %v2921
        %3699 = vmatmul.mubr.bf16.gmra.mxu0 %v2845
        %v3700 = vpop.f32.mrf.mxu0
        %v3701 = vadd.f32 %v3604, %v3700
        %v3702 = vpop.f32.mrf.mxu0
        %v3703 = vpop.f32.mrf.mxu0
        %v3704 = vadd.f32 %v3607, %v3703
        %v3705 = vpop.f32.mrf.mxu0
        %3706 = vmatprep.mubr.bf16.mxu0 %v2924
        %3707 = vmatmul.mubr.bf16.gmra.mxu0 %v2857
        %v3708 = vpop.f32.mrf.mxu0
        %v3709 = vadd.f32 %v3612, %v3708
        %v3710 = vpop.f32.mrf.mxu0
        %v3711 = vpop.f32.mrf.mxu0
        %v3712 = vadd.f32 %v3615, %v3711
        %v3713 = vpop.f32.mrf.mxu0
        %3714 = vmatprep.mubr.bf16.mxu0 %v2927
        %3715 = vmatmul.mubr.bf16.gmra.mxu0 %v2869
        %v3716 = vpop.f32.mrf.mxu0
        %v3717 = vadd.f32 %v3620, %v3716
        %v3718 = vpop.f32.mrf.mxu0
        %v3719 = vpop.f32.mrf.mxu0
        %v3720 = vadd.f32 %v3623, %v3719
        %v3721 = vpop.f32.mrf.mxu0
        %3722 = vmatprep.mubr.bf16.mxu0 %v2930
        %3723 = vmatmul.mubr.bf16.gmra.mxu0 %v2881
        %v3724 = vpop.f32.mrf.mxu0
        %v3725 = vadd.f32 %v3628, %v3724
        %v3726 = vpop.f32.mrf.mxu0
        %v3727 = vpop.f32.mrf.mxu0
        %v3728 = vadd.f32 %v3631, %v3727
        %v3729 = vpop.f32.mrf.mxu0
        %3730 = vmatprep.mubr.bf16.mxu0 %v2956
        %3731 = vmatmul.mubr.bf16.gmra.mxu0 %v2950
        %v3732 = vpop.f32.mrf.mxu0
        %v3733 = vadd.f32 %v3636, %v3732
        %v3734 = vpop.f32.mrf.mxu0
        %v3735 = vpop.f32.mrf.mxu0
        %v3736 = vadd.f32 %v3639, %v3735
        %v3737 = vpop.f32.mrf.mxu0
        %3738 = vdwg.mxu0
        %3739 = vmatprep.subr.bf16.mxu0 0
        %3740 = vmatpush1.bf16.msra.mxu0 %v3359
        %3741 = vmatprep.subr.bf16.mxu0 0
        %3742 = vmatpush1.bf16.msra.mxu0 %v3358
        %3743 = vmatprep.subr.bf16.mxu0 0
        %3744 = vmatpush1.bf16.msra.mxu0 %v3357
        %3745 = vmatprep.subr.bf16.mxu0 0
        %3746 = vmatpush1.bf16.msra.mxu0 %v3356
        %3747 = vmatprep.subr.bf16.mxu0 0
        %3748 = vmatpush1.bf16.msra.mxu0 %v3355
        %3749 = vmatprep.subr.bf16.mxu0 0
        %3750 = vmatpush1.bf16.msra.mxu0 %v3354
        %3751 = vmatprep.subr.bf16.mxu0 0
        %3752 = vmatpush1.bf16.msra.mxu0 %v3353
        %3753 = vmatprep.subr.bf16.mxu0 0
        %3754 = vmatpush1.bf16.msra.mxu0 %v3352
        %3755 = vmatprep.subr.bf16.mxu0 0
        %3756 = vmatpush2.bf16.msra.mxu0 %v3367
        %3757 = vmatprep.subr.bf16.mxu0 0
        %3758 = vmatpush2.bf16.msra.mxu0 %v3366
        %3759 = vmatprep.subr.bf16.mxu0 0
        %3760 = vmatpush2.bf16.msra.mxu0 %v3365
        %3761 = vmatprep.subr.bf16.mxu0 0
        %3762 = vmatpush2.bf16.msra.mxu0 %v3364
        %3763 = vmatprep.subr.bf16.mxu0 0
        %3764 = vmatpush2.bf16.msra.mxu0 %v3363
        %3765 = vmatprep.subr.bf16.mxu0 0
        %3766 = vmatpush2.bf16.msra.mxu0 %v3362
        %3767 = vmatprep.subr.bf16.mxu0 0
        %3768 = vmatpush2.bf16.msra.mxu0 %v3361
        %3769 = vmatprep.subr.bf16.mxu0 0
        %3770 = vmatpush2.bf16.msra.mxu0 %v3360
        %3771 = vmatprep.mubr.bf16.mxu0 %v2821
        %3772 = vmatmul.mubr.bf16.gmra.mxu0 %v2625
        %v3773 = vpop.f32.mrf.mxu0
        %v3774 = vadd.f32 %v3677, %v3773
        %v3775 = vpop.f32.mrf.mxu0
        %v3776 = vpop.f32.mrf.mxu0
        %v3777 = vadd.f32 %v3680, %v3776
        %v3778 = vpop.f32.mrf.mxu0
        %3779 = vmatprep.mubr.bf16.mxu0 %v2833
        %3780 = vmatmul.mubr.bf16.gmra.mxu0 %v2627
        %v3781 = vpop.f32.mrf.mxu0
        %v3782 = vadd.f32 %v3685, %v3781
        %v3783 = vpop.f32.mrf.mxu0
        %v3784 = vpop.f32.mrf.mxu0
        %v3785 = vadd.f32 %v3688, %v3784
        %v3786 = vpop.f32.mrf.mxu0
        %3787 = vmatprep.mubr.bf16.mxu0 %v2845
        %3788 = vmatmul.mubr.bf16.gmra.mxu0 %v2629
        %v3789 = vpop.f32.mrf.mxu0
        %v3790 = vadd.f32 %v3693, %v3789
        %v3791 = vpop.f32.mrf.mxu0
        %v3792 = vpop.f32.mrf.mxu0
        %v3793 = vadd.f32 %v3696, %v3792
        %v3794 = vpop.f32.mrf.mxu0
        %3795 = vmatprep.mubr.bf16.mxu0 %v2857
        %3796 = vmatmul.mubr.bf16.gmra.mxu0 %v2631
        %v3797 = vpop.f32.mrf.mxu0
        %v3798 = vadd.f32 %v3701, %v3797
        %v3799 = vpop.f32.mrf.mxu0
        %v3800 = vpop.f32.mrf.mxu0
        %v3801 = vadd.f32 %v3704, %v3800
        %v3802 = vpop.f32.mrf.mxu0
        %3803 = vmatprep.mubr.bf16.mxu0 %v2869
        %3804 = vmatmul.mubr.bf16.gmra.mxu0 %v2633
        %v3805 = vpop.f32.mrf.mxu0
        %v3806 = vadd.f32 %v3709, %v3805
        %v3807 = vpop.f32.mrf.mxu0
        %v3808 = vpop.f32.mrf.mxu0
        %v3809 = vadd.f32 %v3712, %v3808
        %v3810 = vpop.f32.mrf.mxu0
        %3811 = vmatprep.mubr.bf16.mxu0 %v2881
        %3812 = vmatmul.mubr.bf16.gmra.mxu0 %v2635
        %v3813 = vpop.f32.mrf.mxu0
        %v3814 = vadd.f32 %v3717, %v3813
        %v3815 = vpop.f32.mrf.mxu0
        %v3816 = vpop.f32.mrf.mxu0
        %v3817 = vadd.f32 %v3720, %v3816
        %v3818 = vpop.f32.mrf.mxu0
        %3819 = vmatprep.mubr.bf16.mxu0 %v2950
        %3820 = vmatmul.mubr.bf16.gmra.mxu0 %v2637
        %v3821 = vpop.f32.mrf.mxu0
        %v3822 = vadd.f32 %v3725, %v3821
        %v3823 = vpop.f32.mrf.mxu0
        %v3824 = vpop.f32.mrf.mxu0
        %v3825 = vadd.f32 %v3728, %v3824
        %v3826 = vpop.f32.mrf.mxu0
        %3827 = vmatprep.mubr.bf16.mxu0 %v2969
        %3828 = vmatmul.mubr.bf16.gmra.mxu0 %v2639
        %v3829 = vpop.f32.mrf.mxu0
        %v3830 = vadd.f32 %v3733, %v3829
        %v3831 = vpop.f32.mrf.mxu0
        %v3832 = vpop.f32.mrf.mxu0
        %v3833 = vadd.f32 %v3736, %v3832
        %v3834 = vpop.f32.mrf.mxu0
        %3835 = vdwg.mxu0
        %3836 = vmatprep.subr.bf16.mxu0 0
        %3837 = vmatpush1.bf16.msra.mxu0 %v3375
        %3838 = vmatprep.subr.bf16.mxu0 0
        %3839 = vmatpush1.bf16.msra.mxu0 %v3374
        %3840 = vmatprep.subr.bf16.mxu0 0
        %3841 = vmatpush1.bf16.msra.mxu0 %v3373
        %3842 = vmatprep.subr.bf16.mxu0 0
        %3843 = vmatpush1.bf16.msra.mxu0 %v3372
        %3844 = vmatprep.subr.bf16.mxu0 0
        %3845 = vmatpush1.bf16.msra.mxu0 %v3371
        %3846 = vmatprep.subr.bf16.mxu0 0
        %3847 = vmatpush1.bf16.msra.mxu0 %v3370
        %3848 = vmatprep.subr.bf16.mxu0 0
        %3849 = vmatpush1.bf16.msra.mxu0 %v3369
        %3850 = vmatprep.subr.bf16.mxu0 0
        %3851 = vmatpush1.bf16.msra.mxu0 %v3368
        %3852 = vmatprep.subr.bf16.mxu0 0
        %3853 = vmatpush2.bf16.msra.mxu0 0
        %3854 = vmatprep.subr.bf16.mxu0 0
        %3855 = vmatpush2.bf16.msra.mxu0 0
        %3856 = vmatprep.subr.bf16.mxu0 0
        %3857 = vmatpush2.bf16.msra.mxu0 0
        %3858 = vmatprep.subr.bf16.mxu0 0
        %3859 = vmatpush2.bf16.msra.mxu0 0
        %3860 = vmatprep.subr.bf16.mxu0 0
        %3861 = vmatpush2.bf16.msra.mxu0 0
        %3862 = vmatprep.subr.bf16.mxu0 0
        %3863 = vmatpush2.bf16.msra.mxu0 0
        %3864 = vmatprep.subr.bf16.mxu0 0
        %3865 = vmatpush2.bf16.msra.mxu0 0
        %3866 = vmatprep.subr.bf16.mxu0 0
        %3867 = vmatpush2.bf16.msra.mxu0 0
        %3868 = vmatprep.mubr.bf16.mxu0 0
        %3869 = vmatmul.mubr.bf16.gmra.mxu0 %v2915
        %v3870 = vpop.f32.mrf.mxu0
        %v3871 = vadd.f32 %v3774, %v3870
        %v3872 = vpop.f32.mrf.mxu0
        %v3873 = vpop.f32.mrf.mxu0
        %v3874 = vadd.f32 %v3777, %v3873
        %v3875 = vpop.f32.mrf.mxu0
        %3876 = vmatprep.mubr.bf16.mxu0 0
        %3877 = vmatmul.mubr.bf16.gmra.mxu0 %v2918
        %v3878 = vpop.f32.mrf.mxu0
        %v3879 = vadd.f32 %v3782, %v3878
        %v3880 = vpop.f32.mrf.mxu0
        %v3881 = vpop.f32.mrf.mxu0
        %v3882 = vadd.f32 %v3785, %v3881
        %v3883 = vpop.f32.mrf.mxu0
        %3884 = vmatprep.mubr.bf16.mxu0 0
        %3885 = vmatmul.mubr.bf16.gmra.mxu0 %v2921
        %v3886 = vpop.f32.mrf.mxu0
        %v3887 = vadd.f32 %v3790, %v3886
        %v3888 = vpop.f32.mrf.mxu0
        %v3889 = vpop.f32.mrf.mxu0
        %v3890 = vadd.f32 %v3793, %v3889
        %v3891 = vpop.f32.mrf.mxu0
        %3892 = vmatprep.mubr.bf16.mxu0 0
        %3893 = vmatmul.mubr.bf16.gmra.mxu0 %v2924
        %v3894 = vpop.f32.mrf.mxu0
        %v3895 = vadd.f32 %v3798, %v3894
        %v3896 = vpop.f32.mrf.mxu0
        %v3897 = vpop.f32.mrf.mxu0
        %v3898 = vadd.f32 %v3801, %v3897
        %v3899 = vpop.f32.mrf.mxu0
        %3900 = vmatprep.mubr.bf16.mxu0 0
        %3901 = vmatmul.mubr.bf16.gmra.mxu0 %v2927
        %v3902 = vpop.f32.mrf.mxu0
        %v3903 = vadd.f32 %v3806, %v3902
        %v3904 = vpop.f32.mrf.mxu0
        %v3905 = vpop.f32.mrf.mxu0
        %v3906 = vadd.f32 %v3809, %v3905
        %v3907 = vpop.f32.mrf.mxu0
        %3908 = vmatprep.mubr.bf16.mxu0 0
        %3909 = vmatmul.mubr.bf16.gmra.mxu0 %v2930
        %v3910 = vpop.f32.mrf.mxu0
        %v3911 = vadd.f32 %v3814, %v3910
        %v3912 = vpop.f32.mrf.mxu0
        %v3913 = vpop.f32.mrf.mxu0
        %v3914 = vadd.f32 %v3817, %v3913
        %v3915 = vpop.f32.mrf.mxu0
        %3916 = vmatprep.mubr.bf16.mxu0 0
        %3917 = vmatmul.mubr.bf16.gmra.mxu0 %v2956
        %v3918 = vpop.f32.mrf.mxu0
        %v3919 = vadd.f32 %v3822, %v3918
        %v3920 = vpop.f32.mrf.mxu0
        %v3921 = vpop.f32.mrf.mxu0
        %v3922 = vadd.f32 %v3825, %v3921
        %v3923 = vpop.f32.mrf.mxu0
        %3924 = vmatprep.mubr.bf16.mxu0 0
        %3925 = vmatmul.mubr.bf16.gmra.mxu0 %v2975
        %v3926 = vpop.f32.mrf.mxu0
        %v3927 = vadd.f32 %v3830, %v3926
        %v3928 = vpop.f32.mrf.mxu0
        %v3929 = vpop.f32.mrf.mxu0
        %v3930 = vadd.f32 %v3833, %v3929
        %v3931 = vpop.f32.mrf.mxu0
        %3932 = vdwg.mxu0
        %v3933 = vadd.f32 %v3871, %v2993
        %v3934 = vadd.f32 %v3874, %v2994
        %v3935 = vadd.f32 %v3879, %v2995
        %v3936 = vadd.f32 %v3882, %v2996
        %v3937 = vadd.f32 %v3887, %v2997
        %v3938 = vadd.f32 %v3890, %v2998
        %v3939 = vadd.f32 %v3895, %v2999
        %v3940 = vadd.f32 %v3898, %v3000
        %v3941 = vadd.f32 %v3903, %v3001
        %v3942 = vadd.f32 %v3906, %v3002
        %v3943 = vadd.f32 %v3911, %v3003
        %v3944 = vadd.f32 %v3914, %v3004
        %v3945 = vadd.f32 %v3919, %v3005
        %v3946 = vadd.f32 %v3922, %v3006
        %v3947 = vadd.f32 %v3927, %v3007
        %v3948 = vadd.f32 %v3930, %v3008
        %v3949 = vmax.f32 %v3933, 0.0
        %v3950 = vmax.f32 %v3934, 0.0
        %v3951 = vmax.f32 %v3935, 0.0
        %v3952 = vmax.f32 %v3936, 0.0
        %v3953 = vmax.f32 %v3937, 0.0
        %v3954 = vmax.f32 %v3938, 0.0
        %v3955 = vmax.f32 %v3939, 0.0
        %v3956 = vmax.f32 %v3940, 0.0
        %v3957 = vmax.f32 %v3941, 0.0
        %v3958 = vmax.f32 %v3942, 0.0
        %v3959 = vmax.f32 %v3943, 0.0
        %v3960 = vmax.f32 %v3944, 0.0
        %v3961 = vmax.f32 %v3945, 0.0
        %v3962 = vmax.f32 %v3946, 0.0
        %v3963 = vmax.f32 %v3947, 0.0
        %v3964 = vmax.f32 %v3948, 0.0
        %v3965 = vpack.c.bf16 %v3950, %v3949
        %v3966 = vpack.c.bf16 %v3952, %v3951
        %v3967 = vpack.c.bf16 %v3954, %v3953
        %v3968 = vpack.c.bf16 %v3956, %v3955
        %v3969 = vpack.c.bf16 %v3958, %v3957
        %v3970 = vpack.c.bf16 %v3960, %v3959
        %v3971 = vpack.c.bf16 %v3962, %v3961
        %v3972 = vpack.c.bf16 %v3964, %v3963
        %v3981 = vunpack.c.l.b16 %v3965
        %v3982 = vunpack.c.h.b16 %v3965
        %v3983 = vunpack.c.l.b16 %v3966
        %v3984 = vunpack.c.h.b16 %v3966
        %v3985 = vunpack.c.l.b16 %v3967
        %v3986 = vunpack.c.h.b16 %v3967
        %v3987 = vunpack.c.l.b16 %v3968
        %v3988 = vunpack.c.h.b16 %v3968
        %v3989 = vunpack.c.l.b16 %v3969
        %v3990 = vunpack.c.h.b16 %v3969
        %v3991 = vunpack.c.l.b16 %v3970
        %v3992 = vunpack.c.h.b16 %v3970
        %v3993 = vunpack.c.l.b16 %v3971
        %v3994 = vunpack.c.h.b16 %v3971
        %v3995 = vunpack.c.l.b16 %v3972
        %v3996 = vunpack.c.h.b16 %v3972
        %v3997 = vpack.c.b16 %v3981, %v3981
        %v3998 = vpack.c.b16 %v3982, %v3982
        %v3999 = vpack.c.b16 %v3983, %v3983
        %v4000 = vpack.c.b16 %v3984, %v3984
        %v4001 = vpack.c.b16 %v3985, %v3985
        %v4002 = vpack.c.b16 %v3986, %v3986
        %v4003 = vpack.c.b16 %v3987, %v3987
        %v4004 = vpack.c.b16 %v3988, %v3988
        %v4005 = vpack.c.b16 %v3989, %v3989
        %v4006 = vpack.c.b16 %v3990, %v3990
        %v4007 = vpack.c.b16 %v3991, %v3991
        %v4008 = vpack.c.b16 %v3992, %v3992
        %v4009 = vpack.c.b16 %v3993, %v3993
        %v4010 = vpack.c.b16 %v3994, %v3994
        %v4011 = vpack.c.b16 %v3995, %v3995
        %v4012 = vpack.c.b16 %v3996, %v3996
        %4029 = vst [vmem:[%s231] sm:$0xf] %v3997
        %4030 = vst [vmem:[%s231 + $0x4] sm:$0xf] %v3998
        %4031 = vst [vmem:[%s231 + $0x8] sm:$0xf] %v3999
        %4032 = vst [vmem:[%s231 + $0xc] sm:$0xf] %v4000
        %4033 = vst [vmem:[%s231 + $0x10] sm:$0xf] %v4001
        %4034 = vst [vmem:[%s231 + $0x14] sm:$0xf] %v4002
        %4035 = vst [vmem:[%s231 + $0x18] sm:$0xf] %v4003
        %4036 = vst [vmem:[%s231 + $0x1c] sm:$0xf] %v4004
        %4037 = vst [vmem:[%s231 + $0x20] sm:$0xf] %v4005
        %4038 = vst [vmem:[%s231 + $0x24] sm:$0xf] %v4006
        %4039 = vst [vmem:[%s231 + $0x28] sm:$0xf] %v4007
        %4040 = vst [vmem:[%s231 + $0x2c] sm:$0xf] %v4008
        %4041 = vst [vmem:[%s231 + $0x30] sm:$0xf] %v4009
        %4042 = vst [vmem:[%s231 + $0x34] sm:$0xf] %v4010
        %4043 = vst [vmem:[%s231 + $0x38] sm:$0xf] %v4011
        %4044 = vst [vmem:[%s231 + $0x3c] sm:$0xf] %v4012
        %s4045 = sand.u32 %s151, 1
        %s4046 = scalar_lea.sflag [#allocation3], %s4045
        %s4047 = sand.u32 %s151, 1
        %s4048 = smul.addr %s4047, 64
        %s4049 = scalar_lea.vmem [#allocation2], %s4048
        // Predicated region
        $region41: #{tpu_custom_call.1} parent=39 // pred_check
          %p4050 = pneg %p161
        $region42: #{tpu_custom_call.1} parent=39 // pred_check_branch
          %4052 = sbr.rel (%p4050) target = $region44
        $region43: #{tpu_custom_call.1} parent=39 // pred_region
          %s4053 = smul.u32 16, %s24
          %s4055 = ssub.s32 1024, 1024
          %4056 = vsyncadd %s4046, %s4055
          %s4057 = smul.addr %s23, 32
          %s4058 = sadd.s32 %s4053, %s4057
          %s4059 = smul.addr %s4058, 64
          %s4060 = scalar_lea.hbm %s5, %s4059
          %s4061 = sshll.u32 %s4049, 4
          %s4062 = int_to_ptr.vmem [resolvable:$true] %s4061
          %4067 = dma.vmem_to_hbm [thread:$0]  %s4062, 1024, %s4060, %s4046, 64, 64, 4
        $region44: #{tpu_custom_call.1} parent=39 // pred_fallthru
          _
      $region40: #{tpu_custom_call.1} parent=5 // pred_fallthru
        _
      %p4068 = scmp.le.s32.totalorder 2, %s14
      // Predicated region
      $region45: #{tpu_custom_call.1} parent=5 // pred_check
        %p4069 = pneg %p4068
      $region46: #{tpu_custom_call.1} parent=5 // pred_check_branch
        %4071 = sbr.rel (%p4069) target = $region48
      $region47: #{tpu_custom_call.1} parent=5 // pred_region
        %s4072 = ssub.s32 %s14, 2
        // Predicated region
        $region49: #{tpu_custom_call.1} parent=47 // pred_check
          %p4073 = pneg %p167
        $region50: #{tpu_custom_call.1} parent=47 // pred_check_branch
          %4075 = sbr.rel (%p4073) target = $region52
        $region51: #{tpu_custom_call.1} parent=47 // pred_region
          %s4076 = sand.u32 %s152, 1
          %s4077 = scalar_lea.sflag [#allocation3], %s4076
          %s4078 = sand.u32 %s152, 1
          %s4079 = smul.addr %s4078, 64
          %s4080 = scalar_lea.vmem [#allocation2], %s4079
          %4081 = dma.done %s4077, 1024
        $region52: #{tpu_custom_call.1} parent=47 // pred_fallthru
          _
      $region48: #{tpu_custom_call.1} parent=5 // pred_fallthru
        _
    $region6: #{tpu_custom_call.1} parent=1 // loop_footer
      %s18 = sadd.s32 1, %s14
    $region7: #{tpu_custom_call.1} parent=1 // loop_footer_branch
      %13 = sbr.rel target = $region3
    $region8: #{tpu_custom_call.1} parent=1 // loop_exit
      _
    %4082 = vsyncpa [#allocation3], 1
    %s4083 = scalar_lea.sflag [#allocation3], 1
    %4084 = vsyncpa %s4083, 1

</llo_original>
